<compile_context>
chip_gen: v6e
topology: v6e:2x2x1
jax: 0.10.0
libtpu: 0.0.40
codegen_flags: <defaults>
</compile_context>

<pallas_src>
import functools

import jax
import jax.numpy as jnp
from jax import lax
from jax.experimental import pallas as pl
from jax.experimental.pallas import tpu as pltpu

NEG_POS_RATIO = 3
_UNROLL_CHUNK_LIMIT = 8   # fully unroll the mining loop when it has at most this many chunks


def _multibox_loss_kernel(neg_pos_ratio, chunk, n_full, rem, unrolled,
                          conf_ref, labels_ref, ploc_ref, gloc_ref,
                          reg_ref, cls_ref, npos_ref, mined_row_ref):
    """One batch image per grid step (priors on sublanes, classes/coords on lanes).

      conf_ref      (1, P, C)  native dtype (f32 / bf16), upcast in-kernel
      labels_ref    (1, P, 1)  int32
      ploc_ref      (1, P, 4)
      gloc_ref      (1, P, 4)
      reg/cls/npos  (1, 1, 1)  f32 per-image partial sums
      mined_row_ref (1, P)     f32 VMEM scratch holding the mining loss row-wise
    """
    _, P, C = conf_ref.shape

    conf = conf_ref[0].astype(jnp.float32)                 # (P, C)
    lab = labels_ref[0]                                     # (P, 1) int32
    pos = lab > 0                                           # (P, 1) bool
    num_pos = jnp.sum(pos.astype(jnp.int32))                # scalar
    num_neg = num_pos * neg_pos_ratio

    # ---- log-softmax over the class (lane) axis ----
    m = jnp.max(conf, axis=1, keepdims=True)                # (P, 1)
    sh = conf - m                                           # (P, C)
    lse = jnp.log(jnp.sum(jnp.exp(sh), axis=1, keepdims=True))     # (P, 1)
    bg_loss = lse - sh[:, 0:1]                              # -log_softmax[..., 0]

    # cross-entropy at the target label for every prior
    cls_iota = lax.broadcasted_iota(jnp.int32, (P, C), 1)
    sh_at_label = jnp.sum(jnp.where(cls_iota == lab, sh, 0.0), axis=1, keepdims=True)
    ce = lse - sh_at_label                                  # (P, 1)

    # ---- hard negative mining (descending, index-stable sort rank) ----
    # positives get a sentinel below any achievable background loss (-log p >= 0)
    mined_col = jnp.where(pos, jnp.float32(-1.0), bg_loss)          # (P, 1): mined[b]
    mined_row_ref[...] = jnp.transpose(mined_col)                   # (1, P): mined[a], staged once
    ib_col = lax.broadcasted_iota(jnp.int32, (P, 1), 0)             # target index b
    lane_iota = lax.broadcasted_iota(jnp.int32, (1, chunk), 1)      # hoisted out of the loop

    # rank[b] = #{a : mined[a] > mined[b]  or  (mined[a] == mined[b] and a < b)}
    # Chunk the comparison ('a') axis so the biggest temporary is (P, chunk), not (P, P).
    def count_before(start):
        m_a = mined_row_ref[:, pl.ds(start, chunk)]                 # (1, chunk)
        ia = lane_iota + start                                      # (1, chunk)
        before = (m_a > mined_col) | ((m_a == mined_col) & (ia < ib_col))   # (P, chunk)
        return before.astype(jnp.int32)

    # Defer the cross-lane reduce: accumulate (P, chunk) counts element-wise (VALU),
    # reduce across lanes exactly once at the end (XLU).
    rank_acc = jnp.zeros((P, chunk), jnp.int32)
    if unrolled:
        for c in range(n_full):                                     # static trip count
            rank_acc = rank_acc + count_before(c * chunk)
    else:
        def body(c, acc):
            start = pl.multiple_of(c * chunk, chunk)
            return acc + count_before(start)
        rank_acc = lax.fori_loop(0, n_full, body, rank_acc)
    rank = jnp.sum(rank_acc, axis=1, keepdims=True)                 # (P, 1)

    if rem > 0:                                                     # static remainder chunk
        m_a = mined_row_ref[:, pl.ds(n_full * chunk, rem)]          # (1, rem)
        ia = lax.broadcasted_iota(jnp.int32, (1, rem), 1) + n_full * chunk
        before = (m_a > mined_col) | ((m_a == mined_col) & (ia < ib_col))
        rank = rank + jnp.sum(before.astype(jnp.int32), axis=1, keepdims=True)

    mask = pos | (rank < num_neg)                                   # (P, 1)
    cls_sum = jnp.sum(jnp.where(mask, ce, 0.0))

    # ---- smooth L1 (beta = 1) over positive priors ----
    d = ploc_ref[0].astype(jnp.float32) - gloc_ref[0].astype(jnp.float32)   # (P, 4)
    ad = jnp.abs(d)
    sl1 = jnp.where(ad < 1.0, 0.5 * d * d, ad - 0.5)
    reg_sum = jnp.sum(jnp.where(pos, sl1, 0.0))

    reg_ref[...] = jnp.full((1, 1, 1), reg_sum, jnp.float32)
    cls_ref[...] = jnp.full((1, 1, 1), cls_sum, jnp.float32)
    npos_ref[...] = jnp.full((1, 1, 1), num_pos.astype(jnp.float32), jnp.float32)


@functools.partial(jax.jit, static_argnames=("neg_pos_ratio",))
def multibox_loss(confidence, predicted_locations, labels, gt_locations,
                  neg_pos_ratio=NEG_POS_RATIO):
    """confidence (B,P,C), predicted_locations (B,P,4), labels (B,P), gt_locations (B,P,4)."""
    B, P, C = confidence.shape
    # (B, P) -> (B, P, 1) is a layout-trivial reshape (no transpose / data movement).
    labels3 = labels.astype(jnp.int32).reshape(B, P, 1)

    # chunk size for the mining-rank loop; remainder handled in-kernel so the largest
    # temporary stays (P, chunk) even when P is not a multiple of 128.
    chunk = P if P <= 128 else 128
    n_full = P // chunk
    rem = P - n_full * chunk
    unrolled = n_full <= _UNROLL_CHUNK_LIMIT

    kernel = functools.partial(_multibox_loss_kernel, neg_pos_ratio, chunk,
                               n_full, rem, unrolled)

    bytes_accessed = int(confidence.size * confidence.dtype.itemsize
                         + labels3.size * labels3.dtype.itemsize
                         + predicted_locations.size * predicted_locations.dtype.itemsize
                         + gt_locations.size * gt_locations.dtype.itemsize
                         + 3 * B * 4)
    cost = pl.CostEstimate(
        flops=int(B * (6 * P * P + 8 * P * C + 24 * P)),
        transcendentals=int(B * (P * C + P)),
        bytes_accessed=bytes_accessed)

    reg_s, cls_s, npos = pl.pallas_call(
        kernel,
        grid=(B,),
        in_specs=[
            pl.BlockSpec((1, P, C), lambda b: (b, 0, 0)),
            pl.BlockSpec((1, P, 1), lambda b: (b, 0, 0)),
            pl.BlockSpec((1, P, 4), lambda b: (b, 0, 0)),
            pl.BlockSpec((1, P, 4), lambda b: (b, 0, 0)),
        ],
        out_specs=(
            pl.BlockSpec((1, 1, 1), lambda b: (b, 0, 0)),
            pl.BlockSpec((1, 1, 1), lambda b: (b, 0, 0)),
            pl.BlockSpec((1, 1, 1), lambda b: (b, 0, 0)),
        ),
        out_shape=(
            jax.ShapeDtypeStruct((B, 1, 1), jnp.float32),
            jax.ShapeDtypeStruct((B, 1, 1), jnp.float32),
            jax.ShapeDtypeStruct((B, 1, 1), jnp.float32),
        ),
        scratch_shapes=[pltpu.VMEM((1, P), jnp.float32)],
        compiler_params=pltpu.CompilerParams(dimension_semantics=("parallel",)),
        cost_estimate=cost,
    )(confidence, labels3, predicted_locations, gt_locations)

    # final reduction over the batch + normalization by total positives (as in PyTorch)
    n = jnp.sum(npos)
    return jnp.sum(reg_s) / n, jnp.sum(cls_s) / n


def reference_multibox_loss(confidence, predicted_locations, labels, gt_locations,
                            neg_pos_ratio):
    """Pure-JAX reference mirroring the PyTorch forward."""
    B, P, C = confidence.shape
    logsm = jax.nn.log_softmax(confidence.astype(jnp.float32), axis=2)
    loss = -logsm[:, :, 0]
    pos = labels > 0
    num_pos_row = jnp.sum(pos.astype(jnp.int32), axis=1, keepdims=True)
    num_neg_row = num_pos_row * neg_pos_ratio
    mined = jnp.where(pos, -1.0, loss)
    idx = jnp.arange(P)
    gt = mined[:, None, :] > mined[:, :, None]
    eq = (mined[:, None, :] == mined[:, :, None]) & (idx[None, None, :] < idx[None, :, None])
    rank = jnp.sum((gt | eq).astype(jnp.int32), axis=2)
    neg_mask = rank < num_neg_row
    mask = pos | neg_mask
    ce = -jnp.take_along_axis(logsm, labels[..., None].astype(jnp.int32), axis=2)[..., 0]
    cls_loss = jnp.sum(jnp.where(mask, ce, 0.0))
    d = predicted_locations.astype(jnp.float32) - gt_locations.astype(jnp.float32)
    ad = jnp.abs(d)
    sl1 = jnp.where(ad < 1.0, 0.5 * d * d, ad - 0.5)
    reg_loss = jnp.sum(jnp.where(pos[..., None], sl1, 0.0))
    n = jnp.sum(pos).astype(jnp.float32)
    return reg_loss / n, cls_loss / n


if __name__ == "__main__":
    B, P, C = 2, 256, 8  # batch, num_priors, num_classes
    key = jax.random.PRNGKey(0)
    kc, kp, kg, km, kl = jax.random.split(key, 5)

    confidence = jax.random.normal(kc, (B, P, C), jnp.float32)
    predicted_locations = jax.random.normal(kp, (B, P, 4), jnp.float32)
    gt_locations = jax.random.normal(kg, (B, P, 4), jnp.float32)
    # ~15% positive priors so hard-negative mining is actually exercised
    is_pos = jax.random.uniform(km, (B, P)) < 0.15
    cls_id = jax.random.randint(kl, (B, P), 1, C)
    labels = jnp.where(is_pos, cls_id, 0).astype(jnp.int32)

    reg, cls = multibox_loss(confidence, predicted_locations, labels, gt_locations,
                             neg_pos_ratio=NEG_POS_RATIO)
    jax.block_until_ready((reg, cls))

    reg_ref, cls_ref = reference_multibox_loss(confidence, predicted_locations, labels,
                                               gt_locations, NEG_POS_RATIO)
    assert jnp.allclose(reg, reg_ref, rtol=1e-4, atol=1e-4), (reg, reg_ref)
    assert jnp.allclose(cls, cls_ref, rtol=1e-4, atol=1e-4), (cls, cls_ref)
    print("KERNEL_OK")
</pallas_src>

<mosaic_0001>
module attributes {stable_mosaic.version = 11 : i64} {
  func.func @_multibox_loss_kernel(%arg0: i32, %arg1: memref<1x256x8xf32, #tpu.memory_space<vmem>>, %arg2: memref<1x256x1xi32, #tpu.memory_space<vmem>>, %arg3: memref<1x256x4xf32, #tpu.memory_space<vmem>>, %arg4: memref<1x256x4xf32, #tpu.memory_space<vmem>>, %arg5: memref<1x1x1xf32, #tpu.memory_space<vmem>>, %arg6: memref<1x1x1xf32, #tpu.memory_space<vmem>>, %arg7: memref<1x1x1xf32, #tpu.memory_space<vmem>>, %arg8: memref<1x256xf32, #tpu.memory_space<vmem>>) attributes {dimension_semantics = [#tpu.dimension_semantics<parallel>], iteration_bounds = array<i64: 2>, scalar_prefetch = 0 : i64, scratch_operands = 1 : i64, tpu.core_type = #tpu.core_type<tc>, window_params = [{transform_indices = @transform_0, window_bounds = array<i64: 1, 256, 8>}, {transform_indices = @transform_1, window_bounds = array<i64: 1, 256, 1>}, {transform_indices = @transform_2, window_bounds = array<i64: 1, 256, 4>}, {transform_indices = @transform_3, window_bounds = array<i64: 1, 256, 4>}, {transform_indices = @transform_4, window_bounds = array<i64: 1, 1, 1>}, {transform_indices = @transform_5, window_bounds = array<i64: 1, 1, 1>}, {transform_indices = @transform_6, window_bounds = array<i64: 1, 1, 1>}]} {
    %c0 = arith.constant 0 : index
    %c0_0 = arith.constant 0 : index
    %c0_1 = arith.constant 0 : index
    %0 = vector.load %arg1[%c0, %c0_0, %c0_1] : memref<1x256x8xf32, #tpu.memory_space<vmem>>, vector<1x256x8xf32>
    %1 = vector.shape_cast %0 : vector<1x256x8xf32> to vector<256x8xf32>
    %c0_2 = arith.constant 0 : index
    %c0_3 = arith.constant 0 : index
    %c0_4 = arith.constant 0 : index
    %2 = vector.load %arg2[%c0_2, %c0_3, %c0_4] : memref<1x256x1xi32, #tpu.memory_space<vmem>>, vector<1x256x1xi32>
    %3 = vector.shape_cast %2 : vector<1x256x1xi32> to vector<256x1xi32>
    %c0_i32 = arith.constant 0 : i32
    %4 = vector.broadcast %c0_i32 : i32 to vector<256x1xi32>
    %5 = arith.cmpi sgt, %3, %4 : vector<256x1xi32>
    %6 = arith.extui %5 : vector<256x1xi1> to vector<256x1xi32>
    %7 = vector.shape_cast %6 : vector<256x1xi32> to vector<1x256x1xi32>
    %cst = arith.constant dense<0> : vector<1xi32>
    %8 = vector.multi_reduction <add>, %7, %cst [1, 2] : vector<1x256x1xi32> to vector<1xi32>
    %9 = vector.shape_cast %8 : vector<1xi32> to vector<1x1x1xi32>
    %10 = vector.extract %9[0, 0, 0] : i32 from vector<1x1x1xi32>
    %c3_i32 = arith.constant 3 : i32
    %11 = arith.muli %10, %c3_i32 : i32
    %cst_5 = arith.constant dense<0xFF800000> : vector<256xf32>
    %12 = vector.multi_reduction <maximumf>, %1, %cst_5 [1] : vector<256x8xf32> to vector<256xf32>
    %13 = vector.shape_cast %12 : vector<256xf32> to vector<256x1xf32>
    %14 = vector.broadcast %13 : vector<256x1xf32> to vector<256x8xf32>
    %15 = arith.subf %1, %14 : vector<256x8xf32>
    %16 = math.exp %15 : vector<256x8xf32>
    %cst_6 = arith.constant dense<0.000000e+00> : vector<256xf32>
    %17 = vector.multi_reduction <add>, %16, %cst_6 [1] : vector<256x8xf32> to vector<256xf32>
    %18 = vector.shape_cast %17 : vector<256xf32> to vector<256x1xf32>
    %19 = math.log %18 : vector<256x1xf32>
    %20 = vector.extract_strided_slice %15 {offsets = [0, 0], sizes = [256, 1], strides = [1, 1]} : vector<256x8xf32> to vector<256x1xf32>
    %21 = arith.subf %19, %20 : vector<256x1xf32>
    %22 = tpu.iota {dimensions = array<i32: 1>} : vector<256x8xi32>
    %23 = vector.broadcast %3 : vector<256x1xi32> to vector<256x8xi32>
    %24 = arith.cmpi eq, %22, %23 : vector<256x8xi32>
    %cst_7 = arith.constant 0.000000e+00 : f32
    %25 = vector.broadcast %cst_7 : f32 to vector<256x8xf32>
    %26 = arith.select %24, %15, %25 : vector<256x8xi1>, vector<256x8xf32>
    %cst_8 = arith.constant dense<0.000000e+00> : vector<256xf32>
    %27 = vector.multi_reduction <add>, %26, %cst_8 [1] : vector<256x8xf32> to vector<256xf32>
    %28 = vector.shape_cast %27 : vector<256xf32> to vector<256x1xf32>
    %29 = arith.subf %19, %28 : vector<256x1xf32>
    %cst_9 = arith.constant -1.000000e+00 : f32
    %30 = vector.broadcast %cst_9 : f32 to vector<256x1xf32>
    %31 = arith.select %5, %30, %21 : vector<256x1xi1>, vector<256x1xf32>
    %32 = tpu.transpose %31, [1, 0] : vector<256x1xf32> -> vector<1x256xf32>
    %c0_10 = arith.constant 0 : index
    %c0_11 = arith.constant 0 : index
    %33 = vector.load %arg8[%c0_10, %c0_11] : memref<1x256xf32, #tpu.memory_space<vmem>>, vector<1x256xf32>
    tpu.vector_store %arg8[%c0_10, %c0_11], %32 {strides = array<i32>} : memref<1x256xf32, #tpu.memory_space<vmem>>, vector<1x256xf32>,
    %34 = tpu.iota {dimensions = array<i32: 0>} : vector<256x1xi32>
    %35 = tpu.iota {dimensions = array<i32: 1>} : vector<1x128xi32>
    %c0_i32_12 = arith.constant 0 : i32
    %36 = vector.broadcast %c0_i32_12 : i32 to vector<256x128xi32>
    %c0_13 = arith.constant 0 : index
    %c0_14 = arith.constant 0 : index
    %37 = vector.load %arg8[%c0_13, %c0_14] : memref<1x256xf32, #tpu.memory_space<vmem>>, vector<1x128xf32>
    %c0_i32_15 = arith.constant 0 : i32
    %38 = vector.broadcast %c0_i32_15 : i32 to vector<1x128xi32>
    %39 = arith.addi %35, %38 : vector<1x128xi32>
    %40 = vector.broadcast %37 : vector<1x128xf32> to vector<256x128xf32>
    %41 = vector.broadcast %31 : vector<256x1xf32> to vector<256x128xf32>
    %42 = arith.cmpf ogt, %40, %41 : vector<256x128xf32>
    %43 = vector.broadcast %37 : vector<1x128xf32> to vector<256x128xf32>
    %44 = vector.broadcast %31 : vector<256x1xf32> to vector<256x128xf32>
    %45 = arith.cmpf oeq, %43, %44 : vector<256x128xf32>
    %46 = vector.broadcast %39 : vector<1x128xi32> to vector<256x128xi32>
    %47 = vector.broadcast %34 : vector<256x1xi32> to vector<256x128xi32>
    %48 = arith.cmpi slt, %46, %47 : vector<256x128xi32>
    %49 = arith.andi %45, %48 : vector<256x128xi1>
    %50 = arith.ori %42, %49 : vector<256x128xi1>
    %51 = arith.extui %50 : vector<256x128xi1> to vector<256x128xi32>
    %52 = arith.addi %36, %51 : vector<256x128xi32>
    %c0_16 = arith.constant 0 : index
    %c128 = arith.constant 128 : index
    %53 = vector.load %arg8[%c0_16, %c128] : memref<1x256xf32, #tpu.memory_space<vmem>>, vector<1x128xf32>
    %c128_i32 = arith.constant 128 : i32
    %54 = vector.broadcast %c128_i32 : i32 to vector<1x128xi32>
    %55 = arith.addi %35, %54 : vector<1x128xi32>
    %56 = vector.broadcast %53 : vector<1x128xf32> to vector<256x128xf32>
    %57 = vector.broadcast %31 : vector<256x1xf32> to vector<256x128xf32>
    %58 = arith.cmpf ogt, %56, %57 : vector<256x128xf32>
    %59 = vector.broadcast %53 : vector<1x128xf32> to vector<256x128xf32>
    %60 = vector.broadcast %31 : vector<256x1xf32> to vector<256x128xf32>
    %61 = arith.cmpf oeq, %59, %60 : vector<256x128xf32>
    %62 = vector.broadcast %55 : vector<1x128xi32> to vector<256x128xi32>
    %63 = vector.broadcast %34 : vector<256x1xi32> to vector<256x128xi32>
    %64 = arith.cmpi slt, %62, %63 : vector<256x128xi32>
    %65 = arith.andi %61, %64 : vector<256x128xi1>
    %66 = arith.ori %58, %65 : vector<256x128xi1>
    %67 = arith.extui %66 : vector<256x128xi1> to vector<256x128xi32>
    %68 = arith.addi %52, %67 : vector<256x128xi32>
    %cst_17 = arith.constant dense<0> : vector<256xi32>
    %69 = vector.multi_reduction <add>, %68, %cst_17 [1] : vector<256x128xi32> to vector<256xi32>
    %70 = vector.shape_cast %69 : vector<256xi32> to vector<256x1xi32>
    %71 = vector.broadcast %11 : i32 to vector<256x1xi32>
    %72 = arith.cmpi slt, %70, %71 : vector<256x1xi32>
    %73 = arith.ori %5, %72 : vector<256x1xi1>
    %cst_18 = arith.constant 0.000000e+00 : f32
    %74 = vector.broadcast %cst_18 : f32 to vector<256x1xf32>
    %75 = arith.select %73, %29, %74 : vector<256x1xi1>, vector<256x1xf32>
    %76 = vector.shape_cast %75 : vector<256x1xf32> to vector<1x256x1xf32>
    %cst_19 = arith.constant dense<0.000000e+00> : vector<1xf32>
    %77 = vector.multi_reduction <add>, %76, %cst_19 [1, 2] : vector<1x256x1xf32> to vector<1xf32>
    %78 = vector.shape_cast %77 : vector<1xf32> to vector<1x1x1xf32>
    %79 = vector.extract %78[0, 0, 0] : f32 from vector<1x1x1xf32>
    %c0_20 = arith.constant 0 : index
    %c0_21 = arith.constant 0 : index
    %c0_22 = arith.constant 0 : index
    %80 = vector.load %arg3[%c0_20, %c0_21, %c0_22] : memref<1x256x4xf32, #tpu.memory_space<vmem>>, vector<1x256x4xf32>
    %81 = vector.shape_cast %80 : vector<1x256x4xf32> to vector<256x4xf32>
    %c0_23 = arith.constant 0 : index
    %c0_24 = arith.constant 0 : index
    %c0_25 = arith.constant 0 : index
    %82 = vector.load %arg4[%c0_23, %c0_24, %c0_25] : memref<1x256x4xf32, #tpu.memory_space<vmem>>, vector<1x256x4xf32>
    %83 = vector.shape_cast %82 : vector<1x256x4xf32> to vector<256x4xf32>
    %84 = arith.subf %81, %83 : vector<256x4xf32>
    %85 = math.absf %84 : vector<256x4xf32>
    %cst_26 = arith.constant 1.000000e+00 : f32
    %86 = vector.broadcast %cst_26 : f32 to vector<256x4xf32>
    %87 = arith.cmpf olt, %85, %86 : vector<256x4xf32>
    %cst_27 = arith.constant 5.000000e-01 : f32
    %88 = vector.broadcast %cst_27 : f32 to vector<256x4xf32>
    %89 = arith.mulf %88, %84 : vector<256x4xf32>
    %90 = arith.mulf %89, %84 : vector<256x4xf32>
    %cst_28 = arith.constant 5.000000e-01 : f32
    %91 = vector.broadcast %cst_28 : f32 to vector<256x4xf32>
    %92 = arith.subf %85, %91 : vector<256x4xf32>
    %93 = arith.select %87, %90, %92 : vector<256x4xi1>, vector<256x4xf32>
    %cst_29 = arith.constant 0.000000e+00 : f32
    %94 = vector.shape_cast %5 : vector<256x1xi1> to vector<256x1xi1>
    %95 = vector.broadcast %94 : vector<256x1xi1> to vector<256x4xi1>
    %96 = vector.broadcast %cst_29 : f32 to vector<256x4xf32>
    %97 = arith.select %95, %93, %96 : vector<256x4xi1>, vector<256x4xf32>
    %98 = vector.shape_cast %97 : vector<256x4xf32> to vector<1x256x4xf32>
    %cst_30 = arith.constant dense<0.000000e+00> : vector<1xf32>
    %99 = vector.multi_reduction <add>, %98, %cst_30 [1, 2] : vector<1x256x4xf32> to vector<1xf32>
    %100 = vector.shape_cast %99 : vector<1xf32> to vector<1x1x1xf32>
    %101 = vector.extract %100[0, 0, 0] : f32 from vector<1x1x1xf32>
    %102 = vector.broadcast %101 : f32 to vector<1x1x1xf32>
    %c0_31 = arith.constant 0 : index
    %c0_32 = arith.constant 0 : index
    %c0_33 = arith.constant 0 : index
    %103 = vector.load %arg5[%c0_31, %c0_32, %c0_33] : memref<1x1x1xf32, #tpu.memory_space<vmem>>, vector<1x1x1xf32>
    tpu.vector_store %arg5[%c0_31, %c0_32, %c0_33], %102 {strides = array<i32>} : memref<1x1x1xf32, #tpu.memory_space<vmem>>, vector<1x1x1xf32>,
    %104 = vector.broadcast %79 : f32 to vector<1x1x1xf32>
    %c0_34 = arith.constant 0 : index
    %c0_35 = arith.constant 0 : index
    %c0_36 = arith.constant 0 : index
    %105 = vector.load %arg6[%c0_34, %c0_35, %c0_36] : memref<1x1x1xf32, #tpu.memory_space<vmem>>, vector<1x1x1xf32>
    tpu.vector_store %arg6[%c0_34, %c0_35, %c0_36], %104 {strides = array<i32>} : memref<1x1x1xf32, #tpu.memory_space<vmem>>, vector<1x1x1xf32>,
    %106 = arith.sitofp %10 : i32 to f32
    %107 = vector.broadcast %106 : f32 to vector<1x1x1xf32>
    %c0_37 = arith.constant 0 : index
    %c0_38 = arith.constant 0 : index
    %c0_39 = arith.constant 0 : index
    %108 = vector.load %arg7[%c0_37, %c0_38, %c0_39] : memref<1x1x1xf32, #tpu.memory_space<vmem>>, vector<1x1x1xf32>
    tpu.vector_store %arg7[%c0_37, %c0_38, %c0_39], %107 {strides = array<i32>} : memref<1x1x1xf32, #tpu.memory_space<vmem>>, vector<1x1x1xf32>,
    return
  }
  func.func @transform_0(%arg0: i32) -> (i32, i32, i32) {
    %c0_i32 = arith.constant 0 : i32
    %c0_i32_0 = arith.constant 0 : i32
    %c0_i32_1 = arith.constant 0 : i32
    return %arg0, %c0_i32, %c0_i32_0 : i32, i32, i32
  }
  func.func @transform_1(%arg0: i32) -> (i32, i32, i32) {
    %c0_i32 = arith.constant 0 : i32
    %c0_i32_0 = arith.constant 0 : i32
    %c0_i32_1 = arith.constant 0 : i32
    return %arg0, %c0_i32, %c0_i32_0 : i32, i32, i32
  }
  func.func @transform_2(%arg0: i32) -> (i32, i32, i32) {
    %c0_i32 = arith.constant 0 : i32
    %c0_i32_0 = arith.constant 0 : i32
    %c0_i32_1 = arith.constant 0 : i32
    return %arg0, %c0_i32, %c0_i32_0 : i32, i32, i32
  }
  func.func @transform_3(%arg0: i32) -> (i32, i32, i32) {
    %c0_i32 = arith.constant 0 : i32
    %c0_i32_0 = arith.constant 0 : i32
    %c0_i32_1 = arith.constant 0 : i32
    return %arg0, %c0_i32, %c0_i32_0 : i32, i32, i32
  }
  func.func @transform_4(%arg0: i32) -> (i32, i32, i32) {
    %c0_i32 = arith.constant 0 : i32
    %c0_i32_0 = arith.constant 0 : i32
    %c0_i32_1 = arith.constant 0 : i32
    return %arg0, %c0_i32, %c0_i32_0 : i32, i32, i32
  }
  func.func @transform_5(%arg0: i32) -> (i32, i32, i32) {
    %c0_i32 = arith.constant 0 : i32
    %c0_i32_0 = arith.constant 0 : i32
    %c0_i32_1 = arith.constant 0 : i32
    return %arg0, %c0_i32, %c0_i32_0 : i32, i32, i32
  }
  func.func @transform_6(%arg0: i32) -> (i32, i32, i32) {
    %c0_i32 = arith.constant 0 : i32
    %c0_i32_0 = arith.constant 0 : i32
    %c0_i32_1 = arith.constant 0 : i32
    return %arg0, %c0_i32, %c0_i32_0 : i32, i32, i32
  }
}

</mosaic_0001>

<llo_original>
// kernel: multibox_loss.1
$region0: #{multibox_loss.1}
  #allocation0 [shape = 'u32[]', space=smem, size = 0x4, offset = 0x4, fixed_abs, tag = 'smem constant byte address 0x4 - core index']
  #allocation1 [shape = 'u32[144,128]{1,0:T(1,128)}', space=vmem, size = 0x12000, scoped, tag = 'internal scratch']
  #allocation2 [shape = 'f32[1,256]{1,0:T(1,128)}', space=vmem, size = 0x400, scoped, tag = 'scratch operand']
  %s0 = inlined_call_operand.vmem [shape: f32[2,256,8], index: 0, kind: input, shape index: {}]
  %s1 = inlined_call_operand.vmem [shape: s32[2,256,1], index: 1, kind: input, shape index: {}]
  %s2 = inlined_call_operand.vmem [shape: f32[2,256,4], index: 2, kind: input, shape index: {}]
  %s3 = inlined_call_operand.vmem [shape: f32[2,256,4], index: 3, kind: input, shape index: {}]
  %s4 = inlined_call_operand.vmem [shape: f32[2,1,1], index: 4, kind: output, shape index: {0}]
  %s5 = inlined_call_operand.vmem [shape: f32[2,1,1], index: 5, kind: output, shape index: {1}]
  %s6 = inlined_call_operand.vmem [shape: f32[2,1,1], index: 6, kind: output, shape index: {2}]
  %7 = xla_tuple %s4, %s5, %s6
  %s8 = sld [smem:[#allocation0]]
  $region65: #{multibox_loss.1} parent=0
    _
  %s10 = ssub.s32 1, %s8
  %s11 = scalar_select 0, %s10, %s8
  loop: start=0, step=1, limit=4
  $region2: #{multibox_loss.1} parent=0 // loop_pre_header
    _
  $region3: #{multibox_loss.1} parent=0 // loop_header
    %s13 = sphi 0, %s17
    %p14 = scmp.ge.s32.totalorder %s13, 4
    %s23 = sphi 0, %s25
    %s26 = sphi 0, %s23
    %s27 = sphi 0, %s26
    %s43 = sphi 0, %s27
    %s49 = sphi 0, %s51
    %s52 = sphi 0, %s49
    %s53 = sphi 0, %s52
    %s69 = sphi 0, %s53
    %s75 = sphi 0, %s77
    %s78 = sphi 0, %s75
    %s79 = sphi 0, %s78
    %s95 = sphi 0, %s79
    %s101 = sphi 0, %s103
    %s104 = sphi 0, %s101
    %s105 = sphi 0, %s104
    %s121 = sphi 0, %s105
    %s127 = sphi 0, %s129
    %s130 = sphi 0, %s127
    %s131 = sphi 0, %s130
    %s147 = sphi 0, %s131
    %s153 = sphi 0, %s155
    %s156 = sphi 0, %s153
    %s157 = sphi 0, %s156
    %s173 = sphi 0, %s157
    %s179 = sphi 0, %s181
    %s182 = sphi 0, %s179
    %s183 = sphi 0, %s182
    %s199 = sphi 0, %s183
  $region4: #{multibox_loss.1} parent=0 // loop_header_branch
    %16 = sbr.rel (%p14) target = $region8
  $region5: #{multibox_loss.1} parent=0 // loop_body
    %s18 = ssub.s32 %s13, 1
    %s19 = ssub.s32 %s13, 2
    %s20 = sadd.s32 %s13, 1
    %s21 = ssub.s32 %s13, %s20
    %p22 = scmp.eq.s32.totalorder %s21, 0
    %s24 = sadd.s32 %s23, 1
    %s25 = scalar_select %p22, %s23, %s24
    %p28 = pneg %p22
    %p29 = scmp.eq.s32.totalorder %s13, 1
    %p30 = por %p28, %p29
    %p31 = scmp.ne.s32.totalorder %s23, %s26
    %p32 = scmp.eq.s32.totalorder %s13, 0
    %p33 = por %p31, %p32
    %p34 = scmp.ne.s32.totalorder %s23, %s26
    %p35 = scmp.eq.s32.totalorder %s18, 1
    %p36 = por %p34, %p35
    %p37 = scmp.ne.s32.totalorder %s26, %s27
    %p38 = scmp.eq.s32.totalorder %s18, 0
    %p39 = por %p37, %p38
    %p40 = scmp.ne.s32.totalorder %s26, %s27
    %p41 = scmp.eq.s32.totalorder %s19, 1
    %p42 = por %p40, %p41
    %p44 = scmp.ne.s32.totalorder %s27, %s43
    %p45 = scmp.eq.s32.totalorder %s19, 0
    %p46 = por %p44, %p45
    %s47 = ssub.s32 %s13, %s20
    %p48 = scmp.eq.s32.totalorder %s47, 0
    %s50 = sadd.s32 %s49, 1
    %s51 = scalar_select %p48, %s49, %s50
    %p54 = pneg %p48
    %p55 = scmp.eq.s32.totalorder %s13, 1
    %p56 = por %p54, %p55
    %p57 = scmp.ne.s32.totalorder %s49, %s52
    %p58 = scmp.eq.s32.totalorder %s13, 0
    %p59 = por %p57, %p58
    %p60 = scmp.ne.s32.totalorder %s49, %s52
    %p61 = scmp.eq.s32.totalorder %s18, 1
    %p62 = por %p60, %p61
    %p63 = scmp.ne.s32.totalorder %s52, %s53
    %p64 = scmp.eq.s32.totalorder %s18, 0
    %p65 = por %p63, %p64
    %p66 = scmp.ne.s32.totalorder %s52, %s53
    %p67 = scmp.eq.s32.totalorder %s19, 1
    %p68 = por %p66, %p67
    %p70 = scmp.ne.s32.totalorder %s53, %s69
    %p71 = scmp.eq.s32.totalorder %s19, 0
    %p72 = por %p70, %p71
    %s73 = ssub.s32 %s13, %s20
    %p74 = scmp.eq.s32.totalorder %s73, 0
    %s76 = sadd.s32 %s75, 1
    %s77 = scalar_select %p74, %s75, %s76
    %p80 = pneg %p74
    %p81 = scmp.eq.s32.totalorder %s13, 1
    %p82 = por %p80, %p81
    %p83 = scmp.ne.s32.totalorder %s75, %s78
    %p84 = scmp.eq.s32.totalorder %s13, 0
    %p85 = por %p83, %p84
    %p86 = scmp.ne.s32.totalorder %s75, %s78
    %p87 = scmp.eq.s32.totalorder %s18, 1
    %p88 = por %p86, %p87
    %p89 = scmp.ne.s32.totalorder %s78, %s79
    %p90 = scmp.eq.s32.totalorder %s18, 0
    %p91 = por %p89, %p90
    %p92 = scmp.ne.s32.totalorder %s78, %s79
    %p93 = scmp.eq.s32.totalorder %s19, 1
    %p94 = por %p92, %p93
    %p96 = scmp.ne.s32.totalorder %s79, %s95
    %p97 = scmp.eq.s32.totalorder %s19, 0
    %p98 = por %p96, %p97
    %s99 = ssub.s32 %s13, %s20
    %p100 = scmp.eq.s32.totalorder %s99, 0
    %s102 = sadd.s32 %s101, 1
    %s103 = scalar_select %p100, %s101, %s102
    %p106 = pneg %p100
    %p107 = scmp.eq.s32.totalorder %s13, 1
    %p108 = por %p106, %p107
    %p109 = scmp.ne.s32.totalorder %s101, %s104
    %p110 = scmp.eq.s32.totalorder %s13, 0
    %p111 = por %p109, %p110
    %p112 = scmp.ne.s32.totalorder %s101, %s104
    %p113 = scmp.eq.s32.totalorder %s18, 1
    %p114 = por %p112, %p113
    %p115 = scmp.ne.s32.totalorder %s104, %s105
    %p116 = scmp.eq.s32.totalorder %s18, 0
    %p117 = por %p115, %p116
    %p118 = scmp.ne.s32.totalorder %s104, %s105
    %p119 = scmp.eq.s32.totalorder %s19, 1
    %p120 = por %p118, %p119
    %p122 = scmp.ne.s32.totalorder %s105, %s121
    %p123 = scmp.eq.s32.totalorder %s19, 0
    %p124 = por %p122, %p123
    %s125 = ssub.s32 %s13, %s20
    %p126 = scmp.eq.s32.totalorder %s125, 0
    %s128 = sadd.s32 %s127, 1
    %s129 = scalar_select %p126, %s127, %s128
    %p132 = pneg %p126
    %p133 = scmp.eq.s32.totalorder %s13, 1
    %p134 = por %p132, %p133
    %p135 = scmp.ne.s32.totalorder %s127, %s130
    %p136 = scmp.eq.s32.totalorder %s13, 0
    %p137 = por %p135, %p136
    %p138 = scmp.ne.s32.totalorder %s127, %s130
    %p139 = scmp.eq.s32.totalorder %s18, 1
    %p140 = por %p138, %p139
    %p141 = scmp.ne.s32.totalorder %s130, %s131
    %p142 = scmp.eq.s32.totalorder %s18, 0
    %p143 = por %p141, %p142
    %p144 = scmp.ne.s32.totalorder %s130, %s131
    %p145 = scmp.eq.s32.totalorder %s19, 1
    %p146 = por %p144, %p145
    %p148 = scmp.ne.s32.totalorder %s131, %s147
    %p149 = scmp.eq.s32.totalorder %s19, 0
    %p150 = por %p148, %p149
    %s151 = ssub.s32 %s13, %s20
    %p152 = scmp.eq.s32.totalorder %s151, 0
    %s154 = sadd.s32 %s153, 1
    %s155 = scalar_select %p152, %s153, %s154
    %p158 = pneg %p152
    %p159 = scmp.eq.s32.totalorder %s13, 1
    %p160 = por %p158, %p159
    %p161 = scmp.ne.s32.totalorder %s153, %s156
    %p162 = scmp.eq.s32.totalorder %s13, 0
    %p163 = por %p161, %p162
    %p164 = scmp.ne.s32.totalorder %s153, %s156
    %p165 = scmp.eq.s32.totalorder %s18, 1
    %p166 = por %p164, %p165
    %p167 = scmp.ne.s32.totalorder %s156, %s157
    %p168 = scmp.eq.s32.totalorder %s18, 0
    %p169 = por %p167, %p168
    %p170 = scmp.ne.s32.totalorder %s156, %s157
    %p171 = scmp.eq.s32.totalorder %s19, 1
    %p172 = por %p170, %p171
    %p174 = scmp.ne.s32.totalorder %s157, %s173
    %p175 = scmp.eq.s32.totalorder %s19, 0
    %p176 = por %p174, %p175
    %s177 = ssub.s32 %s13, %s20
    %p178 = scmp.eq.s32.totalorder %s177, 0
    %s180 = sadd.s32 %s179, 1
    %s181 = scalar_select %p178, %s179, %s180
    %p184 = pneg %p178
    %p185 = scmp.eq.s32.totalorder %s13, 1
    %p186 = por %p184, %p185
    %p187 = scmp.ne.s32.totalorder %s179, %s182
    %p188 = scmp.eq.s32.totalorder %s13, 0
    %p189 = por %p187, %p188
    %p190 = scmp.ne.s32.totalorder %s179, %s182
    %p191 = scmp.eq.s32.totalorder %s18, 1
    %p192 = por %p190, %p191
    %p193 = scmp.ne.s32.totalorder %s182, %s183
    %p194 = scmp.eq.s32.totalorder %s18, 0
    %p195 = por %p193, %p194
    %p196 = scmp.ne.s32.totalorder %s182, %s183
    %p197 = scmp.eq.s32.totalorder %s19, 1
    %p198 = por %p196, %p197
    %p200 = scmp.ne.s32.totalorder %s183, %s199
    %p201 = scmp.eq.s32.totalorder %s19, 0
    %p202 = por %p200, %p201
    %p203 = scmp.le.s32.totalorder 1, %s13
    %p204 = scmp.lt.s32.totalorder %s13, 3
    %p205 = pnand %p203, %p204
    %p206 = pneg %p205
    // Predicated region
    $region9: #{multibox_loss.1} parent=5 // pred_check
      _
    $region10: #{multibox_loss.1} parent=5 // pred_check_branch
      %208 = sbr.rel (%p205) target = $region12
    $region11: #{multibox_loss.1} parent=5 // pred_region
      %s209 = ssub.s32 %s13, 1
    $region12: #{multibox_loss.1} parent=5 // pred_fallthru
      _
    %p210 = scmp.lt.s32.totalorder %s13, 2
    // Predicated region
    $region13: #{multibox_loss.1} parent=5 // pred_check
      %p211 = pneg %p210
    $region14: #{multibox_loss.1} parent=5 // pred_check_branch
      %213 = sbr.rel (%p211) target = $region16
    $region15: #{multibox_loss.1} parent=5 // pred_region
      // Predicated region
      $region17: #{multibox_loss.1} parent=15 // pred_check
        %p214 = pneg %p33
      $region18: #{multibox_loss.1} parent=15 // pred_check_branch
        %216 = sbr.rel (%p214) target = $region20
      $region19: #{multibox_loss.1} parent=15 // pred_region
        %p217 = scmp.lt.s32.totalorder %s13, 1
        %s218 = scalar_select %p217, %s13, 1
        %s219 = smul.addr %s218, 32
        %s220 = smul.addr %s219, 8
        %s221 = scalar_lea.vmem %s0, %s220
      $region20: #{multibox_loss.1} parent=15 // pred_fallthru
        _
      // Predicated region
      $region21: #{multibox_loss.1} parent=15 // pred_check
        %p222 = pneg %p59
      $region22: #{multibox_loss.1} parent=15 // pred_check_branch
        %224 = sbr.rel (%p222) target = $region24
      $region23: #{multibox_loss.1} parent=15 // pred_region
        %p225 = scmp.lt.s32.totalorder %s13, 1
        %s226 = scalar_select %p225, %s13, 1
        %s227 = smul.addr %s226, 32
        %s228 = smul.addr %s227, 8
        %s229 = scalar_lea.vmem %s1, %s228
      $region24: #{multibox_loss.1} parent=15 // pred_fallthru
        _
      // Predicated region
      $region25: #{multibox_loss.1} parent=15 // pred_check
        %p230 = pneg %p85
      $region26: #{multibox_loss.1} parent=15 // pred_check_branch
        %232 = sbr.rel (%p230) target = $region28
      $region27: #{multibox_loss.1} parent=15 // pred_region
        %p233 = scmp.lt.s32.totalorder %s13, 1
        %s234 = scalar_select %p233, %s13, 1
        %s235 = smul.addr %s234, 32
        %s236 = smul.addr %s235, 8
        %s237 = scalar_lea.vmem %s2, %s236
      $region28: #{multibox_loss.1} parent=15 // pred_fallthru
        _
      // Predicated region
      $region29: #{multibox_loss.1} parent=15 // pred_check
        %p238 = pneg %p111
      $region30: #{multibox_loss.1} parent=15 // pred_check_branch
        %240 = sbr.rel (%p238) target = $region32
      $region31: #{multibox_loss.1} parent=15 // pred_region
        %p241 = scmp.lt.s32.totalorder %s13, 1
        %s242 = scalar_select %p241, %s13, 1
        %s243 = smul.addr %s242, 32
        %s244 = smul.addr %s243, 8
        %s245 = scalar_lea.vmem %s3, %s244
      $region32: #{multibox_loss.1} parent=15 // pred_fallthru
        _
    $region16: #{multibox_loss.1} parent=5 // pred_fallthru
      _
    %p246 = scmp.le.s32.totalorder 1, %s13
    %p247 = scmp.lt.s32.totalorder %s13, 3
    %p248 = pnand %p246, %p247
    %p249 = pneg %p248
    // Predicated region
    $region33: #{multibox_loss.1} parent=5 // pred_check
      _
    $region34: #{multibox_loss.1} parent=5 // pred_check_branch
      %251 = sbr.rel (%p248) target = $region36
    $region35: #{multibox_loss.1} parent=5 // pred_region
      %s252 = ssub.s32 %s13, 1
      %p253 = scmp.lt.s32.totalorder %s18, 1
      %s254 = scalar_select %p253, %s18, 1
      %s255 = smul.addr %s254, 32
      %s256 = smul.addr %s255, 8
      %s257 = scalar_lea.vmem %s0, %s256
      %p258 = pneg %p39
      %p259 = pneg %p36
      %p260 = scmp.lt.s32.totalorder %s18, 1
      %s261 = scalar_select %p260, %s18, 1
      %s262 = smul.addr %s261, 32
      %s263 = smul.addr %s262, 8
      %s264 = scalar_lea.vmem %s1, %s263
      %p265 = pneg %p65
      %p266 = pneg %p62
      %p267 = scmp.lt.s32.totalorder %s18, 1
      %s268 = scalar_select %p267, %s18, 1
      %s269 = smul.addr %s268, 32
      %s270 = smul.addr %s269, 8
      %s271 = scalar_lea.vmem %s2, %s270
      %p272 = pneg %p91
      %p273 = pneg %p88
      %p274 = scmp.lt.s32.totalorder %s18, 1
      %s275 = scalar_select %p274, %s18, 1
      %s276 = smul.addr %s275, 32
      %s277 = smul.addr %s276, 8
      %s278 = scalar_lea.vmem %s3, %s277
      %p279 = pneg %p117
      %p280 = pneg %p114
      %p281 = pneg %p143
      %p282 = pneg %p140
      %p283 = scmp.lt.s32.totalorder %s18, 1
      %s284 = scalar_select %p283, %s18, 1
      %s285 = scalar_lea.vmem %s4, %s284
      %p286 = pneg %p169
      %p287 = pneg %p166
      %p288 = scmp.lt.s32.totalorder %s18, 1
      %s289 = scalar_select %p288, %s18, 1
      %s290 = scalar_lea.vmem %s5, %s289
      %p291 = pneg %p195
      %p292 = pneg %p192
      %p293 = scmp.lt.s32.totalorder %s18, 1
      %s294 = scalar_select %p293, %s18, 1
      %s295 = scalar_lea.vmem %s6, %s294
      %p296 = scmp.lt.s32.totalorder %s18, 1
      %s297 = scalar_select %p296, %s18, 1
      %s298 = smul.addr %s297, 32
      %s299 = smul.addr %s298, 8
      %s300 = scalar_lea.vmem %s0, %s299
      %p301 = scmp.lt.s32.totalorder %s18, 1
      %s302 = scalar_select %p301, %s18, 1
      %s303 = smul.addr %s302, 32
      %s304 = smul.addr %s303, 8
      %s305 = scalar_lea.vmem %s1, %s304
      %p306 = scmp.lt.s32.totalorder %s18, 1
      %s307 = scalar_select %p306, %s18, 1
      %s308 = smul.addr %s307, 32
      %s309 = smul.addr %s308, 8
      %s310 = scalar_lea.vmem %s2, %s309
      %p311 = scmp.lt.s32.totalorder %s18, 1
      %s312 = scalar_select %p311, %s18, 1
      %s313 = smul.addr %s312, 32
      %s314 = smul.addr %s313, 8
      %s315 = scalar_lea.vmem %s3, %s314
      %p316 = scmp.lt.s32.totalorder %s18, 1
      %s317 = scalar_select %p316, %s18, 1
      %s318 = scalar_lea.vmem %s4, %s317
      %p319 = scmp.lt.s32.totalorder %s18, 1
      %s320 = scalar_select %p319, %s18, 1
      %s321 = scalar_lea.vmem %s5, %s320
      %p322 = scmp.lt.s32.totalorder %s18, 1
      %s323 = scalar_select %p322, %s18, 1
      %s324 = scalar_lea.vmem %s6, %s323
      %v325 = vld [vmem:[%s300] sm:$0xff]
      %v326 = vld [vmem:[%s300 + $0x8] sm:$0xff]
      %v327 = vld [vmem:[%s300 + $0x10] sm:$0xff]
      %v328 = vld [vmem:[%s300 + $0x18] sm:$0xff]
      %v329 = vld [vmem:[%s300 + $0x20] sm:$0xff]
      %v330 = vld [vmem:[%s300 + $0x28] sm:$0xff]
      %v331 = vld [vmem:[%s300 + $0x30] sm:$0xff]
      %v332 = vld [vmem:[%s300 + $0x38] sm:$0xff]
      %v333 = vld [vmem:[%s300 + $0x40] sm:$0xff]
      %v334 = vld [vmem:[%s300 + $0x48] sm:$0xff]
      %v335 = vld [vmem:[%s300 + $0x50] sm:$0xff]
      %v336 = vld [vmem:[%s300 + $0x58] sm:$0xff]
      %v337 = vld [vmem:[%s300 + $0x60] sm:$0xff]
      %v338 = vld [vmem:[%s300 + $0x68] sm:$0xff]
      %v339 = vld [vmem:[%s300 + $0x70] sm:$0xff]
      %v340 = vld [vmem:[%s300 + $0x78] sm:$0xff]
      %v341 = vld [vmem:[%s300 + $0x80] sm:$0xff]
      %v342 = vld [vmem:[%s300 + $0x88] sm:$0xff]
      %v343 = vld [vmem:[%s300 + $0x90] sm:$0xff]
      %v344 = vld [vmem:[%s300 + $0x98] sm:$0xff]
      %v345 = vld [vmem:[%s300 + $0xa0] sm:$0xff]
      %v346 = vld [vmem:[%s300 + $0xa8] sm:$0xff]
      %v347 = vld [vmem:[%s300 + $0xb0] sm:$0xff]
      %v348 = vld [vmem:[%s300 + $0xb8] sm:$0xff]
      %v349 = vld [vmem:[%s300 + $0xc0] sm:$0xff]
      %v350 = vld [vmem:[%s300 + $0xc8] sm:$0xff]
      %v351 = vld [vmem:[%s300 + $0xd0] sm:$0xff]
      %v352 = vld [vmem:[%s300 + $0xd8] sm:$0xff]
      %v353 = vld [vmem:[%s300 + $0xe0] sm:$0xff]
      %v354 = vld [vmem:[%s300 + $0xe8] sm:$0xff]
      %v355 = vld [vmem:[%s300 + $0xf0] sm:$0xff]
      %v356 = vld [vmem:[%s300 + $0xf8] sm:$0xff]
      %v357 = vld [vmem:[%s305] sm:$0xff]
      %v358 = vld [vmem:[%s305 + $0x8] sm:$0xff]
      %v359 = vld [vmem:[%s305 + $0x10] sm:$0xff]
      %v360 = vld [vmem:[%s305 + $0x18] sm:$0xff]
      %v361 = vld [vmem:[%s305 + $0x20] sm:$0xff]
      %v362 = vld [vmem:[%s305 + $0x28] sm:$0xff]
      %v363 = vld [vmem:[%s305 + $0x30] sm:$0xff]
      %v364 = vld [vmem:[%s305 + $0x38] sm:$0xff]
      %v365 = vld [vmem:[%s305 + $0x40] sm:$0xff]
      %v366 = vld [vmem:[%s305 + $0x48] sm:$0xff]
      %v367 = vld [vmem:[%s305 + $0x50] sm:$0xff]
      %v368 = vld [vmem:[%s305 + $0x58] sm:$0xff]
      %v369 = vld [vmem:[%s305 + $0x60] sm:$0xff]
      %v370 = vld [vmem:[%s305 + $0x68] sm:$0xff]
      %v371 = vld [vmem:[%s305 + $0x70] sm:$0xff]
      %v372 = vld [vmem:[%s305 + $0x78] sm:$0xff]
      %v373 = vld [vmem:[%s305 + $0x80] sm:$0xff]
      %v374 = vld [vmem:[%s305 + $0x88] sm:$0xff]
      %v375 = vld [vmem:[%s305 + $0x90] sm:$0xff]
      %v376 = vld [vmem:[%s305 + $0x98] sm:$0xff]
      %v377 = vld [vmem:[%s305 + $0xa0] sm:$0xff]
      %v378 = vld [vmem:[%s305 + $0xa8] sm:$0xff]
      %v379 = vld [vmem:[%s305 + $0xb0] sm:$0xff]
      %v380 = vld [vmem:[%s305 + $0xb8] sm:$0xff]
      %v381 = vld [vmem:[%s305 + $0xc0] sm:$0xff]
      %v382 = vld [vmem:[%s305 + $0xc8] sm:$0xff]
      %v383 = vld [vmem:[%s305 + $0xd0] sm:$0xff]
      %v384 = vld [vmem:[%s305 + $0xd8] sm:$0xff]
      %v385 = vld [vmem:[%s305 + $0xe0] sm:$0xff]
      %v386 = vld [vmem:[%s305 + $0xe8] sm:$0xff]
      %v387 = vld [vmem:[%s305 + $0xf0] sm:$0xff]
      %v388 = vld [vmem:[%s305 + $0xf8] sm:$0xff]
      %vm389 = vcmp.gt.s32.totalorder %v357, 0
      %vm390 = vcmp.gt.s32.totalorder %v358, 0
      %vm391 = vcmp.gt.s32.totalorder %v359, 0
      %vm392 = vcmp.gt.s32.totalorder %v360, 0
      %vm393 = vcmp.gt.s32.totalorder %v361, 0
      %vm394 = vcmp.gt.s32.totalorder %v362, 0
      %vm395 = vcmp.gt.s32.totalorder %v363, 0
      %vm396 = vcmp.gt.s32.totalorder %v364, 0
      %vm397 = vcmp.gt.s32.totalorder %v365, 0
      %vm398 = vcmp.gt.s32.totalorder %v366, 0
      %vm399 = vcmp.gt.s32.totalorder %v367, 0
      %vm400 = vcmp.gt.s32.totalorder %v368, 0
      %vm401 = vcmp.gt.s32.totalorder %v369, 0
      %vm402 = vcmp.gt.s32.totalorder %v370, 0
      %vm403 = vcmp.gt.s32.totalorder %v371, 0
      %vm404 = vcmp.gt.s32.totalorder %v372, 0
      %vm405 = vcmp.gt.s32.totalorder %v373, 0
      %vm406 = vcmp.gt.s32.totalorder %v374, 0
      %vm407 = vcmp.gt.s32.totalorder %v375, 0
      %vm408 = vcmp.gt.s32.totalorder %v376, 0
      %vm409 = vcmp.gt.s32.totalorder %v377, 0
      %vm410 = vcmp.gt.s32.totalorder %v378, 0
      %vm411 = vcmp.gt.s32.totalorder %v379, 0
      %vm412 = vcmp.gt.s32.totalorder %v380, 0
      %vm413 = vcmp.gt.s32.totalorder %v381, 0
      %vm414 = vcmp.gt.s32.totalorder %v382, 0
      %vm415 = vcmp.gt.s32.totalorder %v383, 0
      %vm416 = vcmp.gt.s32.totalorder %v384, 0
      %vm417 = vcmp.gt.s32.totalorder %v385, 0
      %vm418 = vcmp.gt.s32.totalorder %v386, 0
      %vm419 = vcmp.gt.s32.totalorder %v387, 0
      %vm420 = vcmp.gt.s32.totalorder %v388, 0
      %v421 = vsel %vm389, 1, 0
      %v422 = vsel %vm390, 1, 0
      %v423 = vsel %vm391, 1, 0
      %v424 = vsel %vm392, 1, 0
      %v425 = vsel %vm393, 1, 0
      %v426 = vsel %vm394, 1, 0
      %v427 = vsel %vm395, 1, 0
      %v428 = vsel %vm396, 1, 0
      %v429 = vsel %vm397, 1, 0
      %v430 = vsel %vm398, 1, 0
      %v431 = vsel %vm399, 1, 0
      %v432 = vsel %vm400, 1, 0
      %v433 = vsel %vm401, 1, 0
      %v434 = vsel %vm402, 1, 0
      %v435 = vsel %vm403, 1, 0
      %v436 = vsel %vm404, 1, 0
      %v437 = vsel %vm405, 1, 0
      %v438 = vsel %vm406, 1, 0
      %v439 = vsel %vm407, 1, 0
      %v440 = vsel %vm408, 1, 0
      %v441 = vsel %vm409, 1, 0
      %v442 = vsel %vm410, 1, 0
      %v443 = vsel %vm411, 1, 0
      %v444 = vsel %vm412, 1, 0
      %v445 = vsel %vm413, 1, 0
      %v446 = vsel %vm414, 1, 0
      %v447 = vsel %vm415, 1, 0
      %v448 = vsel %vm416, 1, 0
      %v449 = vsel %vm417, 1, 0
      %v450 = vsel %vm418, 1, 0
      %v451 = vsel %vm419, 1, 0
      %v452 = vsel %vm420, 1, 0
      %vm453 = vcmask 7168
      %v454 = vsel %vm453, %v421, 0
      %v455 = vsel %vm453, %v422, 0
      %v456 = vsel %vm453, %v423, 0
      %v457 = vsel %vm453, %v424, 0
      %v458 = vsel %vm453, %v425, 0
      %v459 = vadd.s32 %v454, %v458
      %v460 = vsel %vm453, %v426, 0
      %v461 = vadd.s32 %v455, %v460
      %v462 = vsel %vm453, %v427, 0
      %v463 = vadd.s32 %v456, %v462
      %v464 = vsel %vm453, %v428, 0
      %v465 = vadd.s32 %v457, %v464
      %v466 = vsel %vm453, %v429, 0
      %v467 = vadd.s32 %v459, %v466
      %v468 = vsel %vm453, %v430, 0
      %v469 = vadd.s32 %v461, %v468
      %v470 = vsel %vm453, %v431, 0
      %v471 = vadd.s32 %v463, %v470
      %v472 = vsel %vm453, %v432, 0
      %v473 = vadd.s32 %v465, %v472
      %v474 = vsel %vm453, %v433, 0
      %v475 = vadd.s32 %v467, %v474
      %v476 = vsel %vm453, %v434, 0
      %v477 = vadd.s32 %v469, %v476
      %v478 = vsel %vm453, %v435, 0
      %v479 = vadd.s32 %v471, %v478
      %v480 = vsel %vm453, %v436, 0
      %v481 = vadd.s32 %v473, %v480
      %v482 = vsel %vm453, %v437, 0
      %v483 = vadd.s32 %v475, %v482
      %v484 = vsel %vm453, %v438, 0
      %v485 = vadd.s32 %v477, %v484
      %v486 = vsel %vm453, %v439, 0
      %v487 = vadd.s32 %v479, %v486
      %v488 = vsel %vm453, %v440, 0
      %v489 = vadd.s32 %v481, %v488
      %v490 = vsel %vm453, %v441, 0
      %v491 = vadd.s32 %v483, %v490
      %v492 = vsel %vm453, %v442, 0
      %v493 = vadd.s32 %v485, %v492
      %v494 = vsel %vm453, %v443, 0
      %v495 = vadd.s32 %v487, %v494
      %v496 = vsel %vm453, %v444, 0
      %v497 = vadd.s32 %v489, %v496
      %v498 = vsel %vm453, %v445, 0
      %v499 = vadd.s32 %v491, %v498
      %v500 = vsel %vm453, %v446, 0
      %v501 = vadd.s32 %v493, %v500
      %v502 = vsel %vm453, %v447, 0
      %v503 = vadd.s32 %v495, %v502
      %v504 = vsel %vm453, %v448, 0
      %v505 = vadd.s32 %v497, %v504
      %v506 = vsel %vm453, %v449, 0
      %v507 = vadd.s32 %v499, %v506
      %v508 = vsel %vm453, %v450, 0
      %v509 = vadd.s32 %v501, %v508
      %v510 = vsel %vm453, %v451, 0
      %v511 = vadd.s32 %v503, %v510
      %v512 = vsel %vm453, %v452, 0
      %v513 = vadd.s32 %v505, %v512
      %v514 = vadd.s32 %v507, %v509
      %v515 = vadd.s32 %v511, %v513
      %v516 = vadd.s32 %v514, %v515
      %v517 = vand.u32 %v516, 65535
      %v518 = vshrl.u32 %v516, 16
      %v519 = vcvt.s32.f32 %v517
      %v520 = vcvt.s32.f32 %v518
      %521 = vadd.xlane.f32.xlu0 %v519
      %v522 = vpop.xlane.xlu0 %521
      %523 = vadd.xlane.f32.xlu0 %v520
      %v524 = vpop.xlane.xlu0 %523
      %v525 = vcvt.f32.s32 %v522
      %v526 = vcvt.f32.s32 %v524
      %v527 = vshll.u32 %v526, 16
      %v528 = vadd.s32 %v527, %v525
      %v529 = vrot.slane %v528, 4
      %v530 = vadd.s32 %v528, %v529
      %v531 = vrot.slane %v530, 2
      %v532 = vadd.s32 %v530, %v531
      %v533 = vrot.slane %v532, 1
      %v534 = vadd.s32 %v532, %v533
      %s535 = vtos %v534
      %s536 = smul.u32 %s535, 3
      %vm537 = vcmask 64512
      %v538 = vsel %vm537, %v325, -inf
      %539 = vmax.xlane.f32.xlu0 %v538
      %v540 = vpop.xlane.xlu0 %539
      %v541 = vsel %vm537, %v326, -inf
      %542 = vmax.xlane.f32.xlu0 %v541
      %v543 = vpop.xlane.xlu0 %542
      %v544 = vsel %vm537, %v327, -inf
      %545 = vmax.xlane.f32.xlu0 %v544
      %v546 = vpop.xlane.xlu0 %545
      %v547 = vsel %vm537, %v328, -inf
      %548 = vmax.xlane.f32.xlu0 %v547
      %v549 = vpop.xlane.xlu0 %548
      %v550 = vsel %vm537, %v329, -inf
      %551 = vmax.xlane.f32.xlu0 %v550
      %v552 = vpop.xlane.xlu0 %551
      %v553 = vsel %vm537, %v330, -inf
      %554 = vmax.xlane.f32.xlu0 %v553
      %v555 = vpop.xlane.xlu0 %554
      %v556 = vsel %vm537, %v331, -inf
      %557 = vmax.xlane.f32.xlu0 %v556
      %v558 = vpop.xlane.xlu0 %557
      %v559 = vsel %vm537, %v332, -inf
      %560 = vmax.xlane.f32.xlu0 %v559
      %v561 = vpop.xlane.xlu0 %560
      %v562 = vsel %vm537, %v333, -inf
      %563 = vmax.xlane.f32.xlu0 %v562
      %v564 = vpop.xlane.xlu0 %563
      %v565 = vsel %vm537, %v334, -inf
      %566 = vmax.xlane.f32.xlu0 %v565
      %v567 = vpop.xlane.xlu0 %566
      %v568 = vsel %vm537, %v335, -inf
      %569 = vmax.xlane.f32.xlu0 %v568
      %v570 = vpop.xlane.xlu0 %569
      %v571 = vsel %vm537, %v336, -inf
      %572 = vmax.xlane.f32.xlu0 %v571
      %v573 = vpop.xlane.xlu0 %572
      %v574 = vsel %vm537, %v337, -inf
      %575 = vmax.xlane.f32.xlu0 %v574
      %v576 = vpop.xlane.xlu0 %575
      %v577 = vsel %vm537, %v338, -inf
      %578 = vmax.xlane.f32.xlu0 %v577
      %v579 = vpop.xlane.xlu0 %578
      %v580 = vsel %vm537, %v339, -inf
      %581 = vmax.xlane.f32.xlu0 %v580
      %v582 = vpop.xlane.xlu0 %581
      %v583 = vsel %vm537, %v340, -inf
      %584 = vmax.xlane.f32.xlu0 %v583
      %v585 = vpop.xlane.xlu0 %584
      %v586 = vsel %vm537, %v341, -inf
      %587 = vmax.xlane.f32.xlu0 %v586
      %v588 = vpop.xlane.xlu0 %587
      %v589 = vsel %vm537, %v342, -inf
      %590 = vmax.xlane.f32.xlu0 %v589
      %v591 = vpop.xlane.xlu0 %590
      %v592 = vsel %vm537, %v343, -inf
      %593 = vmax.xlane.f32.xlu0 %v592
      %v594 = vpop.xlane.xlu0 %593
      %v595 = vsel %vm537, %v344, -inf
      %596 = vmax.xlane.f32.xlu0 %v595
      %v597 = vpop.xlane.xlu0 %596
      %v598 = vsel %vm537, %v345, -inf
      %599 = vmax.xlane.f32.xlu0 %v598
      %v600 = vpop.xlane.xlu0 %599
      %v601 = vsel %vm537, %v346, -inf
      %602 = vmax.xlane.f32.xlu0 %v601
      %v603 = vpop.xlane.xlu0 %602
      %v604 = vsel %vm537, %v347, -inf
      %605 = vmax.xlane.f32.xlu0 %v604
      %v606 = vpop.xlane.xlu0 %605
      %v607 = vsel %vm537, %v348, -inf
      %608 = vmax.xlane.f32.xlu0 %v607
      %v609 = vpop.xlane.xlu0 %608
      %v610 = vsel %vm537, %v349, -inf
      %611 = vmax.xlane.f32.xlu0 %v610
      %v612 = vpop.xlane.xlu0 %611
      %v613 = vsel %vm537, %v350, -inf
      %614 = vmax.xlane.f32.xlu0 %v613
      %v615 = vpop.xlane.xlu0 %614
      %v616 = vsel %vm537, %v351, -inf
      %617 = vmax.xlane.f32.xlu0 %v616
      %v618 = vpop.xlane.xlu0 %617
      %v619 = vsel %vm537, %v352, -inf
      %620 = vmax.xlane.f32.xlu0 %v619
      %v621 = vpop.xlane.xlu0 %620
      %v622 = vsel %vm537, %v353, -inf
      %623 = vmax.xlane.f32.xlu0 %v622
      %v624 = vpop.xlane.xlu0 %623
      %v625 = vsel %vm537, %v354, -inf
      %626 = vmax.xlane.f32.xlu0 %v625
      %v627 = vpop.xlane.xlu0 %626
      %v628 = vsel %vm537, %v355, -inf
      %629 = vmax.xlane.f32.xlu0 %v628
      %v630 = vpop.xlane.xlu0 %629
      %v631 = vsel %vm537, %v356, -inf
      %632 = vmax.xlane.f32.xlu0 %v631
      %v633 = vpop.xlane.xlu0 %632
      %v634 = vsub.f32 %v325, %v540
      %v635 = vsub.f32 %v326, %v543
      %v636 = vsub.f32 %v327, %v546
      %v637 = vsub.f32 %v328, %v549
      %v638 = vsub.f32 %v329, %v552
      %v639 = vsub.f32 %v330, %v555
      %v640 = vsub.f32 %v331, %v558
      %v641 = vsub.f32 %v332, %v561
      %v642 = vsub.f32 %v333, %v564
      %v643 = vsub.f32 %v334, %v567
      %v644 = vsub.f32 %v335, %v570
      %v645 = vsub.f32 %v336, %v573
      %v646 = vsub.f32 %v337, %v576
      %v647 = vsub.f32 %v338, %v579
      %v648 = vsub.f32 %v339, %v582
      %v649 = vsub.f32 %v340, %v585
      %v650 = vsub.f32 %v341, %v588
      %v651 = vsub.f32 %v342, %v591
      %v652 = vsub.f32 %v343, %v594
      %v653 = vsub.f32 %v344, %v597
      %v654 = vsub.f32 %v345, %v600
      %v655 = vsub.f32 %v346, %v603
      %v656 = vsub.f32 %v347, %v606
      %v657 = vsub.f32 %v348, %v609
      %v658 = vsub.f32 %v349, %v612
      %v659 = vsub.f32 %v350, %v615
      %v660 = vsub.f32 %v351, %v618
      %v661 = vsub.f32 %v352, %v621
      %v662 = vsub.f32 %v353, %v624
      %v663 = vsub.f32 %v354, %v627
      %v664 = vsub.f32 %v355, %v630
      %v665 = vsub.f32 %v356, %v633
      %v666 = vmul.f32 %v634, 1.442695
      %v667 = vpow.pop %v666
      %v668 = vmul.f32 %v635, 1.442695
      %v669 = vpow.pop %v668
      %v670 = vmul.f32 %v636, 1.442695
      %v671 = vpow.pop %v670
      %v672 = vmul.f32 %v637, 1.442695
      %v673 = vpow.pop %v672
      %v674 = vmul.f32 %v638, 1.442695
      %v675 = vpow.pop %v674
      %v676 = vmul.f32 %v639, 1.442695
      %v677 = vpow.pop %v676
      %v678 = vmul.f32 %v640, 1.442695
      %v679 = vpow.pop %v678
      %v680 = vmul.f32 %v641, 1.442695
      %v681 = vpow.pop %v680
      %v682 = vmul.f32 %v642, 1.442695
      %v683 = vpow.pop %v682
      %v684 = vmul.f32 %v643, 1.442695
      %v685 = vpow.pop %v684
      %v686 = vmul.f32 %v644, 1.442695
      %v687 = vpow.pop %v686
      %v688 = vmul.f32 %v645, 1.442695
      %v689 = vpow.pop %v688
      %v690 = vmul.f32 %v646, 1.442695
      %v691 = vpow.pop %v690
      %v692 = vmul.f32 %v647, 1.442695
      %v693 = vpow.pop %v692
      %v694 = vmul.f32 %v648, 1.442695
      %v695 = vpow.pop %v694
      %v696 = vmul.f32 %v649, 1.442695
      %v697 = vpow.pop %v696
      %v698 = vmul.f32 %v650, 1.442695
      %v699 = vpow.pop %v698
      %v700 = vmul.f32 %v651, 1.442695
      %v701 = vpow.pop %v700
      %v702 = vmul.f32 %v652, 1.442695
      %v703 = vpow.pop %v702
      %v704 = vmul.f32 %v653, 1.442695
      %v705 = vpow.pop %v704
      %v706 = vmul.f32 %v654, 1.442695
      %v707 = vpow.pop %v706
      %v708 = vmul.f32 %v655, 1.442695
      %v709 = vpow.pop %v708
      %v710 = vmul.f32 %v656, 1.442695
      %v711 = vpow.pop %v710
      %v712 = vmul.f32 %v657, 1.442695
      %v713 = vpow.pop %v712
      %v714 = vmul.f32 %v658, 1.442695
      %v715 = vpow.pop %v714
      %v716 = vmul.f32 %v659, 1.442695
      %v717 = vpow.pop %v716
      %v718 = vmul.f32 %v660, 1.442695
      %v719 = vpow.pop %v718
      %v720 = vmul.f32 %v661, 1.442695
      %v721 = vpow.pop %v720
      %v722 = vmul.f32 %v662, 1.442695
      %v723 = vpow.pop %v722
      %v724 = vmul.f32 %v663, 1.442695
      %v725 = vpow.pop %v724
      %v726 = vmul.f32 %v664, 1.442695
      %v727 = vpow.pop %v726
      %v728 = vmul.f32 %v665, 1.442695
      %v729 = vpow.pop %v728
      %v730 = vsel %vm537, %v667, 0.0
      %731 = vadd.xlane.f32.xlu0 %v730
      %v732 = vpop.xlane.xlu0 %731
      %v733 = vsel %vm537, %v669, 0.0
      %734 = vadd.xlane.f32.xlu0 %v733
      %v735 = vpop.xlane.xlu0 %734
      %v736 = vsel %vm537, %v671, 0.0
      %737 = vadd.xlane.f32.xlu0 %v736
      %v738 = vpop.xlane.xlu0 %737
      %v739 = vsel %vm537, %v673, 0.0
      %740 = vadd.xlane.f32.xlu0 %v739
      %v741 = vpop.xlane.xlu0 %740
      %v742 = vsel %vm537, %v675, 0.0
      %743 = vadd.xlane.f32.xlu0 %v742
      %v744 = vpop.xlane.xlu0 %743
      %v745 = vsel %vm537, %v677, 0.0
      %746 = vadd.xlane.f32.xlu0 %v745
      %v747 = vpop.xlane.xlu0 %746
      %v748 = vsel %vm537, %v679, 0.0
      %749 = vadd.xlane.f32.xlu0 %v748
      %v750 = vpop.xlane.xlu0 %749
      %v751 = vsel %vm537, %v681, 0.0
      %752 = vadd.xlane.f32.xlu0 %v751
      %v753 = vpop.xlane.xlu0 %752
      %v754 = vsel %vm537, %v683, 0.0
      %755 = vadd.xlane.f32.xlu0 %v754
      %v756 = vpop.xlane.xlu0 %755
      %v757 = vsel %vm537, %v685, 0.0
      %758 = vadd.xlane.f32.xlu0 %v757
      %v759 = vpop.xlane.xlu0 %758
      %v760 = vsel %vm537, %v687, 0.0
      %761 = vadd.xlane.f32.xlu0 %v760
      %v762 = vpop.xlane.xlu0 %761
      %v763 = vsel %vm537, %v689, 0.0
      %764 = vadd.xlane.f32.xlu0 %v763
      %v765 = vpop.xlane.xlu0 %764
      %v766 = vsel %vm537, %v691, 0.0
      %767 = vadd.xlane.f32.xlu0 %v766
      %v768 = vpop.xlane.xlu0 %767
      %v769 = vsel %vm537, %v693, 0.0
      %770 = vadd.xlane.f32.xlu0 %v769
      %v771 = vpop.xlane.xlu0 %770
      %v772 = vsel %vm537, %v695, 0.0
      %773 = vadd.xlane.f32.xlu0 %v772
      %v774 = vpop.xlane.xlu0 %773
      %v775 = vsel %vm537, %v697, 0.0
      %776 = vadd.xlane.f32.xlu0 %v775
      %v777 = vpop.xlane.xlu0 %776
      %v778 = vsel %vm537, %v699, 0.0
      %779 = vadd.xlane.f32.xlu0 %v778
      %v780 = vpop.xlane.xlu0 %779
      %v781 = vsel %vm537, %v701, 0.0
      %782 = vadd.xlane.f32.xlu0 %v781
      %v783 = vpop.xlane.xlu0 %782
      %v784 = vsel %vm537, %v703, 0.0
      %785 = vadd.xlane.f32.xlu0 %v784
      %v786 = vpop.xlane.xlu0 %785
      %v787 = vsel %vm537, %v705, 0.0
      %788 = vadd.xlane.f32.xlu0 %v787
      %v789 = vpop.xlane.xlu0 %788
      %v790 = vsel %vm537, %v707, 0.0
      %791 = vadd.xlane.f32.xlu0 %v790
      %v792 = vpop.xlane.xlu0 %791
      %v793 = vsel %vm537, %v709, 0.0
      %794 = vadd.xlane.f32.xlu0 %v793
      %v795 = vpop.xlane.xlu0 %794
      %v796 = vsel %vm537, %v711, 0.0
      %797 = vadd.xlane.f32.xlu0 %v796
      %v798 = vpop.xlane.xlu0 %797
      %v799 = vsel %vm537, %v713, 0.0
      %800 = vadd.xlane.f32.xlu0 %v799
      %v801 = vpop.xlane.xlu0 %800
      %v802 = vsel %vm537, %v715, 0.0
      %803 = vadd.xlane.f32.xlu0 %v802
      %v804 = vpop.xlane.xlu0 %803
      %v805 = vsel %vm537, %v717, 0.0
      %806 = vadd.xlane.f32.xlu0 %v805
      %v807 = vpop.xlane.xlu0 %806
      %v808 = vsel %vm537, %v719, 0.0
      %809 = vadd.xlane.f32.xlu0 %v808
      %v810 = vpop.xlane.xlu0 %809
      %v811 = vsel %vm537, %v721, 0.0
      %812 = vadd.xlane.f32.xlu0 %v811
      %v813 = vpop.xlane.xlu0 %812
      %v814 = vsel %vm537, %v723, 0.0
      %815 = vadd.xlane.f32.xlu0 %v814
      %v816 = vpop.xlane.xlu0 %815
      %v817 = vsel %vm537, %v725, 0.0
      %818 = vadd.xlane.f32.xlu0 %v817
      %v819 = vpop.xlane.xlu0 %818
      %v820 = vsel %vm537, %v727, 0.0
      %821 = vadd.xlane.f32.xlu0 %v820
      %v822 = vpop.xlane.xlu0 %821
      %v823 = vsel %vm537, %v729, 0.0
      %824 = vadd.xlane.f32.xlu0 %v823
      %v825 = vpop.xlane.xlu0 %824
      %v826 = vlog2.pop %v732
      %v827 = vmul.f32 %v826, 0.6931472
      %v828 = vlog2.pop %v735
      %v829 = vmul.f32 %v828, 0.6931472
      %v830 = vlog2.pop %v738
      %v831 = vmul.f32 %v830, 0.6931472
      %v832 = vlog2.pop %v741
      %v833 = vmul.f32 %v832, 0.6931472
      %v834 = vlog2.pop %v744
      %v835 = vmul.f32 %v834, 0.6931472
      %v836 = vlog2.pop %v747
      %v837 = vmul.f32 %v836, 0.6931472
      %v838 = vlog2.pop %v750
      %v839 = vmul.f32 %v838, 0.6931472
      %v840 = vlog2.pop %v753
      %v841 = vmul.f32 %v840, 0.6931472
      %v842 = vlog2.pop %v756
      %v843 = vmul.f32 %v842, 0.6931472
      %v844 = vlog2.pop %v759
      %v845 = vmul.f32 %v844, 0.6931472
      %v846 = vlog2.pop %v762
      %v847 = vmul.f32 %v846, 0.6931472
      %v848 = vlog2.pop %v765
      %v849 = vmul.f32 %v848, 0.6931472
      %v850 = vlog2.pop %v768
      %v851 = vmul.f32 %v850, 0.6931472
      %v852 = vlog2.pop %v771
      %v853 = vmul.f32 %v852, 0.6931472
      %v854 = vlog2.pop %v774
      %v855 = vmul.f32 %v854, 0.6931472
      %v856 = vlog2.pop %v777
      %v857 = vmul.f32 %v856, 0.6931472
      %v858 = vlog2.pop %v780
      %v859 = vmul.f32 %v858, 0.6931472
      %v860 = vlog2.pop %v783
      %v861 = vmul.f32 %v860, 0.6931472
      %v862 = vlog2.pop %v786
      %v863 = vmul.f32 %v862, 0.6931472
      %v864 = vlog2.pop %v789
      %v865 = vmul.f32 %v864, 0.6931472
      %v866 = vlog2.pop %v792
      %v867 = vmul.f32 %v866, 0.6931472
      %v868 = vlog2.pop %v795
      %v869 = vmul.f32 %v868, 0.6931472
      %v870 = vlog2.pop %v798
      %v871 = vmul.f32 %v870, 0.6931472
      %v872 = vlog2.pop %v801
      %v873 = vmul.f32 %v872, 0.6931472
      %v874 = vlog2.pop %v804
      %v875 = vmul.f32 %v874, 0.6931472
      %v876 = vlog2.pop %v807
      %v877 = vmul.f32 %v876, 0.6931472
      %v878 = vlog2.pop %v810
      %v879 = vmul.f32 %v878, 0.6931472
      %v880 = vlog2.pop %v813
      %v881 = vmul.f32 %v880, 0.6931472
      %v882 = vlog2.pop %v816
      %v883 = vmul.f32 %v882, 0.6931472
      %v884 = vlog2.pop %v819
      %v885 = vmul.f32 %v884, 0.6931472
      %v886 = vlog2.pop %v822
      %v887 = vmul.f32 %v886, 0.6931472
      %v888 = vlog2.pop %v825
      %v889 = vmul.f32 %v888, 0.6931472
      %v890 = vsub.f32 %v827, %v634
      %v891 = vsub.f32 %v829, %v635
      %v892 = vsub.f32 %v831, %v636
      %v893 = vsub.f32 %v833, %v637
      %v894 = vsub.f32 %v835, %v638
      %v895 = vsub.f32 %v837, %v639
      %v896 = vsub.f32 %v839, %v640
      %v897 = vsub.f32 %v841, %v641
      %v898 = vsub.f32 %v843, %v642
      %v899 = vsub.f32 %v845, %v643
      %v900 = vsub.f32 %v847, %v644
      %v901 = vsub.f32 %v849, %v645
      %v902 = vsub.f32 %v851, %v646
      %v903 = vsub.f32 %v853, %v647
      %v904 = vsub.f32 %v855, %v648
      %v905 = vsub.f32 %v857, %v649
      %v906 = vsub.f32 %v859, %v650
      %v907 = vsub.f32 %v861, %v651
      %v908 = vsub.f32 %v863, %v652
      %v909 = vsub.f32 %v865, %v653
      %v910 = vsub.f32 %v867, %v654
      %v911 = vsub.f32 %v869, %v655
      %v912 = vsub.f32 %v871, %v656
      %v913 = vsub.f32 %v873, %v657
      %v914 = vsub.f32 %v875, %v658
      %v915 = vsub.f32 %v877, %v659
      %v916 = vsub.f32 %v879, %v660
      %v917 = vsub.f32 %v881, %v661
      %v918 = vsub.f32 %v883, %v662
      %v919 = vsub.f32 %v885, %v663
      %v920 = vsub.f32 %v887, %v664
      %v921 = vsub.f32 %v889, %v665
      %v922 = vlaneseq
      %v923 = vand.u32 %v922, 127
      %924 = vset.pattern.permute.xlu0 0
      %925 = vperm.xlu0 %924, %v357
      %v926 = vpop.permute.xlu0 %925
      %927 = vset.pattern.permute.xlu0 0
      %928 = vperm.xlu0 %927, %v358
      %v929 = vpop.permute.xlu0 %928
      %930 = vset.pattern.permute.xlu0 0
      %931 = vperm.xlu0 %930, %v359
      %v932 = vpop.permute.xlu0 %931
      %933 = vset.pattern.permute.xlu0 0
      %934 = vperm.xlu0 %933, %v360
      %v935 = vpop.permute.xlu0 %934
      %936 = vset.pattern.permute.xlu0 0
      %937 = vperm.xlu0 %936, %v361
      %v938 = vpop.permute.xlu0 %937
      %939 = vset.pattern.permute.xlu0 0
      %940 = vperm.xlu0 %939, %v362
      %v941 = vpop.permute.xlu0 %940
      %942 = vset.pattern.permute.xlu0 0
      %943 = vperm.xlu0 %942, %v363
      %v944 = vpop.permute.xlu0 %943
      %945 = vset.pattern.permute.xlu0 0
      %946 = vperm.xlu0 %945, %v364
      %v947 = vpop.permute.xlu0 %946
      %948 = vset.pattern.permute.xlu0 0
      %949 = vperm.xlu0 %948, %v365
      %v950 = vpop.permute.xlu0 %949
      %951 = vset.pattern.permute.xlu0 0
      %952 = vperm.xlu0 %951, %v366
      %v953 = vpop.permute.xlu0 %952
      %954 = vset.pattern.permute.xlu0 0
      %955 = vperm.xlu0 %954, %v367
      %v956 = vpop.permute.xlu0 %955
      %957 = vset.pattern.permute.xlu0 0
      %958 = vperm.xlu0 %957, %v368
      %v959 = vpop.permute.xlu0 %958
      %960 = vset.pattern.permute.xlu0 0
      %961 = vperm.xlu0 %960, %v369
      %v962 = vpop.permute.xlu0 %961
      %963 = vset.pattern.permute.xlu0 0
      %964 = vperm.xlu0 %963, %v370
      %v965 = vpop.permute.xlu0 %964
      %966 = vset.pattern.permute.xlu0 0
      %967 = vperm.xlu0 %966, %v371
      %v968 = vpop.permute.xlu0 %967
      %969 = vset.pattern.permute.xlu0 0
      %970 = vperm.xlu0 %969, %v372
      %v971 = vpop.permute.xlu0 %970
      %972 = vset.pattern.permute.xlu0 0
      %973 = vperm.xlu0 %972, %v373
      %v974 = vpop.permute.xlu0 %973
      %975 = vset.pattern.permute.xlu0 0
      %976 = vperm.xlu0 %975, %v374
      %v977 = vpop.permute.xlu0 %976
      %978 = vset.pattern.permute.xlu0 0
      %979 = vperm.xlu0 %978, %v375
      %v980 = vpop.permute.xlu0 %979
      %981 = vset.pattern.permute.xlu0 0
      %982 = vperm.xlu0 %981, %v376
      %v983 = vpop.permute.xlu0 %982
      %984 = vset.pattern.permute.xlu0 0
      %985 = vperm.xlu0 %984, %v377
      %v986 = vpop.permute.xlu0 %985
      %987 = vset.pattern.permute.xlu0 0
      %988 = vperm.xlu0 %987, %v378
      %v989 = vpop.permute.xlu0 %988
      %990 = vset.pattern.permute.xlu0 0
      %991 = vperm.xlu0 %990, %v379
      %v992 = vpop.permute.xlu0 %991
      %993 = vset.pattern.permute.xlu0 0
      %994 = vperm.xlu0 %993, %v380
      %v995 = vpop.permute.xlu0 %994
      %996 = vset.pattern.permute.xlu0 0
      %997 = vperm.xlu0 %996, %v381
      %v998 = vpop.permute.xlu0 %997
      %999 = vset.pattern.permute.xlu0 0
      %1000 = vperm.xlu0 %999, %v382
      %v1001 = vpop.permute.xlu0 %1000
      %1002 = vset.pattern.permute.xlu0 0
      %1003 = vperm.xlu0 %1002, %v383
      %v1004 = vpop.permute.xlu0 %1003
      %1005 = vset.pattern.permute.xlu0 0
      %1006 = vperm.xlu0 %1005, %v384
      %v1007 = vpop.permute.xlu0 %1006
      %1008 = vset.pattern.permute.xlu0 0
      %1009 = vperm.xlu0 %1008, %v385
      %v1010 = vpop.permute.xlu0 %1009
      %1011 = vset.pattern.permute.xlu0 0
      %1012 = vperm.xlu0 %1011, %v386
      %v1013 = vpop.permute.xlu0 %1012
      %1014 = vset.pattern.permute.xlu0 0
      %1015 = vperm.xlu0 %1014, %v387
      %v1016 = vpop.permute.xlu0 %1015
      %1017 = vset.pattern.permute.xlu0 0
      %1018 = vperm.xlu0 %1017, %v388
      %v1019 = vpop.permute.xlu0 %1018
      %vm1020 = vcmp.eq.s32.totalorder %v923, %v926
      %vm1021 = vcmp.eq.s32.totalorder %v923, %v929
      %vm1022 = vcmp.eq.s32.totalorder %v923, %v932
      %vm1023 = vcmp.eq.s32.totalorder %v923, %v935
      %vm1024 = vcmp.eq.s32.totalorder %v923, %v938
      %vm1025 = vcmp.eq.s32.totalorder %v923, %v941
      %vm1026 = vcmp.eq.s32.totalorder %v923, %v944
      %vm1027 = vcmp.eq.s32.totalorder %v923, %v947
      %vm1028 = vcmp.eq.s32.totalorder %v923, %v950
      %vm1029 = vcmp.eq.s32.totalorder %v923, %v953
      %vm1030 = vcmp.eq.s32.totalorder %v923, %v956
      %vm1031 = vcmp.eq.s32.totalorder %v923, %v959
      %vm1032 = vcmp.eq.s32.totalorder %v923, %v962
      %vm1033 = vcmp.eq.s32.totalorder %v923, %v965
      %vm1034 = vcmp.eq.s32.totalorder %v923, %v968
      %vm1035 = vcmp.eq.s32.totalorder %v923, %v971
      %vm1036 = vcmp.eq.s32.totalorder %v923, %v974
      %vm1037 = vcmp.eq.s32.totalorder %v923, %v977
      %vm1038 = vcmp.eq.s32.totalorder %v923, %v980
      %vm1039 = vcmp.eq.s32.totalorder %v923, %v983
      %vm1040 = vcmp.eq.s32.totalorder %v923, %v986
      %vm1041 = vcmp.eq.s32.totalorder %v923, %v989
      %vm1042 = vcmp.eq.s32.totalorder %v923, %v992
      %vm1043 = vcmp.eq.s32.totalorder %v923, %v995
      %vm1044 = vcmp.eq.s32.totalorder %v923, %v998
      %vm1045 = vcmp.eq.s32.totalorder %v923, %v1001
      %vm1046 = vcmp.eq.s32.totalorder %v923, %v1004
      %vm1047 = vcmp.eq.s32.totalorder %v923, %v1007
      %vm1048 = vcmp.eq.s32.totalorder %v923, %v1010
      %vm1049 = vcmp.eq.s32.totalorder %v923, %v1013
      %vm1050 = vcmp.eq.s32.totalorder %v923, %v1016
      %vm1051 = vcmp.eq.s32.totalorder %v923, %v1019
      %v1052 = vsel %vm1020, %v634, 0.0
      %v1053 = vsel %vm1021, %v635, 0.0
      %v1054 = vsel %vm1022, %v636, 0.0
      %v1055 = vsel %vm1023, %v637, 0.0
      %v1056 = vsel %vm1024, %v638, 0.0
      %v1057 = vsel %vm1025, %v639, 0.0
      %v1058 = vsel %vm1026, %v640, 0.0
      %v1059 = vsel %vm1027, %v641, 0.0
      %v1060 = vsel %vm1028, %v642, 0.0
      %v1061 = vsel %vm1029, %v643, 0.0
      %v1062 = vsel %vm1030, %v644, 0.0
      %v1063 = vsel %vm1031, %v645, 0.0
      %v1064 = vsel %vm1032, %v646, 0.0
      %v1065 = vsel %vm1033, %v647, 0.0
      %v1066 = vsel %vm1034, %v648, 0.0
      %v1067 = vsel %vm1035, %v649, 0.0
      %v1068 = vsel %vm1036, %v650, 0.0
      %v1069 = vsel %vm1037, %v651, 0.0
      %v1070 = vsel %vm1038, %v652, 0.0
      %v1071 = vsel %vm1039, %v653, 0.0
      %v1072 = vsel %vm1040, %v654, 0.0
      %v1073 = vsel %vm1041, %v655, 0.0
      %v1074 = vsel %vm1042, %v656, 0.0
      %v1075 = vsel %vm1043, %v657, 0.0
      %v1076 = vsel %vm1044, %v658, 0.0
      %v1077 = vsel %vm1045, %v659, 0.0
      %v1078 = vsel %vm1046, %v660, 0.0
      %v1079 = vsel %vm1047, %v661, 0.0
      %v1080 = vsel %vm1048, %v662, 0.0
      %v1081 = vsel %vm1049, %v663, 0.0
      %v1082 = vsel %vm1050, %v664, 0.0
      %v1083 = vsel %vm1051, %v665, 0.0
      %v1084 = vsel %vm537, %v1052, 0.0
      %1085 = vadd.xlane.f32.xlu0 %v1084
      %v1086 = vpop.xlane.xlu0 %1085
      %v1087 = vsel %vm537, %v1053, 0.0
      %1088 = vadd.xlane.f32.xlu0 %v1087
      %v1089 = vpop.xlane.xlu0 %1088
      %v1090 = vsel %vm537, %v1054, 0.0
      %1091 = vadd.xlane.f32.xlu0 %v1090
      %v1092 = vpop.xlane.xlu0 %1091
      %v1093 = vsel %vm537, %v1055, 0.0
      %1094 = vadd.xlane.f32.xlu0 %v1093
      %v1095 = vpop.xlane.xlu0 %1094
      %v1096 = vsel %vm537, %v1056, 0.0
      %1097 = vadd.xlane.f32.xlu0 %v1096
      %v1098 = vpop.xlane.xlu0 %1097
      %v1099 = vsel %vm537, %v1057, 0.0
      %1100 = vadd.xlane.f32.xlu0 %v1099
      %v1101 = vpop.xlane.xlu0 %1100
      %v1102 = vsel %vm537, %v1058, 0.0
      %1103 = vadd.xlane.f32.xlu0 %v1102
      %v1104 = vpop.xlane.xlu0 %1103
      %v1105 = vsel %vm537, %v1059, 0.0
      %1106 = vadd.xlane.f32.xlu0 %v1105
      %v1107 = vpop.xlane.xlu0 %1106
      %v1108 = vsel %vm537, %v1060, 0.0
      %1109 = vadd.xlane.f32.xlu0 %v1108
      %v1110 = vpop.xlane.xlu0 %1109
      %v1111 = vsel %vm537, %v1061, 0.0
      %1112 = vadd.xlane.f32.xlu0 %v1111
      %v1113 = vpop.xlane.xlu0 %1112
      %v1114 = vsel %vm537, %v1062, 0.0
      %1115 = vadd.xlane.f32.xlu0 %v1114
      %v1116 = vpop.xlane.xlu0 %1115
      %v1117 = vsel %vm537, %v1063, 0.0
      %1118 = vadd.xlane.f32.xlu0 %v1117
      %v1119 = vpop.xlane.xlu0 %1118
      %v1120 = vsel %vm537, %v1064, 0.0
      %1121 = vadd.xlane.f32.xlu0 %v1120
      %v1122 = vpop.xlane.xlu0 %1121
      %v1123 = vsel %vm537, %v1065, 0.0
      %1124 = vadd.xlane.f32.xlu0 %v1123
      %v1125 = vpop.xlane.xlu0 %1124
      %v1126 = vsel %vm537, %v1066, 0.0
      %1127 = vadd.xlane.f32.xlu0 %v1126
      %v1128 = vpop.xlane.xlu0 %1127
      %v1129 = vsel %vm537, %v1067, 0.0
      %1130 = vadd.xlane.f32.xlu0 %v1129
      %v1131 = vpop.xlane.xlu0 %1130
      %v1132 = vsel %vm537, %v1068, 0.0
      %1133 = vadd.xlane.f32.xlu0 %v1132
      %v1134 = vpop.xlane.xlu0 %1133
      %v1135 = vsel %vm537, %v1069, 0.0
      %1136 = vadd.xlane.f32.xlu0 %v1135
      %v1137 = vpop.xlane.xlu0 %1136
      %v1138 = vsel %vm537, %v1070, 0.0
      %1139 = vadd.xlane.f32.xlu0 %v1138
      %v1140 = vpop.xlane.xlu0 %1139
      %v1141 = vsel %vm537, %v1071, 0.0
      %1142 = vadd.xlane.f32.xlu0 %v1141
      %v1143 = vpop.xlane.xlu0 %1142
      %v1144 = vsel %vm537, %v1072, 0.0
      %1145 = vadd.xlane.f32.xlu0 %v1144
      %v1146 = vpop.xlane.xlu0 %1145
      %v1147 = vsel %vm537, %v1073, 0.0
      %1148 = vadd.xlane.f32.xlu0 %v1147
      %v1149 = vpop.xlane.xlu0 %1148
      %v1150 = vsel %vm537, %v1074, 0.0
      %1151 = vadd.xlane.f32.xlu0 %v1150
      %v1152 = vpop.xlane.xlu0 %1151
      %v1153 = vsel %vm537, %v1075, 0.0
      %1154 = vadd.xlane.f32.xlu0 %v1153
      %v1155 = vpop.xlane.xlu0 %1154
      %v1156 = vsel %vm537, %v1076, 0.0
      %1157 = vadd.xlane.f32.xlu0 %v1156
      %v1158 = vpop.xlane.xlu0 %1157
      %v1159 = vsel %vm537, %v1077, 0.0
      %1160 = vadd.xlane.f32.xlu0 %v1159
      %v1161 = vpop.xlane.xlu0 %1160
      %v1162 = vsel %vm537, %v1078, 0.0
      %1163 = vadd.xlane.f32.xlu0 %v1162
      %v1164 = vpop.xlane.xlu0 %1163
      %v1165 = vsel %vm537, %v1079, 0.0
      %1166 = vadd.xlane.f32.xlu0 %v1165
      %v1167 = vpop.xlane.xlu0 %1166
      %v1168 = vsel %vm537, %v1080, 0.0
      %1169 = vadd.xlane.f32.xlu0 %v1168
      %v1170 = vpop.xlane.xlu0 %1169
      %v1171 = vsel %vm537, %v1081, 0.0
      %1172 = vadd.xlane.f32.xlu0 %v1171
      %v1173 = vpop.xlane.xlu0 %1172
      %v1174 = vsel %vm537, %v1082, 0.0
      %1175 = vadd.xlane.f32.xlu0 %v1174
      %v1176 = vpop.xlane.xlu0 %1175
      %v1177 = vsel %vm537, %v1083, 0.0
      %1178 = vadd.xlane.f32.xlu0 %v1177
      %v1179 = vpop.xlane.xlu0 %1178
      %v1180 = vsub.f32 %v827, %v1086
      %v1181 = vsub.f32 %v829, %v1089
      %v1182 = vsub.f32 %v831, %v1092
      %v1183 = vsub.f32 %v833, %v1095
      %v1184 = vsub.f32 %v835, %v1098
      %v1185 = vsub.f32 %v837, %v1101
      %v1186 = vsub.f32 %v839, %v1104
      %v1187 = vsub.f32 %v841, %v1107
      %v1188 = vsub.f32 %v843, %v1110
      %v1189 = vsub.f32 %v845, %v1113
      %v1190 = vsub.f32 %v847, %v1116
      %v1191 = vsub.f32 %v849, %v1119
      %v1192 = vsub.f32 %v851, %v1122
      %v1193 = vsub.f32 %v853, %v1125
      %v1194 = vsub.f32 %v855, %v1128
      %v1195 = vsub.f32 %v857, %v1131
      %v1196 = vsub.f32 %v859, %v1134
      %v1197 = vsub.f32 %v861, %v1137
      %v1198 = vsub.f32 %v863, %v1140
      %v1199 = vsub.f32 %v865, %v1143
      %v1200 = vsub.f32 %v867, %v1146
      %v1201 = vsub.f32 %v869, %v1149
      %v1202 = vsub.f32 %v871, %v1152
      %v1203 = vsub.f32 %v873, %v1155
      %v1204 = vsub.f32 %v875, %v1158
      %v1205 = vsub.f32 %v877, %v1161
      %v1206 = vsub.f32 %v879, %v1164
      %v1207 = vsub.f32 %v881, %v1167
      %v1208 = vsub.f32 %v883, %v1170
      %v1209 = vsub.f32 %v885, %v1173
      %v1210 = vsub.f32 %v887, %v1176
      %v1211 = vsub.f32 %v889, %v1179
      %v1212 = vsel %vm389, -1.0, %v890
      %v1213 = vsel %vm390, -1.0, %v891
      %v1214 = vsel %vm391, -1.0, %v892
      %v1215 = vsel %vm392, -1.0, %v893
      %v1216 = vsel %vm393, -1.0, %v894
      %v1217 = vsel %vm394, -1.0, %v895
      %v1218 = vsel %vm395, -1.0, %v896
      %v1219 = vsel %vm396, -1.0, %v897
      %v1220 = vsel %vm397, -1.0, %v898
      %v1221 = vsel %vm398, -1.0, %v899
      %v1222 = vsel %vm399, -1.0, %v900
      %v1223 = vsel %vm400, -1.0, %v901
      %v1224 = vsel %vm401, -1.0, %v902
      %v1225 = vsel %vm402, -1.0, %v903
      %v1226 = vsel %vm403, -1.0, %v904
      %v1227 = vsel %vm404, -1.0, %v905
      %v1228 = vsel %vm405, -1.0, %v906
      %v1229 = vsel %vm406, -1.0, %v907
      %v1230 = vsel %vm407, -1.0, %v908
      %v1231 = vsel %vm408, -1.0, %v909
      %v1232 = vsel %vm409, -1.0, %v910
      %v1233 = vsel %vm410, -1.0, %v911
      %v1234 = vsel %vm411, -1.0, %v912
      %v1235 = vsel %vm412, -1.0, %v913
      %v1236 = vsel %vm413, -1.0, %v914
      %v1237 = vsel %vm414, -1.0, %v915
      %v1238 = vsel %vm415, -1.0, %v916
      %v1239 = vsel %vm416, -1.0, %v917
      %v1240 = vsel %vm417, -1.0, %v918
      %v1241 = vsel %vm418, -1.0, %v919
      %v1242 = vsel %vm419, -1.0, %v920
      %v1243 = vsel %vm420, -1.0, %v921
      %1244 = vxpose.xlu0.b32.start [1/16] %v1212, 128
      %1245 = vxpose.xlu0.b32.cont [2/16] %v1213, 128
      %1246 = vxpose.xlu0.b32.cont [3/16] %v1214, 128
      %1247 = vxpose.xlu0.b32.cont [4/16] %v1215, 128
      %1248 = vxpose.xlu0.b32.cont [5/16] %v1216, 128
      %1249 = vxpose.xlu0.b32.cont [6/16] %v1217, 128
      %1250 = vxpose.xlu0.b32.cont [7/16] %v1218, 128
      %1251 = vxpose.xlu0.b32.cont [8/16] %v1219, 128
      %1252 = vxpose.xlu0.b32.cont [9/16] %v1220, 128
      %1253 = vxpose.xlu0.b32.cont [10/16] %v1221, 128
      %1254 = vxpose.xlu0.b32.cont [11/16] %v1222, 128
      %1255 = vxpose.xlu0.b32.cont [12/16] %v1223, 128
      %1256 = vxpose.xlu0.b32.cont [13/16] %v1224, 128
      %1257 = vxpose.xlu0.b32.cont [14/16] %v1225, 128
      %1258 = vxpose.xlu0.b32.cont [15/16] %v1226, 128
      %1259 = vxpose.xlu0.b32.end [16/16] %v1227, 128
      %v1260 = vpop.trf.xlu0
      %v1261 = vpop.trf.xlu0
      %v1262 = vpop.trf.xlu0
      %v1263 = vpop.trf.xlu0
      %v1264 = vpop.trf.xlu0
      %v1265 = vpop.trf.xlu0
      %v1266 = vpop.trf.xlu0
      %v1267 = vpop.trf.xlu0
      %v1268 = vpop.trf.xlu0
      %v1269 = vpop.trf.xlu0
      %v1270 = vpop.trf.xlu0
      %v1271 = vpop.trf.xlu0
      %v1272 = vpop.trf.xlu0
      %v1273 = vpop.trf.xlu0
      %v1274 = vpop.trf.xlu0
      %v1275 = vpop.trf.xlu0
      %1276 = vxpose.xlu0.b32.start [1/16] %v1228, 128
      %1277 = vxpose.xlu0.b32.cont [2/16] %v1229, 128
      %1278 = vxpose.xlu0.b32.cont [3/16] %v1230, 128
      %1279 = vxpose.xlu0.b32.cont [4/16] %v1231, 128
      %1280 = vxpose.xlu0.b32.cont [5/16] %v1232, 128
      %1281 = vxpose.xlu0.b32.cont [6/16] %v1233, 128
      %1282 = vxpose.xlu0.b32.cont [7/16] %v1234, 128
      %1283 = vxpose.xlu0.b32.cont [8/16] %v1235, 128
      %1284 = vxpose.xlu0.b32.cont [9/16] %v1236, 128
      %1285 = vxpose.xlu0.b32.cont [10/16] %v1237, 128
      %1286 = vxpose.xlu0.b32.cont [11/16] %v1238, 128
      %1287 = vxpose.xlu0.b32.cont [12/16] %v1239, 128
      %1288 = vxpose.xlu0.b32.cont [13/16] %v1240, 128
      %1289 = vxpose.xlu0.b32.cont [14/16] %v1241, 128
      %1290 = vxpose.xlu0.b32.cont [15/16] %v1242, 128
      %1291 = vxpose.xlu0.b32.end [16/16] %v1243, 128
      %v1292 = vpop.trf.xlu0
      %v1293 = vpop.trf.xlu0
      %v1294 = vpop.trf.xlu0
      %v1295 = vpop.trf.xlu0
      %v1296 = vpop.trf.xlu0
      %v1297 = vpop.trf.xlu0
      %v1298 = vpop.trf.xlu0
      %v1299 = vpop.trf.xlu0
      %v1300 = vpop.trf.xlu0
      %v1301 = vpop.trf.xlu0
      %v1302 = vpop.trf.xlu0
      %v1303 = vpop.trf.xlu0
      %v1304 = vpop.trf.xlu0
      %v1305 = vpop.trf.xlu0
      %v1306 = vpop.trf.xlu0
      %v1307 = vpop.trf.xlu0
      %v1310 = vcombine.low %v1260, %v1292
      %v1312 = vunpack.c.l.s4 1966171168
      %v1313 = vunpack.c.0.s8 %v1312
      %v1314 = vlaneseq
      %v1315 = vshrl.u32 %v1314, 7
      %v1316 = vsub.s32 %v1313, %v1315
      %v1317 = vrot.slane %v1310, %v1316
      %v1319 = vunpack.c.l.s4 1966171168
      %v1320 = vunpack.c.0.s8 %v1319
      %v1321 = vlaneseq
      %v1322 = vshrl.u32 %v1321, 7
      %v1323 = vsub.s32 %v1320, %v1322
      %v1324 = vrot.slane %v1317, %v1323
      %v1326 = vlaneseq
      %vm1327 = vcmp.ge.s32.totalorder %v1326, 0
      %vm1328 = vcmp.lt.s32.totalorder %v1326, 256
      %vm1329 = vmand %vm1327, %vm1328
      %1330 = vst.msk [vmem:[#allocation2] sm:$0x3] %vm1329, %v1324
      %v1331 = vlaneseq
      %v1332 = vshrl.u32 %v1331, 7
      %v1333 = vadd.s32 %v1332, 8
      %v1334 = vadd.s32 %v1332, 16
      %v1335 = vadd.s32 %v1332, 24
      %v1336 = vadd.s32 %v1332, 32
      %v1337 = vadd.s32 %v1332, 40
      %v1338 = vadd.s32 %v1332, 48
      %v1339 = vadd.s32 %v1332, 56
      %v1340 = vadd.s32 %v1332, 64
      %v1341 = vadd.s32 %v1332, 72
      %v1342 = vadd.s32 %v1332, 80
      %v1343 = vadd.s32 %v1332, 88
      %v1344 = vadd.s32 %v1332, 96
      %v1345 = vadd.s32 %v1332, 104
      %v1346 = vadd.s32 %v1332, 112
      %v1347 = vadd.s32 %v1332, 120
      %v1348 = vadd.s32 %v1332, 128
      %v1349 = vadd.s32 %v1332, 136
      %v1350 = vadd.s32 %v1332, 144
      %v1351 = vadd.s32 %v1332, 152
      %v1352 = vadd.s32 %v1332, 160
      %v1353 = vadd.s32 %v1332, 168
      %v1354 = vadd.s32 %v1332, 176
      %v1355 = vadd.s32 %v1332, 184
      %v1356 = vadd.s32 %v1332, 192
      %v1357 = vadd.s32 %v1332, 200
      %v1358 = vadd.s32 %v1332, 208
      %v1359 = vadd.s32 %v1332, 216
      %v1360 = vadd.s32 %v1332, 224
      %v1361 = vadd.s32 %v1332, 232
      %v1362 = vadd.s32 %v1332, 240
      %v1363 = vadd.s32 %v1332, 248
      %v1364 = vld [vmem:[#allocation2] sm:$0x1]
      %v1366 = vlaneseq
      %v1367 = vshrl.u32 %v1366, 7
      %v1368 = vsub.s32 0, %v1367
      %v1369 = vrot.slane %v1364, %v1368
      %1372 = vset.pattern.permute.xlu0 0
      %1373 = vperm.xlu0 %1372, %v1212
      %v1374 = vpop.permute.xlu0 %1373
      %1377 = vset.pattern.permute.xlu0 0
      %1378 = vperm.xlu0 %1377, %v1213
      %v1379 = vpop.permute.xlu0 %1378
      %1382 = vset.pattern.permute.xlu0 0
      %1383 = vperm.xlu0 %1382, %v1214
      %v1384 = vpop.permute.xlu0 %1383
      %1387 = vset.pattern.permute.xlu0 0
      %1388 = vperm.xlu0 %1387, %v1215
      %v1389 = vpop.permute.xlu0 %1388
      %1392 = vset.pattern.permute.xlu0 0
      %1393 = vperm.xlu0 %1392, %v1216
      %v1394 = vpop.permute.xlu0 %1393
      %1397 = vset.pattern.permute.xlu0 0
      %1398 = vperm.xlu0 %1397, %v1217
      %v1399 = vpop.permute.xlu0 %1398
      %1402 = vset.pattern.permute.xlu0 0
      %1403 = vperm.xlu0 %1402, %v1218
      %v1404 = vpop.permute.xlu0 %1403
      %1407 = vset.pattern.permute.xlu0 0
      %1408 = vperm.xlu0 %1407, %v1219
      %v1409 = vpop.permute.xlu0 %1408
      %1412 = vset.pattern.permute.xlu0 0
      %1413 = vperm.xlu0 %1412, %v1220
      %v1414 = vpop.permute.xlu0 %1413
      %1417 = vset.pattern.permute.xlu0 0
      %1418 = vperm.xlu0 %1417, %v1221
      %v1419 = vpop.permute.xlu0 %1418
      %1422 = vset.pattern.permute.xlu0 0
      %1423 = vperm.xlu0 %1422, %v1222
      %v1424 = vpop.permute.xlu0 %1423
      %1427 = vset.pattern.permute.xlu0 0
      %1428 = vperm.xlu0 %1427, %v1223
      %v1429 = vpop.permute.xlu0 %1428
      %1432 = vset.pattern.permute.xlu0 0
      %1433 = vperm.xlu0 %1432, %v1224
      %v1434 = vpop.permute.xlu0 %1433
      %1437 = vset.pattern.permute.xlu0 0
      %1438 = vperm.xlu0 %1437, %v1225
      %v1439 = vpop.permute.xlu0 %1438
      %1442 = vset.pattern.permute.xlu0 0
      %1443 = vperm.xlu0 %1442, %v1226
      %v1444 = vpop.permute.xlu0 %1443
      %1447 = vset.pattern.permute.xlu0 0
      %1448 = vperm.xlu0 %1447, %v1227
      %v1449 = vpop.permute.xlu0 %1448
      %1452 = vset.pattern.permute.xlu0 0
      %1453 = vperm.xlu0 %1452, %v1228
      %v1454 = vpop.permute.xlu0 %1453
      %1457 = vset.pattern.permute.xlu0 0
      %1458 = vperm.xlu0 %1457, %v1229
      %v1459 = vpop.permute.xlu0 %1458
      %1462 = vset.pattern.permute.xlu0 0
      %1463 = vperm.xlu0 %1462, %v1230
      %v1464 = vpop.permute.xlu0 %1463
      %1467 = vset.pattern.permute.xlu0 0
      %1468 = vperm.xlu0 %1467, %v1231
      %v1469 = vpop.permute.xlu0 %1468
      %1472 = vset.pattern.permute.xlu0 0
      %1473 = vperm.xlu0 %1472, %v1232
      %v1474 = vpop.permute.xlu0 %1473
      %1477 = vset.pattern.permute.xlu0 0
      %1478 = vperm.xlu0 %1477, %v1233
      %v1479 = vpop.permute.xlu0 %1478
      %1482 = vset.pattern.permute.xlu0 0
      %1483 = vperm.xlu0 %1482, %v1234
      %v1484 = vpop.permute.xlu0 %1483
      %1487 = vset.pattern.permute.xlu0 0
      %1488 = vperm.xlu0 %1487, %v1235
      %v1489 = vpop.permute.xlu0 %1488
      %1492 = vset.pattern.permute.xlu0 0
      %1493 = vperm.xlu0 %1492, %v1236
      %v1494 = vpop.permute.xlu0 %1493
      %1497 = vset.pattern.permute.xlu0 0
      %1498 = vperm.xlu0 %1497, %v1237
      %v1499 = vpop.permute.xlu0 %1498
      %1502 = vset.pattern.permute.xlu0 0
      %1503 = vperm.xlu0 %1502, %v1238
      %v1504 = vpop.permute.xlu0 %1503
      %1507 = vset.pattern.permute.xlu0 0
      %1508 = vperm.xlu0 %1507, %v1239
      %v1509 = vpop.permute.xlu0 %1508
      %1512 = vset.pattern.permute.xlu0 0
      %1513 = vperm.xlu0 %1512, %v1240
      %v1514 = vpop.permute.xlu0 %1513
      %1517 = vset.pattern.permute.xlu0 0
      %1518 = vperm.xlu0 %1517, %v1241
      %v1519 = vpop.permute.xlu0 %1518
      %1522 = vset.pattern.permute.xlu0 0
      %1523 = vperm.xlu0 %1522, %v1242
      %v1524 = vpop.permute.xlu0 %1523
      %1527 = vset.pattern.permute.xlu0 0
      %1528 = vperm.xlu0 %1527, %v1243
      %v1529 = vpop.permute.xlu0 %1528
      %vm1531 = vcmp.gt.f32.partialorder %v1369, %v1374
      %vm1532 = vcmp.gt.f32.partialorder %v1369, %v1379
      %vm1533 = vcmp.gt.f32.partialorder %v1369, %v1384
      %vm1534 = vcmp.gt.f32.partialorder %v1369, %v1389
      %vm1535 = vcmp.gt.f32.partialorder %v1369, %v1394
      %vm1536 = vcmp.gt.f32.partialorder %v1369, %v1399
      %vm1537 = vcmp.gt.f32.partialorder %v1369, %v1404
      %vm1538 = vcmp.gt.f32.partialorder %v1369, %v1409
      %vm1539 = vcmp.gt.f32.partialorder %v1369, %v1414
      %vm1540 = vcmp.gt.f32.partialorder %v1369, %v1419
      %vm1541 = vcmp.gt.f32.partialorder %v1369, %v1424
      %vm1542 = vcmp.gt.f32.partialorder %v1369, %v1429
      %vm1543 = vcmp.gt.f32.partialorder %v1369, %v1434
      %vm1544 = vcmp.gt.f32.partialorder %v1369, %v1439
      %vm1545 = vcmp.gt.f32.partialorder %v1369, %v1444
      %vm1546 = vcmp.gt.f32.partialorder %v1369, %v1449
      %vm1547 = vcmp.gt.f32.partialorder %v1369, %v1454
      %vm1548 = vcmp.gt.f32.partialorder %v1369, %v1459
      %vm1549 = vcmp.gt.f32.partialorder %v1369, %v1464
      %vm1550 = vcmp.gt.f32.partialorder %v1369, %v1469
      %vm1551 = vcmp.gt.f32.partialorder %v1369, %v1474
      %vm1552 = vcmp.gt.f32.partialorder %v1369, %v1479
      %vm1553 = vcmp.gt.f32.partialorder %v1369, %v1484
      %vm1554 = vcmp.gt.f32.partialorder %v1369, %v1489
      %vm1555 = vcmp.gt.f32.partialorder %v1369, %v1494
      %vm1556 = vcmp.gt.f32.partialorder %v1369, %v1499
      %vm1557 = vcmp.gt.f32.partialorder %v1369, %v1504
      %vm1558 = vcmp.gt.f32.partialorder %v1369, %v1509
      %vm1559 = vcmp.gt.f32.partialorder %v1369, %v1514
      %vm1560 = vcmp.gt.f32.partialorder %v1369, %v1519
      %vm1561 = vcmp.gt.f32.partialorder %v1369, %v1524
      %vm1562 = vcmp.gt.f32.partialorder %v1369, %v1529
      %vm1563 = vcmp.eq.f32.partialorder %v1369, %v1374
      %vm1564 = vcmp.eq.f32.partialorder %v1369, %v1379
      %vm1565 = vcmp.eq.f32.partialorder %v1369, %v1384
      %vm1566 = vcmp.eq.f32.partialorder %v1369, %v1389
      %vm1567 = vcmp.eq.f32.partialorder %v1369, %v1394
      %vm1568 = vcmp.eq.f32.partialorder %v1369, %v1399
      %vm1569 = vcmp.eq.f32.partialorder %v1369, %v1404
      %vm1570 = vcmp.eq.f32.partialorder %v1369, %v1409
      %vm1571 = vcmp.eq.f32.partialorder %v1369, %v1414
      %vm1572 = vcmp.eq.f32.partialorder %v1369, %v1419
      %vm1573 = vcmp.eq.f32.partialorder %v1369, %v1424
      %vm1574 = vcmp.eq.f32.partialorder %v1369, %v1429
      %vm1575 = vcmp.eq.f32.partialorder %v1369, %v1434
      %vm1576 = vcmp.eq.f32.partialorder %v1369, %v1439
      %vm1577 = vcmp.eq.f32.partialorder %v1369, %v1444
      %vm1578 = vcmp.eq.f32.partialorder %v1369, %v1449
      %vm1579 = vcmp.eq.f32.partialorder %v1369, %v1454
      %vm1580 = vcmp.eq.f32.partialorder %v1369, %v1459
      %vm1581 = vcmp.eq.f32.partialorder %v1369, %v1464
      %vm1582 = vcmp.eq.f32.partialorder %v1369, %v1469
      %vm1583 = vcmp.eq.f32.partialorder %v1369, %v1474
      %vm1584 = vcmp.eq.f32.partialorder %v1369, %v1479
      %vm1585 = vcmp.eq.f32.partialorder %v1369, %v1484
      %vm1586 = vcmp.eq.f32.partialorder %v1369, %v1489
      %vm1587 = vcmp.eq.f32.partialorder %v1369, %v1494
      %vm1588 = vcmp.eq.f32.partialorder %v1369, %v1499
      %vm1589 = vcmp.eq.f32.partialorder %v1369, %v1504
      %vm1590 = vcmp.eq.f32.partialorder %v1369, %v1509
      %vm1591 = vcmp.eq.f32.partialorder %v1369, %v1514
      %vm1592 = vcmp.eq.f32.partialorder %v1369, %v1519
      %vm1593 = vcmp.eq.f32.partialorder %v1369, %v1524
      %vm1594 = vcmp.eq.f32.partialorder %v1369, %v1529
      %vm1595 = vcmp.lt.s32.totalorder %v923, %v1332
      %vm1596 = vcmp.lt.s32.totalorder %v923, %v1333
      %vm1597 = vcmp.lt.s32.totalorder %v923, %v1334
      %vm1598 = vcmp.lt.s32.totalorder %v923, %v1335
      %vm1599 = vcmp.lt.s32.totalorder %v923, %v1336
      %vm1600 = vcmp.lt.s32.totalorder %v923, %v1337
      %vm1601 = vcmp.lt.s32.totalorder %v923, %v1338
      %vm1602 = vcmp.lt.s32.totalorder %v923, %v1339
      %vm1603 = vcmp.lt.s32.totalorder %v923, %v1340
      %vm1604 = vcmp.lt.s32.totalorder %v923, %v1341
      %vm1605 = vcmp.lt.s32.totalorder %v923, %v1342
      %vm1606 = vcmp.lt.s32.totalorder %v923, %v1343
      %vm1607 = vcmp.lt.s32.totalorder %v923, %v1344
      %vm1608 = vcmp.lt.s32.totalorder %v923, %v1345
      %vm1609 = vcmp.lt.s32.totalorder %v923, %v1346
      %vm1610 = vcmp.lt.s32.totalorder %v923, %v1347
      %vm1611 = vcmp.lt.s32.totalorder %v923, %v1348
      %vm1612 = vcmp.lt.s32.totalorder %v923, %v1349
      %vm1613 = vcmp.lt.s32.totalorder %v923, %v1350
      %vm1614 = vcmp.lt.s32.totalorder %v923, %v1351
      %vm1615 = vcmp.lt.s32.totalorder %v923, %v1352
      %vm1616 = vcmp.lt.s32.totalorder %v923, %v1353
      %vm1617 = vcmp.lt.s32.totalorder %v923, %v1354
      %vm1618 = vcmp.lt.s32.totalorder %v923, %v1355
      %vm1619 = vcmp.lt.s32.totalorder %v923, %v1356
      %vm1620 = vcmp.lt.s32.totalorder %v923, %v1357
      %vm1621 = vcmp.lt.s32.totalorder %v923, %v1358
      %vm1622 = vcmp.lt.s32.totalorder %v923, %v1359
      %vm1623 = vcmp.lt.s32.totalorder %v923, %v1360
      %vm1624 = vcmp.lt.s32.totalorder %v923, %v1361
      %vm1625 = vcmp.lt.s32.totalorder %v923, %v1362
      %vm1626 = vcmp.lt.s32.totalorder %v923, %v1363
      %vm1627 = vmand %vm1563, %vm1595
      %vm1628 = vmand %vm1564, %vm1596
      %vm1629 = vmand %vm1565, %vm1597
      %vm1630 = vmand %vm1566, %vm1598
      %vm1631 = vmand %vm1567, %vm1599
      %vm1632 = vmand %vm1568, %vm1600
      %vm1633 = vmand %vm1569, %vm1601
      %vm1634 = vmand %vm1570, %vm1602
      %vm1635 = vmand %vm1571, %vm1603
      %vm1636 = vmand %vm1572, %vm1604
      %vm1637 = vmand %vm1573, %vm1605
      %vm1638 = vmand %vm1574, %vm1606
      %vm1639 = vmand %vm1575, %vm1607
      %vm1640 = vmand %vm1576, %vm1608
      %vm1641 = vmand %vm1577, %vm1609
      %vm1642 = vmand %vm1578, %vm1610
      %vm1643 = vmand %vm1579, %vm1611
      %vm1644 = vmand %vm1580, %vm1612
      %vm1645 = vmand %vm1581, %vm1613
      %vm1646 = vmand %vm1582, %vm1614
      %vm1647 = vmand %vm1583, %vm1615
      %vm1648 = vmand %vm1584, %vm1616
      %vm1649 = vmand %vm1585, %vm1617
      %vm1650 = vmand %vm1586, %vm1618
      %vm1651 = vmand %vm1587, %vm1619
      %vm1652 = vmand %vm1588, %vm1620
      %vm1653 = vmand %vm1589, %vm1621
      %vm1654 = vmand %vm1590, %vm1622
      %vm1655 = vmand %vm1591, %vm1623
      %vm1656 = vmand %vm1592, %vm1624
      %vm1657 = vmand %vm1593, %vm1625
      %vm1658 = vmand %vm1594, %vm1626
      %vm1659 = vmor %vm1531, %vm1627
      %vm1660 = vmor %vm1532, %vm1628
      %vm1661 = vmor %vm1533, %vm1629
      %vm1662 = vmor %vm1534, %vm1630
      %vm1663 = vmor %vm1535, %vm1631
      %vm1664 = vmor %vm1536, %vm1632
      %vm1665 = vmor %vm1537, %vm1633
      %vm1666 = vmor %vm1538, %vm1634
      %vm1667 = vmor %vm1539, %vm1635
      %vm1668 = vmor %vm1540, %vm1636
      %vm1669 = vmor %vm1541, %vm1637
      %vm1670 = vmor %vm1542, %vm1638
      %vm1671 = vmor %vm1543, %vm1639
      %vm1672 = vmor %vm1544, %vm1640
      %vm1673 = vmor %vm1545, %vm1641
      %vm1674 = vmor %vm1546, %vm1642
      %vm1675 = vmor %vm1547, %vm1643
      %vm1676 = vmor %vm1548, %vm1644
      %vm1677 = vmor %vm1549, %vm1645
      %vm1678 = vmor %vm1550, %vm1646
      %vm1679 = vmor %vm1551, %vm1647
      %vm1680 = vmor %vm1552, %vm1648
      %vm1681 = vmor %vm1553, %vm1649
      %vm1682 = vmor %vm1554, %vm1650
      %vm1683 = vmor %vm1555, %vm1651
      %vm1684 = vmor %vm1556, %vm1652
      %vm1685 = vmor %vm1557, %vm1653
      %vm1686 = vmor %vm1558, %vm1654
      %vm1687 = vmor %vm1559, %vm1655
      %vm1688 = vmor %vm1560, %vm1656
      %vm1689 = vmor %vm1561, %vm1657
      %vm1690 = vmor %vm1562, %vm1658
      %v1691 = vsel %vm1659, 1, 0
      %v1692 = vsel %vm1660, 1, 0
      %v1693 = vsel %vm1661, 1, 0
      %v1694 = vsel %vm1662, 1, 0
      %v1695 = vsel %vm1663, 1, 0
      %v1696 = vsel %vm1664, 1, 0
      %v1697 = vsel %vm1665, 1, 0
      %v1698 = vsel %vm1666, 1, 0
      %v1699 = vsel %vm1667, 1, 0
      %v1700 = vsel %vm1668, 1, 0
      %v1701 = vsel %vm1669, 1, 0
      %v1702 = vsel %vm1670, 1, 0
      %v1703 = vsel %vm1671, 1, 0
      %v1704 = vsel %vm1672, 1, 0
      %v1705 = vsel %vm1673, 1, 0
      %v1706 = vsel %vm1674, 1, 0
      %v1707 = vsel %vm1675, 1, 0
      %v1708 = vsel %vm1676, 1, 0
      %v1709 = vsel %vm1677, 1, 0
      %v1710 = vsel %vm1678, 1, 0
      %v1711 = vsel %vm1679, 1, 0
      %v1712 = vsel %vm1680, 1, 0
      %v1713 = vsel %vm1681, 1, 0
      %v1714 = vsel %vm1682, 1, 0
      %v1715 = vsel %vm1683, 1, 0
      %v1716 = vsel %vm1684, 1, 0
      %v1717 = vsel %vm1685, 1, 0
      %v1718 = vsel %vm1686, 1, 0
      %v1719 = vsel %vm1687, 1, 0
      %v1720 = vsel %vm1688, 1, 0
      %v1721 = vsel %vm1689, 1, 0
      %v1722 = vsel %vm1690, 1, 0
      %v1723 = vld [vmem:[#allocation2 + $0x1] sm:$0x1]
      %v1724 = vadd.s32 %v923, 128
      %v1726 = vlaneseq
      %v1727 = vshrl.u32 %v1726, 7
      %v1728 = vsub.s32 0, %v1727
      %v1729 = vrot.slane %v1723, %v1728
      %vm1731 = vcmp.gt.f32.partialorder %v1729, %v1374
      %vm1732 = vcmp.gt.f32.partialorder %v1729, %v1379
      %vm1733 = vcmp.gt.f32.partialorder %v1729, %v1384
      %vm1734 = vcmp.gt.f32.partialorder %v1729, %v1389
      %vm1735 = vcmp.gt.f32.partialorder %v1729, %v1394
      %vm1736 = vcmp.gt.f32.partialorder %v1729, %v1399
      %vm1737 = vcmp.gt.f32.partialorder %v1729, %v1404
      %vm1738 = vcmp.gt.f32.partialorder %v1729, %v1409
      %vm1739 = vcmp.gt.f32.partialorder %v1729, %v1414
      %vm1740 = vcmp.gt.f32.partialorder %v1729, %v1419
      %vm1741 = vcmp.gt.f32.partialorder %v1729, %v1424
      %vm1742 = vcmp.gt.f32.partialorder %v1729, %v1429
      %vm1743 = vcmp.gt.f32.partialorder %v1729, %v1434
      %vm1744 = vcmp.gt.f32.partialorder %v1729, %v1439
      %vm1745 = vcmp.gt.f32.partialorder %v1729, %v1444
      %vm1746 = vcmp.gt.f32.partialorder %v1729, %v1449
      %vm1747 = vcmp.gt.f32.partialorder %v1729, %v1454
      %vm1748 = vcmp.gt.f32.partialorder %v1729, %v1459
      %vm1749 = vcmp.gt.f32.partialorder %v1729, %v1464
      %vm1750 = vcmp.gt.f32.partialorder %v1729, %v1469
      %vm1751 = vcmp.gt.f32.partialorder %v1729, %v1474
      %vm1752 = vcmp.gt.f32.partialorder %v1729, %v1479
      %vm1753 = vcmp.gt.f32.partialorder %v1729, %v1484
      %vm1754 = vcmp.gt.f32.partialorder %v1729, %v1489
      %vm1755 = vcmp.gt.f32.partialorder %v1729, %v1494
      %vm1756 = vcmp.gt.f32.partialorder %v1729, %v1499
      %vm1757 = vcmp.gt.f32.partialorder %v1729, %v1504
      %vm1758 = vcmp.gt.f32.partialorder %v1729, %v1509
      %vm1759 = vcmp.gt.f32.partialorder %v1729, %v1514
      %vm1760 = vcmp.gt.f32.partialorder %v1729, %v1519
      %vm1761 = vcmp.gt.f32.partialorder %v1729, %v1524
      %vm1762 = vcmp.gt.f32.partialorder %v1729, %v1529
      %vm1763 = vcmp.eq.f32.partialorder %v1729, %v1374
      %vm1764 = vcmp.eq.f32.partialorder %v1729, %v1379
      %vm1765 = vcmp.eq.f32.partialorder %v1729, %v1384
      %vm1766 = vcmp.eq.f32.partialorder %v1729, %v1389
      %vm1767 = vcmp.eq.f32.partialorder %v1729, %v1394
      %vm1768 = vcmp.eq.f32.partialorder %v1729, %v1399
      %vm1769 = vcmp.eq.f32.partialorder %v1729, %v1404
      %vm1770 = vcmp.eq.f32.partialorder %v1729, %v1409
      %vm1771 = vcmp.eq.f32.partialorder %v1729, %v1414
      %vm1772 = vcmp.eq.f32.partialorder %v1729, %v1419
      %vm1773 = vcmp.eq.f32.partialorder %v1729, %v1424
      %vm1774 = vcmp.eq.f32.partialorder %v1729, %v1429
      %vm1775 = vcmp.eq.f32.partialorder %v1729, %v1434
      %vm1776 = vcmp.eq.f32.partialorder %v1729, %v1439
      %vm1777 = vcmp.eq.f32.partialorder %v1729, %v1444
      %vm1778 = vcmp.eq.f32.partialorder %v1729, %v1449
      %vm1779 = vcmp.eq.f32.partialorder %v1729, %v1454
      %vm1780 = vcmp.eq.f32.partialorder %v1729, %v1459
      %vm1781 = vcmp.eq.f32.partialorder %v1729, %v1464
      %vm1782 = vcmp.eq.f32.partialorder %v1729, %v1469
      %vm1783 = vcmp.eq.f32.partialorder %v1729, %v1474
      %vm1784 = vcmp.eq.f32.partialorder %v1729, %v1479
      %vm1785 = vcmp.eq.f32.partialorder %v1729, %v1484
      %vm1786 = vcmp.eq.f32.partialorder %v1729, %v1489
      %vm1787 = vcmp.eq.f32.partialorder %v1729, %v1494
      %vm1788 = vcmp.eq.f32.partialorder %v1729, %v1499
      %vm1789 = vcmp.eq.f32.partialorder %v1729, %v1504
      %vm1790 = vcmp.eq.f32.partialorder %v1729, %v1509
      %vm1791 = vcmp.eq.f32.partialorder %v1729, %v1514
      %vm1792 = vcmp.eq.f32.partialorder %v1729, %v1519
      %vm1793 = vcmp.eq.f32.partialorder %v1729, %v1524
      %vm1794 = vcmp.eq.f32.partialorder %v1729, %v1529
      %vm1795 = vcmp.lt.s32.totalorder %v1724, %v1332
      %vm1796 = vcmp.lt.s32.totalorder %v1724, %v1333
      %vm1797 = vcmp.lt.s32.totalorder %v1724, %v1334
      %vm1798 = vcmp.lt.s32.totalorder %v1724, %v1335
      %vm1799 = vcmp.lt.s32.totalorder %v1724, %v1336
      %vm1800 = vcmp.lt.s32.totalorder %v1724, %v1337
      %vm1801 = vcmp.lt.s32.totalorder %v1724, %v1338
      %vm1802 = vcmp.lt.s32.totalorder %v1724, %v1339
      %vm1803 = vcmp.lt.s32.totalorder %v1724, %v1340
      %vm1804 = vcmp.lt.s32.totalorder %v1724, %v1341
      %vm1805 = vcmp.lt.s32.totalorder %v1724, %v1342
      %vm1806 = vcmp.lt.s32.totalorder %v1724, %v1343
      %vm1807 = vcmp.lt.s32.totalorder %v1724, %v1344
      %vm1808 = vcmp.lt.s32.totalorder %v1724, %v1345
      %vm1809 = vcmp.lt.s32.totalorder %v1724, %v1346
      %vm1810 = vcmp.lt.s32.totalorder %v1724, %v1347
      %vm1811 = vcmp.lt.s32.totalorder %v1724, %v1348
      %vm1812 = vcmp.lt.s32.totalorder %v1724, %v1349
      %vm1813 = vcmp.lt.s32.totalorder %v1724, %v1350
      %vm1814 = vcmp.lt.s32.totalorder %v1724, %v1351
      %vm1815 = vcmp.lt.s32.totalorder %v1724, %v1352
      %vm1816 = vcmp.lt.s32.totalorder %v1724, %v1353
      %vm1817 = vcmp.lt.s32.totalorder %v1724, %v1354
      %vm1818 = vcmp.lt.s32.totalorder %v1724, %v1355
      %vm1819 = vcmp.lt.s32.totalorder %v1724, %v1356
      %vm1820 = vcmp.lt.s32.totalorder %v1724, %v1357
      %vm1821 = vcmp.lt.s32.totalorder %v1724, %v1358
      %vm1822 = vcmp.lt.s32.totalorder %v1724, %v1359
      %vm1823 = vcmp.lt.s32.totalorder %v1724, %v1360
      %vm1824 = vcmp.lt.s32.totalorder %v1724, %v1361
      %vm1825 = vcmp.lt.s32.totalorder %v1724, %v1362
      %vm1826 = vcmp.lt.s32.totalorder %v1724, %v1363
      %vm1827 = vmand %vm1763, %vm1795
      %vm1828 = vmand %vm1764, %vm1796
      %vm1829 = vmand %vm1765, %vm1797
      %vm1830 = vmand %vm1766, %vm1798
      %vm1831 = vmand %vm1767, %vm1799
      %vm1832 = vmand %vm1768, %vm1800
      %vm1833 = vmand %vm1769, %vm1801
      %vm1834 = vmand %vm1770, %vm1802
      %vm1835 = vmand %vm1771, %vm1803
      %vm1836 = vmand %vm1772, %vm1804
      %vm1837 = vmand %vm1773, %vm1805
      %vm1838 = vmand %vm1774, %vm1806
      %vm1839 = vmand %vm1775, %vm1807
      %vm1840 = vmand %vm1776, %vm1808
      %vm1841 = vmand %vm1777, %vm1809
      %vm1842 = vmand %vm1778, %vm1810
      %vm1843 = vmand %vm1779, %vm1811
      %vm1844 = vmand %vm1780, %vm1812
      %vm1845 = vmand %vm1781, %vm1813
      %vm1846 = vmand %vm1782, %vm1814
      %vm1847 = vmand %vm1783, %vm1815
      %vm1848 = vmand %vm1784, %vm1816
      %vm1849 = vmand %vm1785, %vm1817
      %vm1850 = vmand %vm1786, %vm1818
      %vm1851 = vmand %vm1787, %vm1819
      %vm1852 = vmand %vm1788, %vm1820
      %vm1853 = vmand %vm1789, %vm1821
      %vm1854 = vmand %vm1790, %vm1822
      %vm1855 = vmand %vm1791, %vm1823
      %vm1856 = vmand %vm1792, %vm1824
      %vm1857 = vmand %vm1793, %vm1825
      %vm1858 = vmand %vm1794, %vm1826
      %vm1859 = vmor %vm1731, %vm1827
      %vm1860 = vmor %vm1732, %vm1828
      %vm1861 = vmor %vm1733, %vm1829
      %vm1862 = vmor %vm1734, %vm1830
      %vm1863 = vmor %vm1735, %vm1831
      %vm1864 = vmor %vm1736, %vm1832
      %vm1865 = vmor %vm1737, %vm1833
      %vm1866 = vmor %vm1738, %vm1834
      %vm1867 = vmor %vm1739, %vm1835
      %vm1868 = vmor %vm1740, %vm1836
      %vm1869 = vmor %vm1741, %vm1837
      %vm1870 = vmor %vm1742, %vm1838
      %vm1871 = vmor %vm1743, %vm1839
      %vm1872 = vmor %vm1744, %vm1840
      %vm1873 = vmor %vm1745, %vm1841
      %vm1874 = vmor %vm1746, %vm1842
      %vm1875 = vmor %vm1747, %vm1843
      %vm1876 = vmor %vm1748, %vm1844
      %vm1877 = vmor %vm1749, %vm1845
      %vm1878 = vmor %vm1750, %vm1846
      %vm1879 = vmor %vm1751, %vm1847
      %vm1880 = vmor %vm1752, %vm1848
      %vm1881 = vmor %vm1753, %vm1849
      %vm1882 = vmor %vm1754, %vm1850
      %vm1883 = vmor %vm1755, %vm1851
      %vm1884 = vmor %vm1756, %vm1852
      %vm1885 = vmor %vm1757, %vm1853
      %vm1886 = vmor %vm1758, %vm1854
      %vm1887 = vmor %vm1759, %vm1855
      %vm1888 = vmor %vm1760, %vm1856
      %vm1889 = vmor %vm1761, %vm1857
      %vm1890 = vmor %vm1762, %vm1858
      %v1891 = vsel %vm1859, 1, 0
      %v1892 = vsel %vm1860, 1, 0
      %v1893 = vsel %vm1861, 1, 0
      %v1894 = vsel %vm1862, 1, 0
      %v1895 = vsel %vm1863, 1, 0
      %v1896 = vsel %vm1864, 1, 0
      %v1897 = vsel %vm1865, 1, 0
      %v1898 = vsel %vm1866, 1, 0
      %v1899 = vsel %vm1867, 1, 0
      %v1900 = vsel %vm1868, 1, 0
      %v1901 = vsel %vm1869, 1, 0
      %v1902 = vsel %vm1870, 1, 0
      %v1903 = vsel %vm1871, 1, 0
      %v1904 = vsel %vm1872, 1, 0
      %v1905 = vsel %vm1873, 1, 0
      %v1906 = vsel %vm1874, 1, 0
      %v1907 = vsel %vm1875, 1, 0
      %v1908 = vsel %vm1876, 1, 0
      %v1909 = vsel %vm1877, 1, 0
      %v1910 = vsel %vm1878, 1, 0
      %v1911 = vsel %vm1879, 1, 0
      %v1912 = vsel %vm1880, 1, 0
      %v1913 = vsel %vm1881, 1, 0
      %v1914 = vsel %vm1882, 1, 0
      %v1915 = vsel %vm1883, 1, 0
      %v1916 = vsel %vm1884, 1, 0
      %v1917 = vsel %vm1885, 1, 0
      %v1918 = vsel %vm1886, 1, 0
      %v1919 = vsel %vm1887, 1, 0
      %v1920 = vsel %vm1888, 1, 0
      %v1921 = vsel %vm1889, 1, 0
      %v1922 = vsel %vm1890, 1, 0
      %v1923 = vadd.s32 %v1691, %v1891
      %v1924 = vadd.s32 %v1692, %v1892
      %v1925 = vadd.s32 %v1693, %v1893
      %v1926 = vadd.s32 %v1694, %v1894
      %v1927 = vadd.s32 %v1695, %v1895
      %v1928 = vadd.s32 %v1696, %v1896
      %v1929 = vadd.s32 %v1697, %v1897
      %v1930 = vadd.s32 %v1698, %v1898
      %v1931 = vadd.s32 %v1699, %v1899
      %v1932 = vadd.s32 %v1700, %v1900
      %v1933 = vadd.s32 %v1701, %v1901
      %v1934 = vadd.s32 %v1702, %v1902
      %v1935 = vadd.s32 %v1703, %v1903
      %v1936 = vadd.s32 %v1704, %v1904
      %v1937 = vadd.s32 %v1705, %v1905
      %v1938 = vadd.s32 %v1706, %v1906
      %v1939 = vadd.s32 %v1707, %v1907
      %v1940 = vadd.s32 %v1708, %v1908
      %v1941 = vadd.s32 %v1709, %v1909
      %v1942 = vadd.s32 %v1710, %v1910
      %v1943 = vadd.s32 %v1711, %v1911
      %v1944 = vadd.s32 %v1712, %v1912
      %v1945 = vadd.s32 %v1713, %v1913
      %v1946 = vadd.s32 %v1714, %v1914
      %v1947 = vadd.s32 %v1715, %v1915
      %v1948 = vadd.s32 %v1716, %v1916
      %v1949 = vadd.s32 %v1717, %v1917
      %v1950 = vadd.s32 %v1718, %v1918
      %v1951 = vadd.s32 %v1719, %v1919
      %v1952 = vadd.s32 %v1720, %v1920
      %v1953 = vadd.s32 %v1721, %v1921
      %v1954 = vadd.s32 %v1722, %v1922
      %v1955 = vand.u32 %v1923, 65535
      %v1956 = vshrl.u32 %v1923, 16
      %v1957 = vcvt.s32.f32 %v1955
      %v1958 = vcvt.s32.f32 %v1956
      %1959 = vadd.xlane.f32.xlu0 %v1957
      %v1960 = vpop.xlane.xlu0 %1959
      %1961 = vadd.xlane.f32.xlu0 %v1958
      %v1962 = vpop.xlane.xlu0 %1961
      %v1963 = vcvt.f32.s32 %v1960
      %v1964 = vcvt.f32.s32 %v1962
      %v1965 = vshll.u32 %v1964, 16
      %v1966 = vadd.s32 %v1965, %v1963
      %v1967 = vand.u32 %v1924, 65535
      %v1968 = vshrl.u32 %v1924, 16
      %v1969 = vcvt.s32.f32 %v1967
      %v1970 = vcvt.s32.f32 %v1968
      %1971 = vadd.xlane.f32.xlu0 %v1969
      %v1972 = vpop.xlane.xlu0 %1971
      %1973 = vadd.xlane.f32.xlu0 %v1970
      %v1974 = vpop.xlane.xlu0 %1973
      %v1975 = vcvt.f32.s32 %v1972
      %v1976 = vcvt.f32.s32 %v1974
      %v1977 = vshll.u32 %v1976, 16
      %v1978 = vadd.s32 %v1977, %v1975
      %v1979 = vand.u32 %v1925, 65535
      %v1980 = vshrl.u32 %v1925, 16
      %v1981 = vcvt.s32.f32 %v1979
      %v1982 = vcvt.s32.f32 %v1980
      %1983 = vadd.xlane.f32.xlu0 %v1981
      %v1984 = vpop.xlane.xlu0 %1983
      %1985 = vadd.xlane.f32.xlu0 %v1982
      %v1986 = vpop.xlane.xlu0 %1985
      %v1987 = vcvt.f32.s32 %v1984
      %v1988 = vcvt.f32.s32 %v1986
      %v1989 = vshll.u32 %v1988, 16
      %v1990 = vadd.s32 %v1989, %v1987
      %v1991 = vand.u32 %v1926, 65535
      %v1992 = vshrl.u32 %v1926, 16
      %v1993 = vcvt.s32.f32 %v1991
      %v1994 = vcvt.s32.f32 %v1992
      %1995 = vadd.xlane.f32.xlu0 %v1993
      %v1996 = vpop.xlane.xlu0 %1995
      %1997 = vadd.xlane.f32.xlu0 %v1994
      %v1998 = vpop.xlane.xlu0 %1997
      %v1999 = vcvt.f32.s32 %v1996
      %v2000 = vcvt.f32.s32 %v1998
      %v2001 = vshll.u32 %v2000, 16
      %v2002 = vadd.s32 %v2001, %v1999
      %v2003 = vand.u32 %v1927, 65535
      %v2004 = vshrl.u32 %v1927, 16
      %v2005 = vcvt.s32.f32 %v2003
      %v2006 = vcvt.s32.f32 %v2004
      %2007 = vadd.xlane.f32.xlu0 %v2005
      %v2008 = vpop.xlane.xlu0 %2007
      %2009 = vadd.xlane.f32.xlu0 %v2006
      %v2010 = vpop.xlane.xlu0 %2009
      %v2011 = vcvt.f32.s32 %v2008
      %v2012 = vcvt.f32.s32 %v2010
      %v2013 = vshll.u32 %v2012, 16
      %v2014 = vadd.s32 %v2013, %v2011
      %v2015 = vand.u32 %v1928, 65535
      %v2016 = vshrl.u32 %v1928, 16
      %v2017 = vcvt.s32.f32 %v2015
      %v2018 = vcvt.s32.f32 %v2016
      %2019 = vadd.xlane.f32.xlu0 %v2017
      %v2020 = vpop.xlane.xlu0 %2019
      %2021 = vadd.xlane.f32.xlu0 %v2018
      %v2022 = vpop.xlane.xlu0 %2021
      %v2023 = vcvt.f32.s32 %v2020
      %v2024 = vcvt.f32.s32 %v2022
      %v2025 = vshll.u32 %v2024, 16
      %v2026 = vadd.s32 %v2025, %v2023
      %v2027 = vand.u32 %v1929, 65535
      %v2028 = vshrl.u32 %v1929, 16
      %v2029 = vcvt.s32.f32 %v2027
      %v2030 = vcvt.s32.f32 %v2028
      %2031 = vadd.xlane.f32.xlu0 %v2029
      %v2032 = vpop.xlane.xlu0 %2031
      %2033 = vadd.xlane.f32.xlu0 %v2030
      %v2034 = vpop.xlane.xlu0 %2033
      %v2035 = vcvt.f32.s32 %v2032
      %v2036 = vcvt.f32.s32 %v2034
      %v2037 = vshll.u32 %v2036, 16
      %v2038 = vadd.s32 %v2037, %v2035
      %v2039 = vand.u32 %v1930, 65535
      %v2040 = vshrl.u32 %v1930, 16
      %v2041 = vcvt.s32.f32 %v2039
      %v2042 = vcvt.s32.f32 %v2040
      %2043 = vadd.xlane.f32.xlu0 %v2041
      %v2044 = vpop.xlane.xlu0 %2043
      %2045 = vadd.xlane.f32.xlu0 %v2042
      %v2046 = vpop.xlane.xlu0 %2045
      %v2047 = vcvt.f32.s32 %v2044
      %v2048 = vcvt.f32.s32 %v2046
      %v2049 = vshll.u32 %v2048, 16
      %v2050 = vadd.s32 %v2049, %v2047
      %v2051 = vand.u32 %v1931, 65535
      %v2052 = vshrl.u32 %v1931, 16
      %v2053 = vcvt.s32.f32 %v2051
      %v2054 = vcvt.s32.f32 %v2052
      %2055 = vadd.xlane.f32.xlu0 %v2053
      %v2056 = vpop.xlane.xlu0 %2055
      %2057 = vadd.xlane.f32.xlu0 %v2054
      %v2058 = vpop.xlane.xlu0 %2057
      %v2059 = vcvt.f32.s32 %v2056
      %v2060 = vcvt.f32.s32 %v2058
      %v2061 = vshll.u32 %v2060, 16
      %v2062 = vadd.s32 %v2061, %v2059
      %v2063 = vand.u32 %v1932, 65535
      %v2064 = vshrl.u32 %v1932, 16
      %v2065 = vcvt.s32.f32 %v2063
      %v2066 = vcvt.s32.f32 %v2064
      %2067 = vadd.xlane.f32.xlu0 %v2065
      %v2068 = vpop.xlane.xlu0 %2067
      %2069 = vadd.xlane.f32.xlu0 %v2066
      %v2070 = vpop.xlane.xlu0 %2069
      %v2071 = vcvt.f32.s32 %v2068
      %v2072 = vcvt.f32.s32 %v2070
      %v2073 = vshll.u32 %v2072, 16
      %v2074 = vadd.s32 %v2073, %v2071
      %v2075 = vand.u32 %v1933, 65535
      %v2076 = vshrl.u32 %v1933, 16
      %v2077 = vcvt.s32.f32 %v2075
      %v2078 = vcvt.s32.f32 %v2076
      %2079 = vadd.xlane.f32.xlu0 %v2077
      %v2080 = vpop.xlane.xlu0 %2079
      %2081 = vadd.xlane.f32.xlu0 %v2078
      %v2082 = vpop.xlane.xlu0 %2081
      %v2083 = vcvt.f32.s32 %v2080
      %v2084 = vcvt.f32.s32 %v2082
      %v2085 = vshll.u32 %v2084, 16
      %v2086 = vadd.s32 %v2085, %v2083
      %v2087 = vand.u32 %v1934, 65535
      %v2088 = vshrl.u32 %v1934, 16
      %v2089 = vcvt.s32.f32 %v2087
      %v2090 = vcvt.s32.f32 %v2088
      %2091 = vadd.xlane.f32.xlu0 %v2089
      %v2092 = vpop.xlane.xlu0 %2091
      %2093 = vadd.xlane.f32.xlu0 %v2090
      %v2094 = vpop.xlane.xlu0 %2093
      %v2095 = vcvt.f32.s32 %v2092
      %v2096 = vcvt.f32.s32 %v2094
      %v2097 = vshll.u32 %v2096, 16
      %v2098 = vadd.s32 %v2097, %v2095
      %v2099 = vand.u32 %v1935, 65535
      %v2100 = vshrl.u32 %v1935, 16
      %v2101 = vcvt.s32.f32 %v2099
      %v2102 = vcvt.s32.f32 %v2100
      %2103 = vadd.xlane.f32.xlu0 %v2101
      %v2104 = vpop.xlane.xlu0 %2103
      %2105 = vadd.xlane.f32.xlu0 %v2102
      %v2106 = vpop.xlane.xlu0 %2105
      %v2107 = vcvt.f32.s32 %v2104
      %v2108 = vcvt.f32.s32 %v2106
      %v2109 = vshll.u32 %v2108, 16
      %v2110 = vadd.s32 %v2109, %v2107
      %v2111 = vand.u32 %v1936, 65535
      %v2112 = vshrl.u32 %v1936, 16
      %v2113 = vcvt.s32.f32 %v2111
      %v2114 = vcvt.s32.f32 %v2112
      %2115 = vadd.xlane.f32.xlu0 %v2113
      %v2116 = vpop.xlane.xlu0 %2115
      %2117 = vadd.xlane.f32.xlu0 %v2114
      %v2118 = vpop.xlane.xlu0 %2117
      %v2119 = vcvt.f32.s32 %v2116
      %v2120 = vcvt.f32.s32 %v2118
      %v2121 = vshll.u32 %v2120, 16
      %v2122 = vadd.s32 %v2121, %v2119
      %v2123 = vand.u32 %v1937, 65535
      %v2124 = vshrl.u32 %v1937, 16
      %v2125 = vcvt.s32.f32 %v2123
      %v2126 = vcvt.s32.f32 %v2124
      %2127 = vadd.xlane.f32.xlu0 %v2125
      %v2128 = vpop.xlane.xlu0 %2127
      %2129 = vadd.xlane.f32.xlu0 %v2126
      %v2130 = vpop.xlane.xlu0 %2129
      %v2131 = vcvt.f32.s32 %v2128
      %v2132 = vcvt.f32.s32 %v2130
      %v2133 = vshll.u32 %v2132, 16
      %v2134 = vadd.s32 %v2133, %v2131
      %v2135 = vand.u32 %v1938, 65535
      %v2136 = vshrl.u32 %v1938, 16
      %v2137 = vcvt.s32.f32 %v2135
      %v2138 = vcvt.s32.f32 %v2136
      %2139 = vadd.xlane.f32.xlu0 %v2137
      %v2140 = vpop.xlane.xlu0 %2139
      %2141 = vadd.xlane.f32.xlu0 %v2138
      %v2142 = vpop.xlane.xlu0 %2141
      %v2143 = vcvt.f32.s32 %v2140
      %v2144 = vcvt.f32.s32 %v2142
      %v2145 = vshll.u32 %v2144, 16
      %v2146 = vadd.s32 %v2145, %v2143
      %v2147 = vand.u32 %v1939, 65535
      %v2148 = vshrl.u32 %v1939, 16
      %v2149 = vcvt.s32.f32 %v2147
      %v2150 = vcvt.s32.f32 %v2148
      %2151 = vadd.xlane.f32.xlu0 %v2149
      %v2152 = vpop.xlane.xlu0 %2151
      %2153 = vadd.xlane.f32.xlu0 %v2150
      %v2154 = vpop.xlane.xlu0 %2153
      %v2155 = vcvt.f32.s32 %v2152
      %v2156 = vcvt.f32.s32 %v2154
      %v2157 = vshll.u32 %v2156, 16
      %v2158 = vadd.s32 %v2157, %v2155
      %v2159 = vand.u32 %v1940, 65535
      %v2160 = vshrl.u32 %v1940, 16
      %v2161 = vcvt.s32.f32 %v2159
      %v2162 = vcvt.s32.f32 %v2160
      %2163 = vadd.xlane.f32.xlu0 %v2161
      %v2164 = vpop.xlane.xlu0 %2163
      %2165 = vadd.xlane.f32.xlu0 %v2162
      %v2166 = vpop.xlane.xlu0 %2165
      %v2167 = vcvt.f32.s32 %v2164
      %v2168 = vcvt.f32.s32 %v2166
      %v2169 = vshll.u32 %v2168, 16
      %v2170 = vadd.s32 %v2169, %v2167
      %v2171 = vand.u32 %v1941, 65535
      %v2172 = vshrl.u32 %v1941, 16
      %v2173 = vcvt.s32.f32 %v2171
      %v2174 = vcvt.s32.f32 %v2172
      %2175 = vadd.xlane.f32.xlu0 %v2173
      %v2176 = vpop.xlane.xlu0 %2175
      %2177 = vadd.xlane.f32.xlu0 %v2174
      %v2178 = vpop.xlane.xlu0 %2177
      %v2179 = vcvt.f32.s32 %v2176
      %v2180 = vcvt.f32.s32 %v2178
      %v2181 = vshll.u32 %v2180, 16
      %v2182 = vadd.s32 %v2181, %v2179
      %v2183 = vand.u32 %v1942, 65535
      %v2184 = vshrl.u32 %v1942, 16
      %v2185 = vcvt.s32.f32 %v2183
      %v2186 = vcvt.s32.f32 %v2184
      %2187 = vadd.xlane.f32.xlu0 %v2185
      %v2188 = vpop.xlane.xlu0 %2187
      %2189 = vadd.xlane.f32.xlu0 %v2186
      %v2190 = vpop.xlane.xlu0 %2189
      %v2191 = vcvt.f32.s32 %v2188
      %v2192 = vcvt.f32.s32 %v2190
      %v2193 = vshll.u32 %v2192, 16
      %v2194 = vadd.s32 %v2193, %v2191
      %v2195 = vand.u32 %v1943, 65535
      %v2196 = vshrl.u32 %v1943, 16
      %v2197 = vcvt.s32.f32 %v2195
      %v2198 = vcvt.s32.f32 %v2196
      %2199 = vadd.xlane.f32.xlu0 %v2197
      %v2200 = vpop.xlane.xlu0 %2199
      %2201 = vadd.xlane.f32.xlu0 %v2198
      %v2202 = vpop.xlane.xlu0 %2201
      %v2203 = vcvt.f32.s32 %v2200
      %v2204 = vcvt.f32.s32 %v2202
      %v2205 = vshll.u32 %v2204, 16
      %v2206 = vadd.s32 %v2205, %v2203
      %v2207 = vand.u32 %v1944, 65535
      %v2208 = vshrl.u32 %v1944, 16
      %v2209 = vcvt.s32.f32 %v2207
      %v2210 = vcvt.s32.f32 %v2208
      %2211 = vadd.xlane.f32.xlu0 %v2209
      %v2212 = vpop.xlane.xlu0 %2211
      %2213 = vadd.xlane.f32.xlu0 %v2210
      %v2214 = vpop.xlane.xlu0 %2213
      %v2215 = vcvt.f32.s32 %v2212
      %v2216 = vcvt.f32.s32 %v2214
      %v2217 = vshll.u32 %v2216, 16
      %v2218 = vadd.s32 %v2217, %v2215
      %v2219 = vand.u32 %v1945, 65535
      %v2220 = vshrl.u32 %v1945, 16
      %v2221 = vcvt.s32.f32 %v2219
      %v2222 = vcvt.s32.f32 %v2220
      %2223 = vadd.xlane.f32.xlu0 %v2221
      %v2224 = vpop.xlane.xlu0 %2223
      %2225 = vadd.xlane.f32.xlu0 %v2222
      %v2226 = vpop.xlane.xlu0 %2225
      %v2227 = vcvt.f32.s32 %v2224
      %v2228 = vcvt.f32.s32 %v2226
      %v2229 = vshll.u32 %v2228, 16
      %v2230 = vadd.s32 %v2229, %v2227
      %v2231 = vand.u32 %v1946, 65535
      %v2232 = vshrl.u32 %v1946, 16
      %v2233 = vcvt.s32.f32 %v2231
      %v2234 = vcvt.s32.f32 %v2232
      %2235 = vadd.xlane.f32.xlu0 %v2233
      %v2236 = vpop.xlane.xlu0 %2235
      %2237 = vadd.xlane.f32.xlu0 %v2234
      %v2238 = vpop.xlane.xlu0 %2237
      %v2239 = vcvt.f32.s32 %v2236
      %v2240 = vcvt.f32.s32 %v2238
      %v2241 = vshll.u32 %v2240, 16
      %v2242 = vadd.s32 %v2241, %v2239
      %v2243 = vand.u32 %v1947, 65535
      %v2244 = vshrl.u32 %v1947, 16
      %v2245 = vcvt.s32.f32 %v2243
      %v2246 = vcvt.s32.f32 %v2244
      %2247 = vadd.xlane.f32.xlu0 %v2245
      %v2248 = vpop.xlane.xlu0 %2247
      %2249 = vadd.xlane.f32.xlu0 %v2246
      %v2250 = vpop.xlane.xlu0 %2249
      %v2251 = vcvt.f32.s32 %v2248
      %v2252 = vcvt.f32.s32 %v2250
      %v2253 = vshll.u32 %v2252, 16
      %v2254 = vadd.s32 %v2253, %v2251
      %v2255 = vand.u32 %v1948, 65535
      %v2256 = vshrl.u32 %v1948, 16
      %v2257 = vcvt.s32.f32 %v2255
      %v2258 = vcvt.s32.f32 %v2256
      %2259 = vadd.xlane.f32.xlu0 %v2257
      %v2260 = vpop.xlane.xlu0 %2259
      %2261 = vadd.xlane.f32.xlu0 %v2258
      %v2262 = vpop.xlane.xlu0 %2261
      %v2263 = vcvt.f32.s32 %v2260
      %v2264 = vcvt.f32.s32 %v2262
      %v2265 = vshll.u32 %v2264, 16
      %v2266 = vadd.s32 %v2265, %v2263
      %v2267 = vand.u32 %v1949, 65535
      %v2268 = vshrl.u32 %v1949, 16
      %v2269 = vcvt.s32.f32 %v2267
      %v2270 = vcvt.s32.f32 %v2268
      %2271 = vadd.xlane.f32.xlu0 %v2269
      %v2272 = vpop.xlane.xlu0 %2271
      %2273 = vadd.xlane.f32.xlu0 %v2270
      %v2274 = vpop.xlane.xlu0 %2273
      %v2275 = vcvt.f32.s32 %v2272
      %v2276 = vcvt.f32.s32 %v2274
      %v2277 = vshll.u32 %v2276, 16
      %v2278 = vadd.s32 %v2277, %v2275
      %v2279 = vand.u32 %v1950, 65535
      %v2280 = vshrl.u32 %v1950, 16
      %v2281 = vcvt.s32.f32 %v2279
      %v2282 = vcvt.s32.f32 %v2280
      %2283 = vadd.xlane.f32.xlu0 %v2281
      %v2284 = vpop.xlane.xlu0 %2283
      %2285 = vadd.xlane.f32.xlu0 %v2282
      %v2286 = vpop.xlane.xlu0 %2285
      %v2287 = vcvt.f32.s32 %v2284
      %v2288 = vcvt.f32.s32 %v2286
      %v2289 = vshll.u32 %v2288, 16
      %v2290 = vadd.s32 %v2289, %v2287
      %v2291 = vand.u32 %v1951, 65535
      %v2292 = vshrl.u32 %v1951, 16
      %v2293 = vcvt.s32.f32 %v2291
      %v2294 = vcvt.s32.f32 %v2292
      %2295 = vadd.xlane.f32.xlu0 %v2293
      %v2296 = vpop.xlane.xlu0 %2295
      %2297 = vadd.xlane.f32.xlu0 %v2294
      %v2298 = vpop.xlane.xlu0 %2297
      %v2299 = vcvt.f32.s32 %v2296
      %v2300 = vcvt.f32.s32 %v2298
      %v2301 = vshll.u32 %v2300, 16
      %v2302 = vadd.s32 %v2301, %v2299
      %v2303 = vand.u32 %v1952, 65535
      %v2304 = vshrl.u32 %v1952, 16
      %v2305 = vcvt.s32.f32 %v2303
      %v2306 = vcvt.s32.f32 %v2304
      %2307 = vadd.xlane.f32.xlu0 %v2305
      %v2308 = vpop.xlane.xlu0 %2307
      %2309 = vadd.xlane.f32.xlu0 %v2306
      %v2310 = vpop.xlane.xlu0 %2309
      %v2311 = vcvt.f32.s32 %v2308
      %v2312 = vcvt.f32.s32 %v2310
      %v2313 = vshll.u32 %v2312, 16
      %v2314 = vadd.s32 %v2313, %v2311
      %v2315 = vand.u32 %v1953, 65535
      %v2316 = vshrl.u32 %v1953, 16
      %v2317 = vcvt.s32.f32 %v2315
      %v2318 = vcvt.s32.f32 %v2316
      %2319 = vadd.xlane.f32.xlu0 %v2317
      %v2320 = vpop.xlane.xlu0 %2319
      %2321 = vadd.xlane.f32.xlu0 %v2318
      %v2322 = vpop.xlane.xlu0 %2321
      %v2323 = vcvt.f32.s32 %v2320
      %v2324 = vcvt.f32.s32 %v2322
      %v2325 = vshll.u32 %v2324, 16
      %v2326 = vadd.s32 %v2325, %v2323
      %v2327 = vand.u32 %v1954, 65535
      %v2328 = vshrl.u32 %v1954, 16
      %v2329 = vcvt.s32.f32 %v2327
      %v2330 = vcvt.s32.f32 %v2328
      %2331 = vadd.xlane.f32.xlu0 %v2329
      %v2332 = vpop.xlane.xlu0 %2331
      %2333 = vadd.xlane.f32.xlu0 %v2330
      %v2334 = vpop.xlane.xlu0 %2333
      %v2335 = vcvt.f32.s32 %v2332
      %v2336 = vcvt.f32.s32 %v2334
      %v2337 = vshll.u32 %v2336, 16
      %v2338 = vadd.s32 %v2337, %v2335
      %v2339 = vstv %s536
      %vm2340 = vcmp.lt.s32.totalorder %v1966, %v2339
      %vm2341 = vcmp.lt.s32.totalorder %v1978, %v2339
      %vm2342 = vcmp.lt.s32.totalorder %v1990, %v2339
      %vm2343 = vcmp.lt.s32.totalorder %v2002, %v2339
      %vm2344 = vcmp.lt.s32.totalorder %v2014, %v2339
      %vm2345 = vcmp.lt.s32.totalorder %v2026, %v2339
      %vm2346 = vcmp.lt.s32.totalorder %v2038, %v2339
      %vm2347 = vcmp.lt.s32.totalorder %v2050, %v2339
      %vm2348 = vcmp.lt.s32.totalorder %v2062, %v2339
      %vm2349 = vcmp.lt.s32.totalorder %v2074, %v2339
      %vm2350 = vcmp.lt.s32.totalorder %v2086, %v2339
      %vm2351 = vcmp.lt.s32.totalorder %v2098, %v2339
      %vm2352 = vcmp.lt.s32.totalorder %v2110, %v2339
      %vm2353 = vcmp.lt.s32.totalorder %v2122, %v2339
      %vm2354 = vcmp.lt.s32.totalorder %v2134, %v2339
      %vm2355 = vcmp.lt.s32.totalorder %v2146, %v2339
      %vm2356 = vcmp.lt.s32.totalorder %v2158, %v2339
      %vm2357 = vcmp.lt.s32.totalorder %v2170, %v2339
      %vm2358 = vcmp.lt.s32.totalorder %v2182, %v2339
      %vm2359 = vcmp.lt.s32.totalorder %v2194, %v2339
      %vm2360 = vcmp.lt.s32.totalorder %v2206, %v2339
      %vm2361 = vcmp.lt.s32.totalorder %v2218, %v2339
      %vm2362 = vcmp.lt.s32.totalorder %v2230, %v2339
      %vm2363 = vcmp.lt.s32.totalorder %v2242, %v2339
      %vm2364 = vcmp.lt.s32.totalorder %v2254, %v2339
      %vm2365 = vcmp.lt.s32.totalorder %v2266, %v2339
      %vm2366 = vcmp.lt.s32.totalorder %v2278, %v2339
      %vm2367 = vcmp.lt.s32.totalorder %v2290, %v2339
      %vm2368 = vcmp.lt.s32.totalorder %v2302, %v2339
      %vm2369 = vcmp.lt.s32.totalorder %v2314, %v2339
      %vm2370 = vcmp.lt.s32.totalorder %v2326, %v2339
      %vm2371 = vcmp.lt.s32.totalorder %v2338, %v2339
      %vm2372 = vmor %vm389, %vm2340
      %vm2373 = vmor %vm390, %vm2341
      %vm2374 = vmor %vm391, %vm2342
      %vm2375 = vmor %vm392, %vm2343
      %vm2376 = vmor %vm393, %vm2344
      %vm2377 = vmor %vm394, %vm2345
      %vm2378 = vmor %vm395, %vm2346
      %vm2379 = vmor %vm396, %vm2347
      %vm2380 = vmor %vm397, %vm2348
      %vm2381 = vmor %vm398, %vm2349
      %vm2382 = vmor %vm399, %vm2350
      %vm2383 = vmor %vm400, %vm2351
      %vm2384 = vmor %vm401, %vm2352
      %vm2385 = vmor %vm402, %vm2353
      %vm2386 = vmor %vm403, %vm2354
      %vm2387 = vmor %vm404, %vm2355
      %vm2388 = vmor %vm405, %vm2356
      %vm2389 = vmor %vm406, %vm2357
      %vm2390 = vmor %vm407, %vm2358
      %vm2391 = vmor %vm408, %vm2359
      %vm2392 = vmor %vm409, %vm2360
      %vm2393 = vmor %vm410, %vm2361
      %vm2394 = vmor %vm411, %vm2362
      %vm2395 = vmor %vm412, %vm2363
      %vm2396 = vmor %vm413, %vm2364
      %vm2397 = vmor %vm414, %vm2365
      %vm2398 = vmor %vm415, %vm2366
      %vm2399 = vmor %vm416, %vm2367
      %vm2400 = vmor %vm417, %vm2368
      %vm2401 = vmor %vm418, %vm2369
      %vm2402 = vmor %vm419, %vm2370
      %vm2403 = vmor %vm420, %vm2371
      %v2404 = vsel %vm2372, %v1180, 0.0
      %v2405 = vsel %vm2373, %v1181, 0.0
      %v2406 = vsel %vm2374, %v1182, 0.0
      %v2407 = vsel %vm2375, %v1183, 0.0
      %v2408 = vsel %vm2376, %v1184, 0.0
      %v2409 = vsel %vm2377, %v1185, 0.0
      %v2410 = vsel %vm2378, %v1186, 0.0
      %v2411 = vsel %vm2379, %v1187, 0.0
      %v2412 = vsel %vm2380, %v1188, 0.0
      %v2413 = vsel %vm2381, %v1189, 0.0
      %v2414 = vsel %vm2382, %v1190, 0.0
      %v2415 = vsel %vm2383, %v1191, 0.0
      %v2416 = vsel %vm2384, %v1192, 0.0
      %v2417 = vsel %vm2385, %v1193, 0.0
      %v2418 = vsel %vm2386, %v1194, 0.0
      %v2419 = vsel %vm2387, %v1195, 0.0
      %v2420 = vsel %vm2388, %v1196, 0.0
      %v2421 = vsel %vm2389, %v1197, 0.0
      %v2422 = vsel %vm2390, %v1198, 0.0
      %v2423 = vsel %vm2391, %v1199, 0.0
      %v2424 = vsel %vm2392, %v1200, 0.0
      %v2425 = vsel %vm2393, %v1201, 0.0
      %v2426 = vsel %vm2394, %v1202, 0.0
      %v2427 = vsel %vm2395, %v1203, 0.0
      %v2428 = vsel %vm2396, %v1204, 0.0
      %v2429 = vsel %vm2397, %v1205, 0.0
      %v2430 = vsel %vm2398, %v1206, 0.0
      %v2431 = vsel %vm2399, %v1207, 0.0
      %v2432 = vsel %vm2400, %v1208, 0.0
      %v2433 = vsel %vm2401, %v1209, 0.0
      %v2434 = vsel %vm2402, %v1210, 0.0
      %v2435 = vsel %vm2403, %v1211, 0.0
      %v2436 = vsel %vm453, %v2404, 0.0
      %v2437 = vsel %vm453, %v2405, 0.0
      %v2438 = vadd.f32 %v2436, %v2437
      %v2439 = vsel %vm453, %v2406, 0.0
      %v2440 = vadd.f32 %v2438, %v2439
      %v2441 = vsel %vm453, %v2407, 0.0
      %v2442 = vadd.f32 %v2440, %v2441
      %v2443 = vsel %vm453, %v2408, 0.0
      %v2444 = vadd.f32 %v2442, %v2443
      %v2445 = vsel %vm453, %v2409, 0.0
      %v2446 = vadd.f32 %v2444, %v2445
      %v2447 = vsel %vm453, %v2410, 0.0
      %v2448 = vadd.f32 %v2446, %v2447
      %v2449 = vsel %vm453, %v2411, 0.0
      %v2450 = vadd.f32 %v2448, %v2449
      %v2451 = vsel %vm453, %v2412, 0.0
      %v2452 = vadd.f32 %v2450, %v2451
      %v2453 = vsel %vm453, %v2413, 0.0
      %v2454 = vadd.f32 %v2452, %v2453
      %v2455 = vsel %vm453, %v2414, 0.0
      %v2456 = vadd.f32 %v2454, %v2455
      %v2457 = vsel %vm453, %v2415, 0.0
      %v2458 = vadd.f32 %v2456, %v2457
      %v2459 = vsel %vm453, %v2416, 0.0
      %v2460 = vadd.f32 %v2458, %v2459
      %v2461 = vsel %vm453, %v2417, 0.0
      %v2462 = vadd.f32 %v2460, %v2461
      %v2463 = vsel %vm453, %v2418, 0.0
      %v2464 = vadd.f32 %v2462, %v2463
      %v2465 = vsel %vm453, %v2419, 0.0
      %v2466 = vadd.f32 %v2464, %v2465
      %v2467 = vsel %vm453, %v2420, 0.0
      %v2468 = vadd.f32 %v2466, %v2467
      %v2469 = vsel %vm453, %v2421, 0.0
      %v2470 = vadd.f32 %v2468, %v2469
      %v2471 = vsel %vm453, %v2422, 0.0
      %v2472 = vadd.f32 %v2470, %v2471
      %v2473 = vsel %vm453, %v2423, 0.0
      %v2474 = vadd.f32 %v2472, %v2473
      %v2475 = vsel %vm453, %v2424, 0.0
      %v2476 = vadd.f32 %v2474, %v2475
      %v2477 = vsel %vm453, %v2425, 0.0
      %v2478 = vadd.f32 %v2476, %v2477
      %v2479 = vsel %vm453, %v2426, 0.0
      %v2480 = vadd.f32 %v2478, %v2479
      %v2481 = vsel %vm453, %v2427, 0.0
      %v2482 = vadd.f32 %v2480, %v2481
      %v2483 = vsel %vm453, %v2428, 0.0
      %v2484 = vadd.f32 %v2482, %v2483
      %v2485 = vsel %vm453, %v2429, 0.0
      %v2486 = vadd.f32 %v2484, %v2485
      %v2487 = vsel %vm453, %v2430, 0.0
      %v2488 = vadd.f32 %v2486, %v2487
      %v2489 = vsel %vm453, %v2431, 0.0
      %v2490 = vadd.f32 %v2488, %v2489
      %v2491 = vsel %vm453, %v2432, 0.0
      %v2492 = vadd.f32 %v2490, %v2491
      %v2493 = vsel %vm453, %v2433, 0.0
      %v2494 = vadd.f32 %v2492, %v2493
      %v2495 = vsel %vm453, %v2434, 0.0
      %v2496 = vadd.f32 %v2494, %v2495
      %v2497 = vsel %vm453, %v2435, 0.0
      %v2498 = vadd.f32 %v2496, %v2497
      %2499 = vadd.xlane.f32.xlu0 %v2498
      %v2500 = vpop.xlane.xlu0 %2499
      %v2501 = vrot.slane %v2500, 4
      %v2502 = vadd.f32 %v2500, %v2501
      %v2503 = vrot.slane %v2502, 2
      %v2504 = vadd.f32 %v2502, %v2503
      %v2505 = vrot.slane %v2504, 1
      %v2506 = vadd.f32 %v2504, %v2505
      %s2507 = vtos %v2506
      %v2508 = vld [vmem:[%s310] sm:$0xff]
      %v2509 = vld [vmem:[%s310 + $0x8] sm:$0xff]
      %v2510 = vld [vmem:[%s310 + $0x10] sm:$0xff]
      %v2511 = vld [vmem:[%s310 + $0x18] sm:$0xff]
      %v2512 = vld [vmem:[%s310 + $0x20] sm:$0xff]
      %v2513 = vld [vmem:[%s310 + $0x28] sm:$0xff]
      %v2514 = vld [vmem:[%s310 + $0x30] sm:$0xff]
      %v2515 = vld [vmem:[%s310 + $0x38] sm:$0xff]
      %v2516 = vld [vmem:[%s310 + $0x40] sm:$0xff]
      %v2517 = vld [vmem:[%s310 + $0x48] sm:$0xff]
      %v2518 = vld [vmem:[%s310 + $0x50] sm:$0xff]
      %v2519 = vld [vmem:[%s310 + $0x58] sm:$0xff]
      %v2520 = vld [vmem:[%s310 + $0x60] sm:$0xff]
      %v2521 = vld [vmem:[%s310 + $0x68] sm:$0xff]
      %v2522 = vld [vmem:[%s310 + $0x70] sm:$0xff]
      %v2523 = vld [vmem:[%s310 + $0x78] sm:$0xff]
      %v2524 = vld [vmem:[%s310 + $0x80] sm:$0xff]
      %v2525 = vld [vmem:[%s310 + $0x88] sm:$0xff]
      %v2526 = vld [vmem:[%s310 + $0x90] sm:$0xff]
      %v2527 = vld [vmem:[%s310 + $0x98] sm:$0xff]
      %v2528 = vld [vmem:[%s310 + $0xa0] sm:$0xff]
      %v2529 = vld [vmem:[%s310 + $0xa8] sm:$0xff]
      %v2530 = vld [vmem:[%s310 + $0xb0] sm:$0xff]
      %v2531 = vld [vmem:[%s310 + $0xb8] sm:$0xff]
      %v2532 = vld [vmem:[%s310 + $0xc0] sm:$0xff]
      %v2533 = vld [vmem:[%s310 + $0xc8] sm:$0xff]
      %v2534 = vld [vmem:[%s310 + $0xd0] sm:$0xff]
      %v2535 = vld [vmem:[%s310 + $0xd8] sm:$0xff]
      %v2536 = vld [vmem:[%s310 + $0xe0] sm:$0xff]
      %v2537 = vld [vmem:[%s310 + $0xe8] sm:$0xff]
      %v2538 = vld [vmem:[%s310 + $0xf0] sm:$0xff]
      %v2539 = vld [vmem:[%s310 + $0xf8] sm:$0xff]
      %v2540 = vld [vmem:[%s315] sm:$0xff]
      %v2541 = vld [vmem:[%s315 + $0x8] sm:$0xff]
      %v2542 = vld [vmem:[%s315 + $0x10] sm:$0xff]
      %v2543 = vld [vmem:[%s315 + $0x18] sm:$0xff]
      %v2544 = vld [vmem:[%s315 + $0x20] sm:$0xff]
      %v2545 = vld [vmem:[%s315 + $0x28] sm:$0xff]
      %v2546 = vld [vmem:[%s315 + $0x30] sm:$0xff]
      %v2547 = vld [vmem:[%s315 + $0x38] sm:$0xff]
      %v2548 = vld [vmem:[%s315 + $0x40] sm:$0xff]
      %v2549 = vld [vmem:[%s315 + $0x48] sm:$0xff]
      %v2550 = vld [vmem:[%s315 + $0x50] sm:$0xff]
      %v2551 = vld [vmem:[%s315 + $0x58] sm:$0xff]
      %v2552 = vld [vmem:[%s315 + $0x60] sm:$0xff]
      %v2553 = vld [vmem:[%s315 + $0x68] sm:$0xff]
      %v2554 = vld [vmem:[%s315 + $0x70] sm:$0xff]
      %v2555 = vld [vmem:[%s315 + $0x78] sm:$0xff]
      %v2556 = vld [vmem:[%s315 + $0x80] sm:$0xff]
      %v2557 = vld [vmem:[%s315 + $0x88] sm:$0xff]
      %v2558 = vld [vmem:[%s315 + $0x90] sm:$0xff]
      %v2559 = vld [vmem:[%s315 + $0x98] sm:$0xff]
      %v2560 = vld [vmem:[%s315 + $0xa0] sm:$0xff]
      %v2561 = vld [vmem:[%s315 + $0xa8] sm:$0xff]
      %v2562 = vld [vmem:[%s315 + $0xb0] sm:$0xff]
      %v2563 = vld [vmem:[%s315 + $0xb8] sm:$0xff]
      %v2564 = vld [vmem:[%s315 + $0xc0] sm:$0xff]
      %v2565 = vld [vmem:[%s315 + $0xc8] sm:$0xff]
      %v2566 = vld [vmem:[%s315 + $0xd0] sm:$0xff]
      %v2567 = vld [vmem:[%s315 + $0xd8] sm:$0xff]
      %v2568 = vld [vmem:[%s315 + $0xe0] sm:$0xff]
      %v2569 = vld [vmem:[%s315 + $0xe8] sm:$0xff]
      %v2570 = vld [vmem:[%s315 + $0xf0] sm:$0xff]
      %v2571 = vld [vmem:[%s315 + $0xf8] sm:$0xff]
      %v2572 = vsub.f32 %v2508, %v2540
      %v2573 = vsub.f32 %v2509, %v2541
      %v2574 = vsub.f32 %v2510, %v2542
      %v2575 = vsub.f32 %v2511, %v2543
      %v2576 = vsub.f32 %v2512, %v2544
      %v2577 = vsub.f32 %v2513, %v2545
      %v2578 = vsub.f32 %v2514, %v2546
      %v2579 = vsub.f32 %v2515, %v2547
      %v2580 = vsub.f32 %v2516, %v2548
      %v2581 = vsub.f32 %v2517, %v2549
      %v2582 = vsub.f32 %v2518, %v2550
      %v2583 = vsub.f32 %v2519, %v2551
      %v2584 = vsub.f32 %v2520, %v2552
      %v2585 = vsub.f32 %v2521, %v2553
      %v2586 = vsub.f32 %v2522, %v2554
      %v2587 = vsub.f32 %v2523, %v2555
      %v2588 = vsub.f32 %v2524, %v2556
      %v2589 = vsub.f32 %v2525, %v2557
      %v2590 = vsub.f32 %v2526, %v2558
      %v2591 = vsub.f32 %v2527, %v2559
      %v2592 = vsub.f32 %v2528, %v2560
      %v2593 = vsub.f32 %v2529, %v2561
      %v2594 = vsub.f32 %v2530, %v2562
      %v2595 = vsub.f32 %v2531, %v2563
      %v2596 = vsub.f32 %v2532, %v2564
      %v2597 = vsub.f32 %v2533, %v2565
      %v2598 = vsub.f32 %v2534, %v2566
      %v2599 = vsub.f32 %v2535, %v2567
      %v2600 = vsub.f32 %v2536, %v2568
      %v2601 = vsub.f32 %v2537, %v2569
      %v2602 = vsub.f32 %v2538, %v2570
      %v2603 = vsub.f32 %v2539, %v2571
      %v2604 = vand.u32 2147483647, %v2572
      %v2605 = vand.u32 2147483647, %v2573
      %v2606 = vand.u32 2147483647, %v2574
      %v2607 = vand.u32 2147483647, %v2575
      %v2608 = vand.u32 2147483647, %v2576
      %v2609 = vand.u32 2147483647, %v2577
      %v2610 = vand.u32 2147483647, %v2578
      %v2611 = vand.u32 2147483647, %v2579
      %v2612 = vand.u32 2147483647, %v2580
      %v2613 = vand.u32 2147483647, %v2581
      %v2614 = vand.u32 2147483647, %v2582
      %v2615 = vand.u32 2147483647, %v2583
      %v2616 = vand.u32 2147483647, %v2584
      %v2617 = vand.u32 2147483647, %v2585
      %v2618 = vand.u32 2147483647, %v2586
      %v2619 = vand.u32 2147483647, %v2587
      %v2620 = vand.u32 2147483647, %v2588
      %v2621 = vand.u32 2147483647, %v2589
      %v2622 = vand.u32 2147483647, %v2590
      %v2623 = vand.u32 2147483647, %v2591
      %v2624 = vand.u32 2147483647, %v2592
      %v2625 = vand.u32 2147483647, %v2593
      %v2626 = vand.u32 2147483647, %v2594
      %v2627 = vand.u32 2147483647, %v2595
      %v2628 = vand.u32 2147483647, %v2596
      %v2629 = vand.u32 2147483647, %v2597
      %v2630 = vand.u32 2147483647, %v2598
      %v2631 = vand.u32 2147483647, %v2599
      %v2632 = vand.u32 2147483647, %v2600
      %v2633 = vand.u32 2147483647, %v2601
      %v2634 = vand.u32 2147483647, %v2602
      %v2635 = vand.u32 2147483647, %v2603
      %vm2636 = vcmp.lt.f32.partialorder %v2604, 1.0
      %vm2637 = vcmp.lt.f32.partialorder %v2605, 1.0
      %vm2638 = vcmp.lt.f32.partialorder %v2606, 1.0
      %vm2639 = vcmp.lt.f32.partialorder %v2607, 1.0
      %vm2640 = vcmp.lt.f32.partialorder %v2608, 1.0
      %vm2641 = vcmp.lt.f32.partialorder %v2609, 1.0
      %vm2642 = vcmp.lt.f32.partialorder %v2610, 1.0
      %vm2643 = vcmp.lt.f32.partialorder %v2611, 1.0
      %vm2644 = vcmp.lt.f32.partialorder %v2612, 1.0
      %vm2645 = vcmp.lt.f32.partialorder %v2613, 1.0
      %vm2646 = vcmp.lt.f32.partialorder %v2614, 1.0
      %vm2647 = vcmp.lt.f32.partialorder %v2615, 1.0
      %vm2648 = vcmp.lt.f32.partialorder %v2616, 1.0
      %vm2649 = vcmp.lt.f32.partialorder %v2617, 1.0
      %vm2650 = vcmp.lt.f32.partialorder %v2618, 1.0
      %vm2651 = vcmp.lt.f32.partialorder %v2619, 1.0
      %vm2652 = vcmp.lt.f32.partialorder %v2620, 1.0
      %vm2653 = vcmp.lt.f32.partialorder %v2621, 1.0
      %vm2654 = vcmp.lt.f32.partialorder %v2622, 1.0
      %vm2655 = vcmp.lt.f32.partialorder %v2623, 1.0
      %vm2656 = vcmp.lt.f32.partialorder %v2624, 1.0
      %vm2657 = vcmp.lt.f32.partialorder %v2625, 1.0
      %vm2658 = vcmp.lt.f32.partialorder %v2626, 1.0
      %vm2659 = vcmp.lt.f32.partialorder %v2627, 1.0
      %vm2660 = vcmp.lt.f32.partialorder %v2628, 1.0
      %vm2661 = vcmp.lt.f32.partialorder %v2629, 1.0
      %vm2662 = vcmp.lt.f32.partialorder %v2630, 1.0
      %vm2663 = vcmp.lt.f32.partialorder %v2631, 1.0
      %vm2664 = vcmp.lt.f32.partialorder %v2632, 1.0
      %vm2665 = vcmp.lt.f32.partialorder %v2633, 1.0
      %vm2666 = vcmp.lt.f32.partialorder %v2634, 1.0
      %vm2667 = vcmp.lt.f32.partialorder %v2635, 1.0
      %v2668 = vmul.f32 %v2572, 0.5
      %v2669 = vmul.f32 %v2573, 0.5
      %v2670 = vmul.f32 %v2574, 0.5
      %v2671 = vmul.f32 %v2575, 0.5
      %v2672 = vmul.f32 %v2576, 0.5
      %v2673 = vmul.f32 %v2577, 0.5
      %v2674 = vmul.f32 %v2578, 0.5
      %v2675 = vmul.f32 %v2579, 0.5
      %v2676 = vmul.f32 %v2580, 0.5
      %v2677 = vmul.f32 %v2581, 0.5
      %v2678 = vmul.f32 %v2582, 0.5
      %v2679 = vmul.f32 %v2583, 0.5
      %v2680 = vmul.f32 %v2584, 0.5
      %v2681 = vmul.f32 %v2585, 0.5
      %v2682 = vmul.f32 %v2586, 0.5
      %v2683 = vmul.f32 %v2587, 0.5
      %v2684 = vmul.f32 %v2588, 0.5
      %v2685 = vmul.f32 %v2589, 0.5
      %v2686 = vmul.f32 %v2590, 0.5
      %v2687 = vmul.f32 %v2591, 0.5
      %v2688 = vmul.f32 %v2592, 0.5
      %v2689 = vmul.f32 %v2593, 0.5
      %v2690 = vmul.f32 %v2594, 0.5
      %v2691 = vmul.f32 %v2595, 0.5
      %v2692 = vmul.f32 %v2596, 0.5
      %v2693 = vmul.f32 %v2597, 0.5
      %v2694 = vmul.f32 %v2598, 0.5
      %v2695 = vmul.f32 %v2599, 0.5
      %v2696 = vmul.f32 %v2600, 0.5
      %v2697 = vmul.f32 %v2601, 0.5
      %v2698 = vmul.f32 %v2602, 0.5
      %v2699 = vmul.f32 %v2603, 0.5
      %v2700 = vmul.f32 %v2668, %v2572
      %v2701 = vmul.f32 %v2669, %v2573
      %v2702 = vmul.f32 %v2670, %v2574
      %v2703 = vmul.f32 %v2671, %v2575
      %v2704 = vmul.f32 %v2672, %v2576
      %v2705 = vmul.f32 %v2673, %v2577
      %v2706 = vmul.f32 %v2674, %v2578
      %v2707 = vmul.f32 %v2675, %v2579
      %v2708 = vmul.f32 %v2676, %v2580
      %v2709 = vmul.f32 %v2677, %v2581
      %v2710 = vmul.f32 %v2678, %v2582
      %v2711 = vmul.f32 %v2679, %v2583
      %v2712 = vmul.f32 %v2680, %v2584
      %v2713 = vmul.f32 %v2681, %v2585
      %v2714 = vmul.f32 %v2682, %v2586
      %v2715 = vmul.f32 %v2683, %v2587
      %v2716 = vmul.f32 %v2684, %v2588
      %v2717 = vmul.f32 %v2685, %v2589
      %v2718 = vmul.f32 %v2686, %v2590
      %v2719 = vmul.f32 %v2687, %v2591
      %v2720 = vmul.f32 %v2688, %v2592
      %v2721 = vmul.f32 %v2689, %v2593
      %v2722 = vmul.f32 %v2690, %v2594
      %v2723 = vmul.f32 %v2691, %v2595
      %v2724 = vmul.f32 %v2692, %v2596
      %v2725 = vmul.f32 %v2693, %v2597
      %v2726 = vmul.f32 %v2694, %v2598
      %v2727 = vmul.f32 %v2695, %v2599
      %v2728 = vmul.f32 %v2696, %v2600
      %v2729 = vmul.f32 %v2697, %v2601
      %v2730 = vmul.f32 %v2698, %v2602
      %v2731 = vmul.f32 %v2699, %v2603
      %v2732 = vsub.f32 %v2604, 0.5
      %v2733 = vsub.f32 %v2605, 0.5
      %v2734 = vsub.f32 %v2606, 0.5
      %v2735 = vsub.f32 %v2607, 0.5
      %v2736 = vsub.f32 %v2608, 0.5
      %v2737 = vsub.f32 %v2609, 0.5
      %v2738 = vsub.f32 %v2610, 0.5
      %v2739 = vsub.f32 %v2611, 0.5
      %v2740 = vsub.f32 %v2612, 0.5
      %v2741 = vsub.f32 %v2613, 0.5
      %v2742 = vsub.f32 %v2614, 0.5
      %v2743 = vsub.f32 %v2615, 0.5
      %v2744 = vsub.f32 %v2616, 0.5
      %v2745 = vsub.f32 %v2617, 0.5
      %v2746 = vsub.f32 %v2618, 0.5
      %v2747 = vsub.f32 %v2619, 0.5
      %v2748 = vsub.f32 %v2620, 0.5
      %v2749 = vsub.f32 %v2621, 0.5
      %v2750 = vsub.f32 %v2622, 0.5
      %v2751 = vsub.f32 %v2623, 0.5
      %v2752 = vsub.f32 %v2624, 0.5
      %v2753 = vsub.f32 %v2625, 0.5
      %v2754 = vsub.f32 %v2626, 0.5
      %v2755 = vsub.f32 %v2627, 0.5
      %v2756 = vsub.f32 %v2628, 0.5
      %v2757 = vsub.f32 %v2629, 0.5
      %v2758 = vsub.f32 %v2630, 0.5
      %v2759 = vsub.f32 %v2631, 0.5
      %v2760 = vsub.f32 %v2632, 0.5
      %v2761 = vsub.f32 %v2633, 0.5
      %v2762 = vsub.f32 %v2634, 0.5
      %v2763 = vsub.f32 %v2635, 0.5
      %v2764 = vsel %vm2636, %v2700, %v2732
      %v2765 = vsel %vm2637, %v2701, %v2733
      %v2766 = vsel %vm2638, %v2702, %v2734
      %v2767 = vsel %vm2639, %v2703, %v2735
      %v2768 = vsel %vm2640, %v2704, %v2736
      %v2769 = vsel %vm2641, %v2705, %v2737
      %v2770 = vsel %vm2642, %v2706, %v2738
      %v2771 = vsel %vm2643, %v2707, %v2739
      %v2772 = vsel %vm2644, %v2708, %v2740
      %v2773 = vsel %vm2645, %v2709, %v2741
      %v2774 = vsel %vm2646, %v2710, %v2742
      %v2775 = vsel %vm2647, %v2711, %v2743
      %v2776 = vsel %vm2648, %v2712, %v2744
      %v2777 = vsel %vm2649, %v2713, %v2745
      %v2778 = vsel %vm2650, %v2714, %v2746
      %v2779 = vsel %vm2651, %v2715, %v2747
      %v2780 = vsel %vm2652, %v2716, %v2748
      %v2781 = vsel %vm2653, %v2717, %v2749
      %v2782 = vsel %vm2654, %v2718, %v2750
      %v2783 = vsel %vm2655, %v2719, %v2751
      %v2784 = vsel %vm2656, %v2720, %v2752
      %v2785 = vsel %vm2657, %v2721, %v2753
      %v2786 = vsel %vm2658, %v2722, %v2754
      %v2787 = vsel %vm2659, %v2723, %v2755
      %v2788 = vsel %vm2660, %v2724, %v2756
      %v2789 = vsel %vm2661, %v2725, %v2757
      %v2790 = vsel %vm2662, %v2726, %v2758
      %v2791 = vsel %vm2663, %v2727, %v2759
      %v2792 = vsel %vm2664, %v2728, %v2760
      %v2793 = vsel %vm2665, %v2729, %v2761
      %v2794 = vsel %vm2666, %v2730, %v2762
      %v2795 = vsel %vm2667, %v2731, %v2763
      %2796 = vset.pattern.permute.xlu0 0
      %2797 = vperm.xlu0 %2796, %v421
      %v2798 = vpop.permute.xlu0 %2797
      %2799 = vset.pattern.permute.xlu0 0
      %2800 = vperm.xlu0 %2799, %v422
      %v2801 = vpop.permute.xlu0 %2800
      %2802 = vset.pattern.permute.xlu0 0
      %2803 = vperm.xlu0 %2802, %v423
      %v2804 = vpop.permute.xlu0 %2803
      %2805 = vset.pattern.permute.xlu0 0
      %2806 = vperm.xlu0 %2805, %v424
      %v2807 = vpop.permute.xlu0 %2806
      %2808 = vset.pattern.permute.xlu0 0
      %2809 = vperm.xlu0 %2808, %v425
      %v2810 = vpop.permute.xlu0 %2809
      %2811 = vset.pattern.permute.xlu0 0
      %2812 = vperm.xlu0 %2811, %v426
      %v2813 = vpop.permute.xlu0 %2812
      %2814 = vset.pattern.permute.xlu0 0
      %2815 = vperm.xlu0 %2814, %v427
      %v2816 = vpop.permute.xlu0 %2815
      %2817 = vset.pattern.permute.xlu0 0
      %2818 = vperm.xlu0 %2817, %v428
      %v2819 = vpop.permute.xlu0 %2818
      %2820 = vset.pattern.permute.xlu0 0
      %2821 = vperm.xlu0 %2820, %v429
      %v2822 = vpop.permute.xlu0 %2821
      %2823 = vset.pattern.permute.xlu0 0
      %2824 = vperm.xlu0 %2823, %v430
      %v2825 = vpop.permute.xlu0 %2824
      %2826 = vset.pattern.permute.xlu0 0
      %2827 = vperm.xlu0 %2826, %v431
      %v2828 = vpop.permute.xlu0 %2827
      %2829 = vset.pattern.permute.xlu0 0
      %2830 = vperm.xlu0 %2829, %v432
      %v2831 = vpop.permute.xlu0 %2830
      %2832 = vset.pattern.permute.xlu0 0
      %2833 = vperm.xlu0 %2832, %v433
      %v2834 = vpop.permute.xlu0 %2833
      %2835 = vset.pattern.permute.xlu0 0
      %2836 = vperm.xlu0 %2835, %v434
      %v2837 = vpop.permute.xlu0 %2836
      %2838 = vset.pattern.permute.xlu0 0
      %2839 = vperm.xlu0 %2838, %v435
      %v2840 = vpop.permute.xlu0 %2839
      %2841 = vset.pattern.permute.xlu0 0
      %2842 = vperm.xlu0 %2841, %v436
      %v2843 = vpop.permute.xlu0 %2842
      %2844 = vset.pattern.permute.xlu0 0
      %2845 = vperm.xlu0 %2844, %v437
      %v2846 = vpop.permute.xlu0 %2845
      %2847 = vset.pattern.permute.xlu0 0
      %2848 = vperm.xlu0 %2847, %v438
      %v2849 = vpop.permute.xlu0 %2848
      %2850 = vset.pattern.permute.xlu0 0
      %2851 = vperm.xlu0 %2850, %v439
      %v2852 = vpop.permute.xlu0 %2851
      %2853 = vset.pattern.permute.xlu0 0
      %2854 = vperm.xlu0 %2853, %v440
      %v2855 = vpop.permute.xlu0 %2854
      %2856 = vset.pattern.permute.xlu0 0
      %2857 = vperm.xlu0 %2856, %v441
      %v2858 = vpop.permute.xlu0 %2857
      %2859 = vset.pattern.permute.xlu0 0
      %2860 = vperm.xlu0 %2859, %v442
      %v2861 = vpop.permute.xlu0 %2860
      %2862 = vset.pattern.permute.xlu0 0
      %2863 = vperm.xlu0 %2862, %v443
      %v2864 = vpop.permute.xlu0 %2863
      %2865 = vset.pattern.permute.xlu0 0
      %2866 = vperm.xlu0 %2865, %v444
      %v2867 = vpop.permute.xlu0 %2866
      %2868 = vset.pattern.permute.xlu0 0
      %2869 = vperm.xlu0 %2868, %v445
      %v2870 = vpop.permute.xlu0 %2869
      %2871 = vset.pattern.permute.xlu0 0
      %2872 = vperm.xlu0 %2871, %v446
      %v2873 = vpop.permute.xlu0 %2872
      %2874 = vset.pattern.permute.xlu0 0
      %2875 = vperm.xlu0 %2874, %v447
      %v2876 = vpop.permute.xlu0 %2875
      %2877 = vset.pattern.permute.xlu0 0
      %2878 = vperm.xlu0 %2877, %v448
      %v2879 = vpop.permute.xlu0 %2878
      %2880 = vset.pattern.permute.xlu0 0
      %2881 = vperm.xlu0 %2880, %v449
      %v2882 = vpop.permute.xlu0 %2881
      %2883 = vset.pattern.permute.xlu0 0
      %2884 = vperm.xlu0 %2883, %v450
      %v2885 = vpop.permute.xlu0 %2884
      %2886 = vset.pattern.permute.xlu0 0
      %2887 = vperm.xlu0 %2886, %v451
      %v2888 = vpop.permute.xlu0 %2887
      %2889 = vset.pattern.permute.xlu0 0
      %2890 = vperm.xlu0 %2889, %v452
      %v2891 = vpop.permute.xlu0 %2890
      %vm2892 = vcmp.eq.s32.totalorder %v2798, 1
      %vm2893 = vcmp.eq.s32.totalorder %v2801, 1
      %vm2894 = vcmp.eq.s32.totalorder %v2804, 1
      %vm2895 = vcmp.eq.s32.totalorder %v2807, 1
      %vm2896 = vcmp.eq.s32.totalorder %v2810, 1
      %vm2897 = vcmp.eq.s32.totalorder %v2813, 1
      %vm2898 = vcmp.eq.s32.totalorder %v2816, 1
      %vm2899 = vcmp.eq.s32.totalorder %v2819, 1
      %vm2900 = vcmp.eq.s32.totalorder %v2822, 1
      %vm2901 = vcmp.eq.s32.totalorder %v2825, 1
      %vm2902 = vcmp.eq.s32.totalorder %v2828, 1
      %vm2903 = vcmp.eq.s32.totalorder %v2831, 1
      %vm2904 = vcmp.eq.s32.totalorder %v2834, 1
      %vm2905 = vcmp.eq.s32.totalorder %v2837, 1
      %vm2906 = vcmp.eq.s32.totalorder %v2840, 1
      %vm2907 = vcmp.eq.s32.totalorder %v2843, 1
      %vm2908 = vcmp.eq.s32.totalorder %v2846, 1
      %vm2909 = vcmp.eq.s32.totalorder %v2849, 1
      %vm2910 = vcmp.eq.s32.totalorder %v2852, 1
      %vm2911 = vcmp.eq.s32.totalorder %v2855, 1
      %vm2912 = vcmp.eq.s32.totalorder %v2858, 1
      %vm2913 = vcmp.eq.s32.totalorder %v2861, 1
      %vm2914 = vcmp.eq.s32.totalorder %v2864, 1
      %vm2915 = vcmp.eq.s32.totalorder %v2867, 1
      %vm2916 = vcmp.eq.s32.totalorder %v2870, 1
      %vm2917 = vcmp.eq.s32.totalorder %v2873, 1
      %vm2918 = vcmp.eq.s32.totalorder %v2876, 1
      %vm2919 = vcmp.eq.s32.totalorder %v2879, 1
      %vm2920 = vcmp.eq.s32.totalorder %v2882, 1
      %vm2921 = vcmp.eq.s32.totalorder %v2885, 1
      %vm2922 = vcmp.eq.s32.totalorder %v2888, 1
      %vm2923 = vcmp.eq.s32.totalorder %v2891, 1
      %v2924 = vsel %vm2892, %v2764, 0.0
      %v2925 = vsel %vm2893, %v2765, 0.0
      %v2926 = vsel %vm2894, %v2766, 0.0
      %v2927 = vsel %vm2895, %v2767, 0.0
      %v2928 = vsel %vm2896, %v2768, 0.0
      %v2929 = vsel %vm2897, %v2769, 0.0
      %v2930 = vsel %vm2898, %v2770, 0.0
      %v2931 = vsel %vm2899, %v2771, 0.0
      %v2932 = vsel %vm2900, %v2772, 0.0
      %v2933 = vsel %vm2901, %v2773, 0.0
      %v2934 = vsel %vm2902, %v2774, 0.0
      %v2935 = vsel %vm2903, %v2775, 0.0
      %v2936 = vsel %vm2904, %v2776, 0.0
      %v2937 = vsel %vm2905, %v2777, 0.0
      %v2938 = vsel %vm2906, %v2778, 0.0
      %v2939 = vsel %vm2907, %v2779, 0.0
      %v2940 = vsel %vm2908, %v2780, 0.0
      %v2941 = vsel %vm2909, %v2781, 0.0
      %v2942 = vsel %vm2910, %v2782, 0.0
      %v2943 = vsel %vm2911, %v2783, 0.0
      %v2944 = vsel %vm2912, %v2784, 0.0
      %v2945 = vsel %vm2913, %v2785, 0.0
      %v2946 = vsel %vm2914, %v2786, 0.0
      %v2947 = vsel %vm2915, %v2787, 0.0
      %v2948 = vsel %vm2916, %v2788, 0.0
      %v2949 = vsel %vm2917, %v2789, 0.0
      %v2950 = vsel %vm2918, %v2790, 0.0
      %v2951 = vsel %vm2919, %v2791, 0.0
      %v2952 = vsel %vm2920, %v2792, 0.0
      %v2953 = vsel %vm2921, %v2793, 0.0
      %v2954 = vsel %vm2922, %v2794, 0.0
      %v2955 = vsel %vm2923, %v2795, 0.0
      %vm2956 = vcmask 31744
      %v2957 = vsel %vm2956, %v2924, 0.0
      %v2958 = vsel %vm2956, %v2925, 0.0
      %v2959 = vadd.f32 %v2957, %v2958
      %v2960 = vsel %vm2956, %v2926, 0.0
      %v2961 = vadd.f32 %v2959, %v2960
      %v2962 = vsel %vm2956, %v2927, 0.0
      %v2963 = vadd.f32 %v2961, %v2962
      %v2964 = vsel %vm2956, %v2928, 0.0
      %v2965 = vadd.f32 %v2963, %v2964
      %v2966 = vsel %vm2956, %v2929, 0.0
      %v2967 = vadd.f32 %v2965, %v2966
      %v2968 = vsel %vm2956, %v2930, 0.0
      %v2969 = vadd.f32 %v2967, %v2968
      %v2970 = vsel %vm2956, %v2931, 0.0
      %v2971 = vadd.f32 %v2969, %v2970
      %v2972 = vsel %vm2956, %v2932, 0.0
      %v2973 = vadd.f32 %v2971, %v2972
      %v2974 = vsel %vm2956, %v2933, 0.0
      %v2975 = vadd.f32 %v2973, %v2974
      %v2976 = vsel %vm2956, %v2934, 0.0
      %v2977 = vadd.f32 %v2975, %v2976
      %v2978 = vsel %vm2956, %v2935, 0.0
      %v2979 = vadd.f32 %v2977, %v2978
      %v2980 = vsel %vm2956, %v2936, 0.0
      %v2981 = vadd.f32 %v2979, %v2980
      %v2982 = vsel %vm2956, %v2937, 0.0
      %v2983 = vadd.f32 %v2981, %v2982
      %v2984 = vsel %vm2956, %v2938, 0.0
      %v2985 = vadd.f32 %v2983, %v2984
      %v2986 = vsel %vm2956, %v2939, 0.0
      %v2987 = vadd.f32 %v2985, %v2986
      %v2988 = vsel %vm2956, %v2940, 0.0
      %v2989 = vadd.f32 %v2987, %v2988
      %v2990 = vsel %vm2956, %v2941, 0.0
      %v2991 = vadd.f32 %v2989, %v2990
      %v2992 = vsel %vm2956, %v2942, 0.0
      %v2993 = vadd.f32 %v2991, %v2992
      %v2994 = vsel %vm2956, %v2943, 0.0
      %v2995 = vadd.f32 %v2993, %v2994
      %v2996 = vsel %vm2956, %v2944, 0.0
      %v2997 = vadd.f32 %v2995, %v2996
      %v2998 = vsel %vm2956, %v2945, 0.0
      %v2999 = vadd.f32 %v2997, %v2998
      %v3000 = vsel %vm2956, %v2946, 0.0
      %v3001 = vadd.f32 %v2999, %v3000
      %v3002 = vsel %vm2956, %v2947, 0.0
      %v3003 = vadd.f32 %v3001, %v3002
      %v3004 = vsel %vm2956, %v2948, 0.0
      %v3005 = vadd.f32 %v3003, %v3004
      %v3006 = vsel %vm2956, %v2949, 0.0
      %v3007 = vadd.f32 %v3005, %v3006
      %v3008 = vsel %vm2956, %v2950, 0.0
      %v3009 = vadd.f32 %v3007, %v3008
      %v3010 = vsel %vm2956, %v2951, 0.0
      %v3011 = vadd.f32 %v3009, %v3010
      %v3012 = vsel %vm2956, %v2952, 0.0
      %v3013 = vadd.f32 %v3011, %v3012
      %v3014 = vsel %vm2956, %v2953, 0.0
      %v3015 = vadd.f32 %v3013, %v3014
      %v3016 = vsel %vm2956, %v2954, 0.0
      %v3017 = vadd.f32 %v3015, %v3016
      %v3018 = vsel %vm2956, %v2955, 0.0
      %v3019 = vadd.f32 %v3017, %v3018
      %3020 = vadd.xlane.f32.xlu0 %v3019
      %v3021 = vpop.xlane.xlu0 %3020
      %v3022 = vrot.slane %v3021, 4
      %v3023 = vadd.f32 %v3021, %v3022
      %v3024 = vrot.slane %v3023, 2
      %v3025 = vadd.f32 %v3023, %v3024
      %v3026 = vrot.slane %v3025, 1
      %v3027 = vadd.f32 %v3025, %v3026
      %s3028 = vtos %v3027
      %v3029 = vstv %s3028
      %vm3030 = vcmask 0
      %3031 = vst.msk [vmem:[%s318] sm:$0x1] %vm3030, %v3029
      %v3032 = vstv %s2507
      %3033 = vst.msk [vmem:[%s321] sm:$0x1] %vm3030, %v3032
      %s3034 = scvt.s32.f32 %s535
      %v3035 = vstv %s3034
      %3036 = vst.msk [vmem:[%s324] sm:$0x1] %vm3030, %v3035
      %p3037 = scmp.lt.s32.totalorder %s18, 1
      %s3038 = scalar_select %p3037, %s18, 1
      %s3039 = scalar_lea.vmem %s4, %s3038
      %p3040 = scmp.lt.s32.totalorder %s18, 1
      %s3041 = scalar_select %p3040, %s18, 1
      %s3042 = scalar_lea.vmem %s5, %s3041
      %p3043 = scmp.lt.s32.totalorder %s18, 1
      %s3044 = scalar_select %p3043, %s18, 1
      %s3045 = scalar_lea.vmem %s6, %s3044
      // Predicated region
      $region37: #{multibox_loss.1} parent=35 // pred_check
        %p3046 = pneg %p140
      $region38: #{multibox_loss.1} parent=35 // pred_check_branch
        %3048 = sbr.rel (%p3046) target = $region40
      $region39: #{multibox_loss.1} parent=35 // pred_region
        _
      $region40: #{multibox_loss.1} parent=35 // pred_fallthru
        _
      // Predicated region
      $region41: #{multibox_loss.1} parent=35 // pred_check
        %p3049 = pneg %p166
      $region42: #{multibox_loss.1} parent=35 // pred_check_branch
        %3051 = sbr.rel (%p3049) target = $region44
      $region43: #{multibox_loss.1} parent=35 // pred_region
        _
      $region44: #{multibox_loss.1} parent=35 // pred_fallthru
        _
      // Predicated region
      $region45: #{multibox_loss.1} parent=35 // pred_check
        %p3052 = pneg %p192
      $region46: #{multibox_loss.1} parent=35 // pred_check_branch
        %3054 = sbr.rel (%p3052) target = $region48
      $region47: #{multibox_loss.1} parent=35 // pred_region
        _
      $region48: #{multibox_loss.1} parent=35 // pred_fallthru
        _
    $region36: #{multibox_loss.1} parent=5 // pred_fallthru
      _
    %p3055 = scmp.le.s32.totalorder 2, %s13
    // Predicated region
    $region49: #{multibox_loss.1} parent=5 // pred_check
      %p3056 = pneg %p3055
    $region50: #{multibox_loss.1} parent=5 // pred_check_branch
      %3058 = sbr.rel (%p3056) target = $region52
    $region51: #{multibox_loss.1} parent=5 // pred_region
      %s3059 = ssub.s32 %s13, 2
      // Predicated region
      $region53: #{multibox_loss.1} parent=51 // pred_check
        %p3060 = pneg %p146
      $region54: #{multibox_loss.1} parent=51 // pred_check_branch
        %3062 = sbr.rel (%p3060) target = $region56
      $region55: #{multibox_loss.1} parent=51 // pred_region
        %p3063 = scmp.lt.s32.totalorder %s19, 1
        %s3064 = scalar_select %p3063, %s19, 1
        %s3065 = scalar_lea.vmem %s4, %s3064
      $region56: #{multibox_loss.1} parent=51 // pred_fallthru
        _
      // Predicated region
      $region57: #{multibox_loss.1} parent=51 // pred_check
        %p3066 = pneg %p172
      $region58: #{multibox_loss.1} parent=51 // pred_check_branch
        %3068 = sbr.rel (%p3066) target = $region60
      $region59: #{multibox_loss.1} parent=51 // pred_region
        %p3069 = scmp.lt.s32.totalorder %s19, 1
        %s3070 = scalar_select %p3069, %s19, 1
        %s3071 = scalar_lea.vmem %s5, %s3070
      $region60: #{multibox_loss.1} parent=51 // pred_fallthru
        _
      // Predicated region
      $region61: #{multibox_loss.1} parent=51 // pred_check
        %p3072 = pneg %p198
      $region62: #{multibox_loss.1} parent=51 // pred_check_branch
        %3074 = sbr.rel (%p3072) target = $region64
      $region63: #{multibox_loss.1} parent=51 // pred_region
        %p3075 = scmp.lt.s32.totalorder %s19, 1
        %s3076 = scalar_select %p3075, %s19, 1
        %s3077 = scalar_lea.vmem %s6, %s3076
      $region64: #{multibox_loss.1} parent=51 // pred_fallthru
        _
    $region52: #{multibox_loss.1} parent=5 // pred_fallthru
      _
  $region6: #{multibox_loss.1} parent=0 // loop_footer
    %s17 = sadd.s32 1, %s13
  $region7: #{multibox_loss.1} parent=0 // loop_footer_branch
    %12 = sbr.rel target = $region3
  $region8: #{multibox_loss.1} parent=0 // loop_exit
    _

</llo_original>
